<compile_context>
chip_gen: v6e
topology: v6e:2x2x1
jax: 0.10.0
libtpu: 0.0.40
codegen_flags: <defaults>
</compile_context>

<pallas_src>
import jax
import jax.numpy as jnp
from jax import lax
from jax.experimental import pallas as pl
from jax.experimental.pallas import tpu as pltpu


# ----------------------------------------------------------------------------
# Helpers
# ----------------------------------------------------------------------------
def _round_up(x, m):
    return (x + m - 1) // m * m


def _pad_gate_cols(w, H, H_pad):
    """[..., 4H] -> [..., 4*H_pad]; each gate gets its own H_pad lane group."""
    *lead, _ = w.shape
    w4 = w.reshape(*lead, 4, H)
    pad = [(0, 0)] * (w4.ndim - 1) + [(0, H_pad - H)]
    return jnp.pad(w4, pad).reshape(*lead, 4 * H_pad)


# ----------------------------------------------------------------------------
# Fused bidirectional LSTM layer kernel
#   grid axis = T chunks ('arbitrary'); fwd & bwd interleaved per step;
#   chunk gate precompute on the MXU into VMEM scratch; h/c carried in scratch.
# ----------------------------------------------------------------------------
def _make_fused_layer_kernel(T_pad, CHUNK, B_pad, H_pad, n_parts,
                             write_seq, compute_dtype):
    G = 4 * H_pad

    def kernel(*refs):
        idx = 0
        lens_ref = refs[idx]; idx += 1
        xf = refs[idx:idx + n_parts]; idx += n_parts          # fwd-ordered chunks
        xb = refs[idx:idx + n_parts]; idx += n_parts          # bwd-ordered chunks
        wih = refs[idx:idx + n_parts]; idx += n_parts         # [2, Din_p, G] each
        whh_ref = refs[idx]; idx += 1                         # [2, H_pad, G]
        b_ref = refs[idx]; idx += 1                           # [2, 1, G] f32
        if write_seq:
            outf_ref = refs[idx]; idx += 1                    # [M, H_pad]
            outb_ref = refs[idx]; idx += 1
        else:
            fcw_ref = refs[idx]; idx += 1                     # [2, H_pad, C_pad]
            fcb_ref = refs[idx]; idx += 1                     # [1, C_pad] f32
            logits_ref = refs[idx]; idx += 1                  # [B_pad, C_pad]
        gxf, gxb, hf, cf, hb, cb = refs[idx:idx + 6]

        c_idx = pl.program_id(0)
        n_chunks = pl.num_programs(0)

        @pl.when(c_idx == 0)
        def _init():
            hf[...] = jnp.zeros_like(hf)
            cf[...] = jnp.zeros_like(cf)
            hb[...] = jnp.zeros_like(hb)
            cb[...] = jnp.zeros_like(cb)

        # ---- chunk gate precompute: one big MXU matmul per direction --------
        gf = jnp.dot(xf[0][...], wih[0][0], preferred_element_type=jnp.float32)
        gb = jnp.dot(xb[0][...], wih[0][1], preferred_element_type=jnp.float32)
        for p in range(1, n_parts):
            gf = gf + jnp.dot(xf[p][...], wih[p][0],
                              preferred_element_type=jnp.float32)
            gb = gb + jnp.dot(xb[p][...], wih[p][1],
                              preferred_element_type=jnp.float32)
        gxf[...] = gf + b_ref[0]
        gxb[...] = gb + b_ref[1]

        lens = lens_ref[...]                   # [B_pad, 1] int32 (tiny)
        t0 = c_idx * CHUNK

        def step(s, carry):
            # ------------------------- forward -------------------------------
            t_f = t0 + s
            row_f = pl.multiple_of(s * B_pad, B_pad)
            h_prev = hf[...]
            # W_hh is streamed from VMEM each iteration (not loop-carried).
            g_f = gxf[pl.ds(row_f, B_pad), :] + jnp.dot(
                h_prev.astype(compute_dtype), whh_ref[0],
                preferred_element_type=jnp.float32)
            i_g = jax.nn.sigmoid(g_f[:, 0 * H_pad:1 * H_pad])
            f_g = jax.nn.sigmoid(g_f[:, 1 * H_pad:2 * H_pad])
            g_g = jnp.tanh(g_f[:, 2 * H_pad:3 * H_pad])
            o_g = jax.nn.sigmoid(g_f[:, 3 * H_pad:4 * H_pad])
            c_new = f_g * cf[...] + i_g * g_g
            h_new = o_g * jnp.tanh(c_new)
            m_f = t_f < lens                   # packed-sequence mask [B_pad,1]
            hf[...] = jnp.where(m_f, h_new, h_prev)
            cf[...] = jnp.where(m_f, c_new, cf[...])
            if write_seq:
                outf_ref[pl.ds(row_f, B_pad), :] = jnp.where(
                    m_f, h_new, 0.0).astype(outf_ref.dtype)

            # ------------------------- backward ------------------------------
            t_b = (T_pad - 1) - t_f
            row_b = pl.multiple_of((CHUNK - 1 - s) * B_pad, B_pad)
            hb_prev = hb[...]
            g_b = gxb[pl.ds(row_b, B_pad), :] + jnp.dot(
                hb_prev.astype(compute_dtype), whh_ref[1],
                preferred_element_type=jnp.float32)
            i_b = jax.nn.sigmoid(g_b[:, 0 * H_pad:1 * H_pad])
            f_b = jax.nn.sigmoid(g_b[:, 1 * H_pad:2 * H_pad])
            gg_b = jnp.tanh(g_b[:, 2 * H_pad:3 * H_pad])
            o_b = jax.nn.sigmoid(g_b[:, 3 * H_pad:4 * H_pad])
            cb_new = f_b * cb[...] + i_b * gg_b
            hb_new = o_b * jnp.tanh(cb_new)
            m_b = t_b < lens
            hb[...] = jnp.where(m_b, hb_new, hb_prev)
            cb[...] = jnp.where(m_b, cb_new, cb[...])
            if write_seq:
                outb_ref[pl.ds(row_b, B_pad), :] = jnp.where(
                    m_b, hb_new, 0.0).astype(outb_ref.dtype)
            return carry

        lax.fori_loop(0, CHUNK, step, 0)

        if not write_seq:
            # Fused FC epilogue: logits = [h_fwd | h_bwd] @ W_fc^T + b_fc.
            @pl.when(c_idx == n_chunks - 1)
            def _fc():
                logits_ref[...] = (
                    jnp.dot(hf[...].astype(compute_dtype), fcw_ref[0],
                            preferred_element_type=jnp.float32)
                    + jnp.dot(hb[...].astype(compute_dtype), fcw_ref[1],
                              preferred_element_type=jnp.float32)
                    + fcb_ref[...])

    return kernel


def run_fused_layer(lens2d, x_parts, wih_parts, whh, bias, *, T_pad, CHUNK,
                    B_pad, H_pad, write_seq, fc_w=None, fc_b=None,
                    compute_dtype=jnp.bfloat16):
    """One bidirectional LSTM layer (optionally with the FC fused at the end).

    x_parts    : list of [T_pad*B_pad, Din_p] arrays (compute dtype)
    wih_parts  : list of [2, Din_p, 4*H_pad] arrays (compute dtype)
    whh        : [2, H_pad, 4*H_pad] (compute dtype)
    bias       : [2, 1, 4*H_pad] f32 (b_ih + b_hh, gate-padded)
    write_seq=True  -> (out_fwd, out_bwd) each [T_pad*B_pad, H_pad]
    write_seq=False -> logits [B_pad, C_pad] (FC fused into the epilogue)
    """
    n_chunks = T_pad // CHUNK
    n_parts = len(x_parts)
    M = CHUNK * B_pad
    G = 4 * H_pad

    in_specs = [pl.BlockSpec((B_pad, 1), lambda c: (0, 0))]
    for xp in x_parts:                                   # fwd-ordered streams
        in_specs.append(pl.BlockSpec((M, xp.shape[-1]), lambda c: (c, 0)))
    for xp in x_parts:                                   # bwd-ordered streams
        in_specs.append(
            pl.BlockSpec((M, xp.shape[-1]), lambda c: (n_chunks - 1 - c, 0)))
    for w in wih_parts:
        in_specs.append(pl.BlockSpec(w.shape, lambda c: (0, 0, 0)))
    in_specs.append(pl.BlockSpec(whh.shape, lambda c: (0, 0, 0)))
    in_specs.append(pl.BlockSpec(bias.shape, lambda c: (0, 0, 0)))

    args = [lens2d, *x_parts, *x_parts, *wih_parts, whh, bias]

    if write_seq:
        out_shape = (jax.ShapeDtypeStruct((T_pad * B_pad, H_pad), compute_dtype),
                     jax.ShapeDtypeStruct((T_pad * B_pad, H_pad), compute_dtype))
        out_specs = (pl.BlockSpec((M, H_pad), lambda c: (c, 0)),
                     pl.BlockSpec((M, H_pad), lambda c: (n_chunks - 1 - c, 0)))
    else:
        C_pad = fc_w.shape[-1]
        in_specs += [pl.BlockSpec(fc_w.shape, lambda c: (0, 0, 0)),
                     pl.BlockSpec(fc_b.shape, lambda c: (0, 0))]
        args += [fc_w, fc_b]
        out_shape = jax.ShapeDtypeStruct((B_pad, C_pad), jnp.float32)
        out_specs = pl.BlockSpec((B_pad, C_pad), lambda c: (0, 0))

    scratch_shapes = [
        pltpu.VMEM((M, G), jnp.float32),          # gates_x fwd chunk
        pltpu.VMEM((M, G), jnp.float32),          # gates_x bwd chunk
        pltpu.VMEM((B_pad, H_pad), jnp.float32),  # h_fwd
        pltpu.VMEM((B_pad, H_pad), jnp.float32),  # c_fwd
        pltpu.VMEM((B_pad, H_pad), jnp.float32),  # h_bwd
        pltpu.VMEM((B_pad, H_pad), jnp.float32),  # c_bwd
    ]

    # Explicit VMEM budget sized from the actual blocks (double-buffered
    # inputs/outputs + scratch) with headroom.
    cbytes = jnp.dtype(compute_dtype).itemsize
    in_bytes = B_pad * 4
    for xp in x_parts:
        in_bytes += 2 * M * xp.shape[-1] * cbytes
    for w in wih_parts:
        in_bytes += int(w.size) * cbytes
    in_bytes += int(whh.size) * cbytes + int(bias.size) * 4
    if write_seq:
        out_bytes = 2 * M * H_pad * cbytes
    else:
        in_bytes += int(fc_w.size) * cbytes + int(fc_b.size) * 4
        out_bytes = B_pad * fc_w.shape[-1] * 4
    scratch_bytes = 2 * M * G * 4 + 4 * B_pad * H_pad * 4
    vmem_limit = 2 * (in_bytes + out_bytes) + scratch_bytes + (4 << 20)
    vmem_limit = int(min(max(vmem_limit, 8 << 20), 64 << 20))

    kernel = _make_fused_layer_kernel(T_pad, CHUNK, B_pad, H_pad, n_parts,
                                      write_seq, compute_dtype)
    return pl.pallas_call(
        kernel,
        grid=(n_chunks,),
        in_specs=in_specs,
        out_specs=out_specs,
        out_shape=out_shape,
        scratch_shapes=scratch_shapes,
        compiler_params=pltpu.CompilerParams(
            dimension_semantics=("arbitrary",),   # state carried across chunks
            vmem_limit_bytes=vmem_limit),
    )(*args)


# ----------------------------------------------------------------------------
# Parameter preparation (pad / transpose / cast once)
# ----------------------------------------------------------------------------
def prepare_params(raw, compute_dtype=jnp.bfloat16):
    H = raw["hidden_size"]
    E = raw["embedding"].shape[1]
    C = raw["fc_w"].shape[0]
    H_pad = _round_up(H, 128)
    E_pad = _round_up(E, 128)
    C_pad = _round_up(C, 128)

    # Embedding padded to E_pad lanes, stored in compute dtype (matmul operand).
    emb = jnp.pad(raw["embedding"], ((0, 0), (0, E_pad - E))).astype(compute_dtype)

    layers = []
    for layer_idx, lp in enumerate(raw["lstm"]):
        parts_per_dir, b_dirs, whh_dirs = [], [], []
        for dname in ("fwd", "bwd"):
            p = lp[dname]
            wihT = _pad_gate_cols(p["w_ih"].T, H, H_pad)          # [Din, G]
            whhT = _pad_gate_cols(p["w_hh"].T, H, H_pad)          # [H, G]
            whhT = jnp.pad(whhT, ((0, H_pad - H), (0, 0)))        # [H_pad, G]
            bias = _pad_gate_cols((p["b_ih"] + p["b_hh"]).reshape(1, -1), H, H_pad)
            if layer_idx == 0:
                parts = [jnp.pad(wihT, ((0, E_pad - E), (0, 0)))]            # [E_pad, G]
            else:
                # layer-2 input = [fwd_out | bwd_out]; split W_ih rows accordingly
                parts = [jnp.pad(wihT[:H], ((0, H_pad - H), (0, 0))),
                         jnp.pad(wihT[H:], ((0, H_pad - H), (0, 0)))]        # [H_pad, G] x2
            parts_per_dir.append(parts)
            b_dirs.append(bias)
            whh_dirs.append(whhT)
        n_parts = len(parts_per_dir[0])
        w_ih = [jnp.stack([parts_per_dir[0][p], parts_per_dir[1][p]]
                          ).astype(compute_dtype) for p in range(n_parts)]
        layers.append({
            "w_ih": w_ih,                                          # list of [2, Din_p, G]
            "w_hh": jnp.stack(whh_dirs).astype(compute_dtype),     # [2, H_pad, G]
            "b": jnp.stack(b_dirs).astype(jnp.float32),            # [2, 1, G] f32
        })

    fc_wT = raw["fc_w"].T                                          # [2H, C]
    fcw_f = jnp.pad(fc_wT[:H], ((0, H_pad - H), (0, C_pad - C)))
    fcw_b = jnp.pad(fc_wT[H:], ((0, H_pad - H), (0, C_pad - C)))
    fc_w = jnp.stack([fcw_f, fcw_b]).astype(compute_dtype)         # [2, H_pad, C_pad]
    fc_b = jnp.pad(raw["fc_b"].reshape(1, -1),
                   ((0, 0), (0, C_pad - C))).astype(jnp.float32)   # [1, C_pad]

    return {"embedding": emb, "layers": layers, "fc_w": fc_w, "fc_b": fc_b,
            "compute_dtype": compute_dtype,
            "dims": dict(H=H, H_pad=H_pad, E=E, E_pad=E_pad, C=C, C_pad=C_pad)}


# ----------------------------------------------------------------------------
# Full forward
# ----------------------------------------------------------------------------
def bi_lstm_forward(prep, x_ids, lengths):
    dims = prep["dims"]
    H_pad, E_pad = dims["H_pad"], dims["E_pad"]
    C = dims["C"]
    cdt = prep["compute_dtype"]
    B, T = x_ids.shape
    B_pad = _round_up(B, 8)
    # TODO(synk): B_pad=8 leaves the per-step matmul latency-bound on a
    # 128/256-row MXU; batching more sequences is the lever for v7x.
    CHUNK = min(T, 128)
    T_pad = _round_up(T, CHUNK)

    # Embedding gather (nn.Dropout in eval mode == identity), time-major,
    # flattened to [T_pad*B_pad, E_pad] row blocks.
    x = jnp.take(prep["embedding"], x_ids.T, axis=0)               # [T, B, E_pad]
    x = jnp.pad(x, ((0, T_pad - T), (0, B_pad - B), (0, 0)))
    x_rows = x.reshape(T_pad * B_pad, E_pad)

    lens2d = jnp.pad(lengths.astype(jnp.int32), (0, B_pad - B)).reshape(B_pad, 1)

    # ----- layer 1: fused gates + recurrence, writes fwd/bwd output seqs -----
    l1 = prep["layers"][0]
    out1_f, out1_b = run_fused_layer(
        lens2d, [x_rows], l1["w_ih"], l1["w_hh"], l1["b"],
        T_pad=T_pad, CHUNK=CHUNK, B_pad=B_pad, H_pad=H_pad,
        write_seq=True, compute_dtype=cdt)

    # ----- layer 2: fused gates + recurrence + FC epilogue -> logits ---------
    l2 = prep["layers"][1]
    logits = run_fused_layer(
        lens2d, [out1_f, out1_b], l2["w_ih"], l2["w_hh"], l2["b"],
        T_pad=T_pad, CHUNK=CHUNK, B_pad=B_pad, H_pad=H_pad,
        write_seq=False, fc_w=prep["fc_w"], fc_b=prep["fc_b"],
        compute_dtype=cdt)                                         # [B_pad, C_pad]
    return logits[:B, :C]


# ----------------------------------------------------------------------------
# Pure-JAX f32 reference (correctness oracle)
# ----------------------------------------------------------------------------
def _ref_lstm_dir(x_seq, lengths, p, reverse):
    T, B, _ = x_seq.shape
    H = p["w_hh"].shape[1]
    wihT, whhT = p["w_ih"].T, p["w_hh"].T
    b = p["b_ih"] + p["b_hh"]
    h = jnp.zeros((B, H), jnp.float32)
    c = jnp.zeros((B, H), jnp.float32)
    outs = [None] * T
    order = range(T - 1, -1, -1) if reverse else range(T)
    for t in order:
        gates = x_seq[t] @ wihT + h @ whhT + b
        i_g = jax.nn.sigmoid(gates[:, :H])
        f_g = jax.nn.sigmoid(gates[:, H:2 * H])
        g_g = jnp.tanh(gates[:, 2 * H:3 * H])
        o_g = jax.nn.sigmoid(gates[:, 3 * H:])
        cn = f_g * c + i_g * g_g
        hn = o_g * jnp.tanh(cn)
        m = (t < lengths)[:, None]
        h = jnp.where(m, hn, h)
        c = jnp.where(m, cn, c)
        outs[t] = jnp.where(m, h, 0.0)
    return jnp.stack(outs, axis=0), h


def ref_forward(params, x_ids, lengths):
    emb = jnp.take(params["embedding"], x_ids, axis=0)
    h_seq = jnp.transpose(emb, (1, 0, 2)).astype(jnp.float32)
    hf = hb = None
    for layer in range(2):
        of, hf = _ref_lstm_dir(h_seq, lengths, params["lstm"][layer]["fwd"], False)
        ob, hb = _ref_lstm_dir(h_seq, lengths, params["lstm"][layer]["bwd"], True)
        h_seq = jnp.concatenate([of, ob], axis=-1)
    hcat = jnp.concatenate([hf, hb], axis=-1)
    return hcat @ params["fc_w"].T + params["fc_b"]


# ----------------------------------------------------------------------------
# Deterministic parameter init (shapes follow the module's __init__)
# ----------------------------------------------------------------------------
def init_params(key, vocab, E, H, pad_id, C):
    ks = iter(jax.random.split(key, 64))
    scale = 1.0 / float(H) ** 0.5

    def u(shape, s=scale):
        return jax.random.uniform(next(ks), shape, jnp.float32, -s, s)

    emb = jax.random.normal(next(ks), (vocab, E), jnp.float32)
    emb = emb.at[pad_id].set(0.0)                     # padding_idx row is zero

    lstm = []
    for layer in range(2):
        din = E if layer == 0 else 2 * H
        lp = {}
        for d in ("fwd", "bwd"):
            lp[d] = dict(w_ih=u((4 * H, din)), w_hh=u((4 * H, H)),
                         b_ih=u((4 * H,)), b_hh=u((4 * H,)))
        lstm.append(lp)

    sfc = 1.0 / float(2 * H) ** 0.5
    fc_w = u((C, 2 * H), sfc)
    fc_b = u((C,), sfc)
    return {"embedding": emb, "lstm": lstm, "fc_w": fc_w, "fc_b": fc_b,
            "hidden_size": H}


# ----------------------------------------------------------------------------
if __name__ == "__main__":
    VOCAB, E, H, PAD_ID, CLASS_NUM = 50, 16, 32, 0, 4
    B, T = 2, 8

    key = jax.random.PRNGKey(0)
    k_params, k_ids = jax.random.split(key)
    params = init_params(k_params, VOCAB, E, H, PAD_ID, CLASS_NUM)

    # lengths sorted descending (pack_padded_sequence enforce_sorted=True)
    lengths = jnp.array([8, 5], dtype=jnp.int32)
    ids = jax.random.randint(k_ids, (B, T), 1, VOCAB)
    tpos = jnp.arange(T)[None, :]
    x_ids = jnp.where(tpos < lengths[:, None], ids, PAD_ID).astype(jnp.int32)

    ref = ref_forward(params, x_ids, lengths)

    # 1) f32 compute path: exact-semantics check against the reference.
    prep32 = prepare_params(params, compute_dtype=jnp.float32)
    fwd32 = jax.jit(lambda i, l: bi_lstm_forward(prep32, i, l))
    out32 = fwd32(x_ids, lengths)
    jax.block_until_ready(out32)
    assert out32.shape == (B, CLASS_NUM)
    assert jnp.allclose(out32, ref, rtol=1e-4, atol=1e-4), (out32, ref)

    # 2) bf16 matmul-operand path (f32 accumulate, f32 gate math): perf path,
    #    looser tolerance accounts for bf16 operand rounding.
    prep16 = prepare_params(params, compute_dtype=jnp.bfloat16)
    fwd16 = jax.jit(lambda i, l: bi_lstm_forward(prep16, i, l))
    out16 = fwd16(x_ids, lengths)
    jax.block_until_ready(out16)
    assert out16.shape == (B, CLASS_NUM)
    assert jnp.allclose(out16, ref, rtol=5e-2, atol=5e-2), (out16, ref)

    # TODO(synk): dropout treated as identity (eval mode); training-mode RNG
    # dropout is not reproduced.
    print("KERNEL_OK")
</pallas_src>

<mosaic_0001>
module attributes {stable_mosaic.version = 11 : i64} {
  func.func @kernel(%arg0: i32, %arg1: memref<8x1xi32, #tpu.memory_space<vmem>>, %arg2: memref<64x128xf32, #tpu.memory_space<vmem>>, %arg3: memref<64x128xf32, #tpu.memory_space<vmem>>, %arg4: memref<2x128x512xf32, #tpu.memory_space<vmem>>, %arg5: memref<2x128x512xf32, #tpu.memory_space<vmem>>, %arg6: memref<2x1x512xf32, #tpu.memory_space<vmem>>, %arg7: memref<64x128xf32, #tpu.memory_space<vmem>>, %arg8: memref<64x128xf32, #tpu.memory_space<vmem>>, %arg9: memref<64x512xf32, #tpu.memory_space<vmem>>, %arg10: memref<64x512xf32, #tpu.memory_space<vmem>>, %arg11: memref<8x128xf32, #tpu.memory_space<vmem>>, %arg12: memref<8x128xf32, #tpu.memory_space<vmem>>, %arg13: memref<8x128xf32, #tpu.memory_space<vmem>>, %arg14: memref<8x128xf32, #tpu.memory_space<vmem>>) attributes {dimension_semantics = [#tpu.dimension_semantics<arbitrary>], iteration_bounds = array<i64: 1>, scalar_prefetch = 0 : i64, scratch_operands = 6 : i64, tpu.core_type = #tpu.core_type<tc>, window_params = [{pipeline_mode = #tpu.pipeline_mode<synchronous>, transform_indices = @transform_0, window_bounds = array<i64: 8, 1>}, {transform_indices = @transform_1, window_bounds = array<i64: 64, 128>}, {transform_indices = @transform_2, window_bounds = array<i64: 64, 128>}, {pipeline_mode = #tpu.pipeline_mode<synchronous>, transform_indices = @transform_3, window_bounds = array<i64: 2, 128, 512>}, {pipeline_mode = #tpu.pipeline_mode<synchronous>, transform_indices = @transform_4, window_bounds = array<i64: 2, 128, 512>}, {pipeline_mode = #tpu.pipeline_mode<synchronous>, transform_indices = @transform_5, window_bounds = array<i64: 2, 1, 512>}, {transform_indices = @transform_6, window_bounds = array<i64: 64, 128>}, {transform_indices = @transform_7, window_bounds = array<i64: 64, 128>}]} {
    %c0_i32 = arith.constant 0 : i32
    %0 = arith.cmpi eq, %arg0, %c0_i32 : i32
    %1 = arith.extui %0 : i1 to i32
    %c0_i32_0 = arith.constant 0 : i32
    %2 = arith.cmpi ne, %1, %c0_i32_0 : i32
    scf.if %2 {
      %cst_25 = arith.constant 0.000000e+00 : f32
      %24 = vector.broadcast %cst_25 : f32 to vector<8x128xf32>
      %c0_26 = arith.constant 0 : index
      %c0_27 = arith.constant 0 : index
      %25 = vector.load %arg11[%c0_26, %c0_27] : memref<8x128xf32, #tpu.memory_space<vmem>>, vector<8x128xf32>
      tpu.vector_store %arg11[%c0_26, %c0_27], %24 {strides = array<i32>} : memref<8x128xf32, #tpu.memory_space<vmem>>, vector<8x128xf32>,
      %cst_28 = arith.constant 0.000000e+00 : f32
      %26 = vector.broadcast %cst_28 : f32 to vector<8x128xf32>
      %c0_29 = arith.constant 0 : index
      %c0_30 = arith.constant 0 : index
      %27 = vector.load %arg12[%c0_29, %c0_30] : memref<8x128xf32, #tpu.memory_space<vmem>>, vector<8x128xf32>
      tpu.vector_store %arg12[%c0_29, %c0_30], %26 {strides = array<i32>} : memref<8x128xf32, #tpu.memory_space<vmem>>, vector<8x128xf32>,
      %cst_31 = arith.constant 0.000000e+00 : f32
      %28 = vector.broadcast %cst_31 : f32 to vector<8x128xf32>
      %c0_32 = arith.constant 0 : index
      %c0_33 = arith.constant 0 : index
      %29 = vector.load %arg13[%c0_32, %c0_33] : memref<8x128xf32, #tpu.memory_space<vmem>>, vector<8x128xf32>
      tpu.vector_store %arg13[%c0_32, %c0_33], %28 {strides = array<i32>} : memref<8x128xf32, #tpu.memory_space<vmem>>, vector<8x128xf32>,
      %cst_34 = arith.constant 0.000000e+00 : f32
      %30 = vector.broadcast %cst_34 : f32 to vector<8x128xf32>
      %c0_35 = arith.constant 0 : index
      %c0_36 = arith.constant 0 : index
      %31 = vector.load %arg14[%c0_35, %c0_36] : memref<8x128xf32, #tpu.memory_space<vmem>>, vector<8x128xf32>
      tpu.vector_store %arg14[%c0_35, %c0_36], %30 {strides = array<i32>} : memref<8x128xf32, #tpu.memory_space<vmem>>, vector<8x128xf32>,
    } else {
    }
    %c0 = arith.constant 0 : index
    %c0_1 = arith.constant 0 : index
    %3 = vector.load %arg2[%c0, %c0_1] : memref<64x128xf32, #tpu.memory_space<vmem>>, vector<64x128xf32>
    %c0_2 = arith.constant 0 : index
    %c0_3 = arith.constant 0 : index
    %c0_4 = arith.constant 0 : index
    %4 = vector.load %arg4[%c0_2, %c0_3, %c0_4] : memref<2x128x512xf32, #tpu.memory_space<vmem>>, vector<1x128x512xf32>
    %5 = vector.shape_cast %4 : vector<1x128x512xf32> to vector<128x512xf32>
    %cst = arith.constant dense<0.000000e+00> : vector<64x512xf32>
    %6 = tpu.matmul %3, %5, %cst {dimension_numbers = #tpu.dot_dimension_numbers<[1], [0], [0], [1], [0, 0, 1, 1], [], []>} : vector<64x128xf32>, vector<128x512xf32>, vector<64x512xf32> -> vector<64x512xf32>
    %c0_5 = arith.constant 0 : index
    %c0_6 = arith.constant 0 : index
    %7 = vector.load %arg3[%c0_5, %c0_6] : memref<64x128xf32, #tpu.memory_space<vmem>>, vector<64x128xf32>
    %c1 = arith.constant 1 : index
    %c0_7 = arith.constant 0 : index
    %c0_8 = arith.constant 0 : index
    %8 = vector.load %arg4[%c1, %c0_7, %c0_8] : memref<2x128x512xf32, #tpu.memory_space<vmem>>, vector<1x128x512xf32>
    %9 = vector.shape_cast %8 : vector<1x128x512xf32> to vector<128x512xf32>
    %cst_9 = arith.constant dense<0.000000e+00> : vector<64x512xf32>
    %10 = tpu.matmul %7, %9, %cst_9 {dimension_numbers = #tpu.dot_dimension_numbers<[1], [0], [0], [1], [0, 0, 1, 1], [], []>} : vector<64x128xf32>, vector<128x512xf32>, vector<64x512xf32> -> vector<64x512xf32>
    %c0_10 = arith.constant 0 : index
    %c0_11 = arith.constant 0 : index
    %c0_12 = arith.constant 0 : index
    %11 = vector.load %arg6[%c0_10, %c0_11, %c0_12] : memref<2x1x512xf32, #tpu.memory_space<vmem>>, vector<1x1x512xf32>
    %12 = vector.shape_cast %11 : vector<1x1x512xf32> to vector<1x512xf32>
    %13 = vector.broadcast %12 : vector<1x512xf32> to vector<64x512xf32>
    %14 = arith.addf %6, %13 : vector<64x512xf32>
    %c0_13 = arith.constant 0 : index
    %c0_14 = arith.constant 0 : index
    %15 = vector.load %arg9[%c0_13, %c0_14] : memref<64x512xf32, #tpu.memory_space<vmem>>, vector<64x512xf32>
    tpu.vector_store %arg9[%c0_13, %c0_14], %14 {strides = array<i32>} : memref<64x512xf32, #tpu.memory_space<vmem>>, vector<64x512xf32>,
    %c1_15 = arith.constant 1 : index
    %c0_16 = arith.constant 0 : index
    %c0_17 = arith.constant 0 : index
    %16 = vector.load %arg6[%c1_15, %c0_16, %c0_17] : memref<2x1x512xf32, #tpu.memory_space<vmem>>, vector<1x1x512xf32>
    %17 = vector.shape_cast %16 : vector<1x1x512xf32> to vector<1x512xf32>
    %18 = vector.broadcast %17 : vector<1x512xf32> to vector<64x512xf32>
    %19 = arith.addf %10, %18 : vector<64x512xf32>
    %c0_18 = arith.constant 0 : index
    %c0_19 = arith.constant 0 : index
    %20 = vector.load %arg10[%c0_18, %c0_19] : memref<64x512xf32, #tpu.memory_space<vmem>>, vector<64x512xf32>
    tpu.vector_store %arg10[%c0_18, %c0_19], %19 {strides = array<i32>} : memref<64x512xf32, #tpu.memory_space<vmem>>, vector<64x512xf32>,
    %c0_20 = arith.constant 0 : index
    %c0_21 = arith.constant 0 : index
    %21 = vector.load %arg1[%c0_20, %c0_21] : memref<8x1xi32, #tpu.memory_space<vmem>>, vector<8x1xi32>
    %c8_i32 = arith.constant 8 : i32
    %22 = arith.muli %arg0, %c8_i32 : i32
    %c0_i32_22 = arith.constant 0 : i32
    %c8_i32_23 = arith.constant 8 : i32
    %23 = arith.addi %c0_i32_22, %c8_i32_23 : i32
    %c1_i32 = arith.constant 1 : i32
    scf.for %arg15 = %c0_i32_22 to %23 step %c1_i32  : i32 {
      %24 = arith.addi %22, %arg15 : i32
      %c8_i32_25 = arith.constant 8 : i32
      %25 = arith.muli %arg15, %c8_i32_25 : i32
      %26 = tpu.assume_multiple %25, 8 : i32
      %c0_26 = arith.constant 0 : index
      %c0_27 = arith.constant 0 : index
      %27 = vector.load %arg11[%c0_26, %c0_27] : memref<8x128xf32, #tpu.memory_space<vmem>>, vector<8x128xf32>
      %28 = arith.index_cast %26 : i32 to index
      %c0_28 = arith.constant 0 : index
      %29 = vector.load %arg9[%28, %c0_28] : memref<64x512xf32, #tpu.memory_space<vmem>>, vector<8x512xf32>
      %c0_29 = arith.constant 0 : index
      %c0_30 = arith.constant 0 : index
      %c0_31 = arith.constant 0 : index
      %30 = vector.load %arg5[%c0_29, %c0_30, %c0_31] : memref<2x128x512xf32, #tpu.memory_space<vmem>>, vector<1x128x512xf32>
      %31 = vector.shape_cast %30 : vector<1x128x512xf32> to vector<128x512xf32>
      %cst_32 = arith.constant dense<0.000000e+00> : vector<8x512xf32>
      %32 = tpu.matmul %27, %31, %cst_32 {dimension_numbers = #tpu.dot_dimension_numbers<[1], [0], [0], [1], [0, 0, 1, 1], [], []>} : vector<8x128xf32>, vector<128x512xf32>, vector<8x512xf32> -> vector<8x512xf32>
      %33 = arith.addf %29, %32 : vector<8x512xf32>
      %34 = vector.extract_strided_slice %33 {offsets = [0, 0], sizes = [8, 128], strides = [1, 1]} : vector<8x512xf32> to vector<8x128xf32>
      %35 = arith.negf %34 : vector<8x128xf32>
      %36 = math.exp %35 : vector<8x128xf32>
      %cst_33 = arith.constant 1.000000e+00 : f32
      %37 = vector.broadcast %cst_33 : f32 to vector<8x128xf32>
      %38 = arith.addf %37, %36 : vector<8x128xf32>
      %39 = arith.divf %37, %38 : vector<8x128xf32>
      %40 = vector.extract_strided_slice %33 {offsets = [0, 128], sizes = [8, 128], strides = [1, 1]} : vector<8x512xf32> to vector<8x128xf32>
      %41 = arith.negf %40 : vector<8x128xf32>
      %42 = math.exp %41 : vector<8x128xf32>
      %cst_34 = arith.constant 1.000000e+00 : f32
      %43 = vector.broadcast %cst_34 : f32 to vector<8x128xf32>
      %44 = arith.addf %43, %42 : vector<8x128xf32>
      %45 = arith.divf %43, %44 : vector<8x128xf32>
      %46 = vector.extract_strided_slice %33 {offsets = [0, 256], sizes = [8, 128], strides = [1, 1]} : vector<8x512xf32> to vector<8x128xf32>
      %47 = math.tanh %46 : vector<8x128xf32>
      %48 = vector.extract_strided_slice %33 {offsets = [0, 384], sizes = [8, 128], strides = [1, 1]} : vector<8x512xf32> to vector<8x128xf32>
      %49 = arith.negf %48 : vector<8x128xf32>
      %50 = math.exp %49 : vector<8x128xf32>
      %cst_35 = arith.constant 1.000000e+00 : f32
      %51 = vector.broadcast %cst_35 : f32 to vector<8x128xf32>
      %52 = arith.addf %51, %50 : vector<8x128xf32>
      %53 = arith.divf %51, %52 : vector<8x128xf32>
      %c0_36 = arith.constant 0 : index
      %c0_37 = arith.constant 0 : index
      %54 = vector.load %arg12[%c0_36, %c0_37] : memref<8x128xf32, #tpu.memory_space<vmem>>, vector<8x128xf32>
      %55 = arith.mulf %45, %54 : vector<8x128xf32>
      %56 = arith.mulf %39, %47 : vector<8x128xf32>
      %57 = arith.addf %55, %56 : vector<8x128xf32>
      %58 = math.tanh %57 : vector<8x128xf32>
      %59 = arith.mulf %53, %58 : vector<8x128xf32>
      %60 = vector.broadcast %24 : i32 to vector<8x1xi32>
      %61 = arith.cmpi slt, %60, %21 : vector<8x1xi32>
      %62 = vector.shape_cast %61 : vector<8x1xi1> to vector<8x1xi1>
      %63 = vector.broadcast %62 : vector<8x1xi1> to vector<8x128xi1>
      %64 = arith.select %63, %59, %27 : vector<8x128xi1>, vector<8x128xf32>
      %c0_38 = arith.constant 0 : index
      %c0_39 = arith.constant 0 : index
      %65 = vector.load %arg11[%c0_38, %c0_39] : memref<8x128xf32, #tpu.memory_space<vmem>>, vector<8x128xf32>
      tpu.vector_store %arg11[%c0_38, %c0_39], %64 {strides = array<i32>} : memref<8x128xf32, #tpu.memory_space<vmem>>, vector<8x128xf32>,
      %c0_40 = arith.constant 0 : index
      %c0_41 = arith.constant 0 : index
      %66 = vector.load %arg12[%c0_40, %c0_41] : memref<8x128xf32, #tpu.memory_space<vmem>>, vector<8x128xf32>
      %67 = vector.shape_cast %61 : vector<8x1xi1> to vector<8x1xi1>
      %68 = vector.broadcast %67 : vector<8x1xi1> to vector<8x128xi1>
      %69 = arith.select %68, %57, %66 : vector<8x128xi1>, vector<8x128xf32>
      %c0_42 = arith.constant 0 : index
      %c0_43 = arith.constant 0 : index
      %70 = vector.load %arg12[%c0_42, %c0_43] : memref<8x128xf32, #tpu.memory_space<vmem>>, vector<8x128xf32>
      tpu.vector_store %arg12[%c0_42, %c0_43], %69 {strides = array<i32>} : memref<8x128xf32, #tpu.memory_space<vmem>>, vector<8x128xf32>,
      %cst_44 = arith.constant 0.000000e+00 : f32
      %71 = vector.shape_cast %61 : vector<8x1xi1> to vector<8x1xi1>
      %72 = vector.broadcast %71 : vector<8x1xi1> to vector<8x128xi1>
      %73 = vector.broadcast %cst_44 : f32 to vector<8x128xf32>
      %74 = arith.select %72, %59, %73 : vector<8x128xi1>, vector<8x128xf32>
      %75 = arith.index_cast %26 : i32 to index
      %c0_45 = arith.constant 0 : index
      %76 = vector.load %arg7[%75, %c0_45] : memref<64x128xf32, #tpu.memory_space<vmem>>, vector<8x128xf32>
      tpu.vector_store %arg7[%75, %c0_45], %74 {strides = array<i32>} : memref<64x128xf32, #tpu.memory_space<vmem>>, vector<8x128xf32>,
      %c7_i32 = arith.constant 7 : i32
      %77 = arith.subi %c7_i32, %24 : i32
      %c7_i32_46 = arith.constant 7 : i32
      %78 = arith.subi %c7_i32_46, %arg15 : i32
      %c8_i32_47 = arith.constant 8 : i32
      %79 = arith.muli %78, %c8_i32_47 : i32
      %80 = tpu.assume_multiple %79, 8 : i32
      %c0_48 = arith.constant 0 : index
      %c0_49 = arith.constant 0 : index
      %81 = vector.load %arg13[%c0_48, %c0_49] : memref<8x128xf32, #tpu.memory_space<vmem>>, vector<8x128xf32>
      %82 = arith.index_cast %80 : i32 to index
      %c0_50 = arith.constant 0 : index
      %83 = vector.load %arg10[%82, %c0_50] : memref<64x512xf32, #tpu.memory_space<vmem>>, vector<8x512xf32>
      %c1_51 = arith.constant 1 : index
      %c0_52 = arith.constant 0 : index
      %c0_53 = arith.constant 0 : index
      %84 = vector.load %arg5[%c1_51, %c0_52, %c0_53] : memref<2x128x512xf32, #tpu.memory_space<vmem>>, vector<1x128x512xf32>
      %85 = vector.shape_cast %84 : vector<1x128x512xf32> to vector<128x512xf32>
      %cst_54 = arith.constant dense<0.000000e+00> : vector<8x512xf32>
      %86 = tpu.matmul %81, %85, %cst_54 {dimension_numbers = #tpu.dot_dimension_numbers<[1], [0], [0], [1], [0, 0, 1, 1], [], []>} : vector<8x128xf32>, vector<128x512xf32>, vector<8x512xf32> -> vector<8x512xf32>
      %87 = arith.addf %83, %86 : vector<8x512xf32>
      %88 = vector.extract_strided_slice %87 {offsets = [0, 0], sizes = [8, 128], strides = [1, 1]} : vector<8x512xf32> to vector<8x128xf32>
      %89 = arith.negf %88 : vector<8x128xf32>
      %90 = math.exp %89 : vector<8x128xf32>
      %cst_55 = arith.constant 1.000000e+00 : f32
      %91 = vector.broadcast %cst_55 : f32 to vector<8x128xf32>
      %92 = arith.addf %91, %90 : vector<8x128xf32>
      %93 = arith.divf %91, %92 : vector<8x128xf32>
      %94 = vector.extract_strided_slice %87 {offsets = [0, 128], sizes = [8, 128], strides = [1, 1]} : vector<8x512xf32> to vector<8x128xf32>
      %95 = arith.negf %94 : vector<8x128xf32>
      %96 = math.exp %95 : vector<8x128xf32>
      %cst_56 = arith.constant 1.000000e+00 : f32
      %97 = vector.broadcast %cst_56 : f32 to vector<8x128xf32>
      %98 = arith.addf %97, %96 : vector<8x128xf32>
      %99 = arith.divf %97, %98 : vector<8x128xf32>
      %100 = vector.extract_strided_slice %87 {offsets = [0, 256], sizes = [8, 128], strides = [1, 1]} : vector<8x512xf32> to vector<8x128xf32>
      %101 = math.tanh %100 : vector<8x128xf32>
      %102 = vector.extract_strided_slice %87 {offsets = [0, 384], sizes = [8, 128], strides = [1, 1]} : vector<8x512xf32> to vector<8x128xf32>
      %103 = arith.negf %102 : vector<8x128xf32>
      %104 = math.exp %103 : vector<8x128xf32>
      %cst_57 = arith.constant 1.000000e+00 : f32
      %105 = vector.broadcast %cst_57 : f32 to vector<8x128xf32>
      %106 = arith.addf %105, %104 : vector<8x128xf32>
      %107 = arith.divf %105, %106 : vector<8x128xf32>
      %c0_58 = arith.constant 0 : index
      %c0_59 = arith.constant 0 : index
      %108 = vector.load %arg14[%c0_58, %c0_59] : memref<8x128xf32, #tpu.memory_space<vmem>>, vector<8x128xf32>
      %109 = arith.mulf %99, %108 : vector<8x128xf32>
      %110 = arith.mulf %93, %101 : vector<8x128xf32>
      %111 = arith.addf %109, %110 : vector<8x128xf32>
      %112 = math.tanh %111 : vector<8x128xf32>
      %113 = arith.mulf %107, %112 : vector<8x128xf32>
      %114 = vector.broadcast %77 : i32 to vector<8x1xi32>
      %115 = arith.cmpi slt, %114, %21 : vector<8x1xi32>
      %116 = vector.shape_cast %115 : vector<8x1xi1> to vector<8x1xi1>
      %117 = vector.broadcast %116 : vector<8x1xi1> to vector<8x128xi1>
      %118 = arith.select %117, %113, %81 : vector<8x128xi1>, vector<8x128xf32>
      %c0_60 = arith.constant 0 : index
      %c0_61 = arith.constant 0 : index
      %119 = vector.load %arg13[%c0_60, %c0_61] : memref<8x128xf32, #tpu.memory_space<vmem>>, vector<8x128xf32>
      tpu.vector_store %arg13[%c0_60, %c0_61], %118 {strides = array<i32>} : memref<8x128xf32, #tpu.memory_space<vmem>>, vector<8x128xf32>,
      %c0_62 = arith.constant 0 : index
      %c0_63 = arith.constant 0 : index
      %120 = vector.load %arg14[%c0_62, %c0_63] : memref<8x128xf32, #tpu.memory_space<vmem>>, vector<8x128xf32>
      %121 = vector.shape_cast %115 : vector<8x1xi1> to vector<8x1xi1>
      %122 = vector.broadcast %121 : vector<8x1xi1> to vector<8x128xi1>
      %123 = arith.select %122, %111, %120 : vector<8x128xi1>, vector<8x128xf32>
      %c0_64 = arith.constant 0 : index
      %c0_65 = arith.constant 0 : index
      %124 = vector.load %arg14[%c0_64, %c0_65] : memref<8x128xf32, #tpu.memory_space<vmem>>, vector<8x128xf32>
      tpu.vector_store %arg14[%c0_64, %c0_65], %123 {strides = array<i32>} : memref<8x128xf32, #tpu.memory_space<vmem>>, vector<8x128xf32>,
      %cst_66 = arith.constant 0.000000e+00 : f32
      %125 = vector.shape_cast %115 : vector<8x1xi1> to vector<8x1xi1>
      %126 = vector.broadcast %125 : vector<8x1xi1> to vector<8x128xi1>
      %127 = vector.broadcast %cst_66 : f32 to vector<8x128xf32>
      %128 = arith.select %126, %113, %127 : vector<8x128xi1>, vector<8x128xf32>
      %129 = arith.index_cast %80 : i32 to index
      %c0_67 = arith.constant 0 : index
      %130 = vector.load %arg8[%129, %c0_67] : memref<64x128xf32, #tpu.memory_space<vmem>>, vector<8x128xf32>
      tpu.vector_store %arg8[%129, %c0_67], %128 {strides = array<i32>} : memref<64x128xf32, #tpu.memory_space<vmem>>, vector<8x128xf32>,
    }
    %c8_i32_24 = arith.constant 8 : i32
    return
  }
  func.func @transform_0(%arg0: i32) -> (i32, i32) {
    %c0_i32 = arith.constant 0 : i32
    %c0_i32_0 = arith.constant 0 : i32
    %c0_i32_1 = arith.constant 0 : i32
    return %c0_i32, %c0_i32_0 : i32, i32
  }
  func.func @transform_1(%arg0: i32) -> (i32, i32) {
    %c0_i32 = arith.constant 0 : i32
    %c0_i32_0 = arith.constant 0 : i32
    return %arg0, %c0_i32 : i32, i32
  }
  func.func @transform_2(%arg0: i32) -> (i32, i32) {
    %c0_i32 = arith.constant 0 : i32
    %0 = arith.subi %c0_i32, %arg0 : i32
    %c0_i32_0 = arith.constant 0 : i32
    %c0_i32_1 = arith.constant 0 : i32
    return %0, %c0_i32_0 : i32, i32
  }
  func.func @transform_3(%arg0: i32) -> (i32, i32, i32) {
    %c0_i32 = arith.constant 0 : i32
    %c0_i32_0 = arith.constant 0 : i32
    %c0_i32_1 = arith.constant 0 : i32
    %c0_i32_2 = arith.constant 0 : i32
    return %c0_i32, %c0_i32_0, %c0_i32_1 : i32, i32, i32
  }
  func.func @transform_4(%arg0: i32) -> (i32, i32, i32) {
    %c0_i32 = arith.constant 0 : i32
    %c0_i32_0 = arith.constant 0 : i32
    %c0_i32_1 = arith.constant 0 : i32
    %c0_i32_2 = arith.constant 0 : i32
    return %c0_i32, %c0_i32_0, %c0_i32_1 : i32, i32, i32
  }
  func.func @transform_5(%arg0: i32) -> (i32, i32, i32) {
    %c0_i32 = arith.constant 0 : i32
    %c0_i32_0 = arith.constant 0 : i32
    %c0_i32_1 = arith.constant 0 : i32
    %c0_i32_2 = arith.constant 0 : i32
    return %c0_i32, %c0_i32_0, %c0_i32_1 : i32, i32, i32
  }
  func.func @transform_6(%arg0: i32) -> (i32, i32) {
    %c0_i32 = arith.constant 0 : i32
    %c0_i32_0 = arith.constant 0 : i32
    return %arg0, %c0_i32 : i32, i32
  }
  func.func @transform_7(%arg0: i32) -> (i32, i32) {
    %c0_i32 = arith.constant 0 : i32
    %0 = arith.subi %c0_i32, %arg0 : i32
    %c0_i32_0 = arith.constant 0 : i32
    %c0_i32_1 = arith.constant 0 : i32
    return %0, %c0_i32_0 : i32, i32
  }
}

module attributes {stable_mosaic.version = 11 : i64} {
  func.func @kernel(%arg0: i32, %arg1: memref<8x1xi32, #tpu.memory_space<vmem>>, %arg2: memref<64x128xf32, #tpu.memory_space<vmem>>, %arg3: memref<64x128xf32, #tpu.memory_space<vmem>>, %arg4: memref<64x128xf32, #tpu.memory_space<vmem>>, %arg5: memref<64x128xf32, #tpu.memory_space<vmem>>, %arg6: memref<2x128x512xf32, #tpu.memory_space<vmem>>, %arg7: memref<2x128x512xf32, #tpu.memory_space<vmem>>, %arg8: memref<2x128x512xf32, #tpu.memory_space<vmem>>, %arg9: memref<2x1x512xf32, #tpu.memory_space<vmem>>, %arg10: memref<2x128x128xf32, #tpu.memory_space<vmem>>, %arg11: memref<1x128xf32, #tpu.memory_space<vmem>>, %arg12: memref<8x128xf32, #tpu.memory_space<vmem>>, %arg13: memref<64x512xf32, #tpu.memory_space<vmem>>, %arg14: memref<64x512xf32, #tpu.memory_space<vmem>>, %arg15: memref<8x128xf32, #tpu.memory_space<vmem>>, %arg16: memref<8x128xf32, #tpu.memory_space<vmem>>, %arg17: memref<8x128xf32, #tpu.memory_space<vmem>>, %arg18: memref<8x128xf32, #tpu.memory_space<vmem>>) attributes {dimension_semantics = [#tpu.dimension_semantics<arbitrary>], iteration_bounds = array<i64: 1>, scalar_prefetch = 0 : i64, scratch_operands = 6 : i64, tpu.core_type = #tpu.core_type<tc>, window_params = [{pipeline_mode = #tpu.pipeline_mode<synchronous>, transform_indices = @transform_0, window_bounds = array<i64: 8, 1>}, {transform_indices = @transform_1, window_bounds = array<i64: 64, 128>}, {transform_indices = @transform_2, window_bounds = array<i64: 64, 128>}, {transform_indices = @transform_3, window_bounds = array<i64: 64, 128>}, {transform_indices = @transform_4, window_bounds = array<i64: 64, 128>}, {pipeline_mode = #tpu.pipeline_mode<synchronous>, transform_indices = @transform_5, window_bounds = array<i64: 2, 128, 512>}, {pipeline_mode = #tpu.pipeline_mode<synchronous>, transform_indices = @transform_6, window_bounds = array<i64: 2, 128, 512>}, {pipeline_mode = #tpu.pipeline_mode<synchronous>, transform_indices = @transform_7, window_bounds = array<i64: 2, 128, 512>}, {pipeline_mode = #tpu.pipeline_mode<synchronous>, transform_indices = @transform_8, window_bounds = array<i64: 2, 1, 512>}, {pipeline_mode = #tpu.pipeline_mode<synchronous>, transform_indices = @transform_9, window_bounds = array<i64: 2, 128, 128>}, {pipeline_mode = #tpu.pipeline_mode<synchronous>, transform_indices = @transform_10, window_bounds = array<i64: 1, 128>}, {pipeline_mode = #tpu.pipeline_mode<synchronous>, transform_indices = @transform_11, window_bounds = array<i64: 8, 128>}]} {
    %c0_i32 = arith.constant 0 : i32
    %0 = arith.cmpi eq, %arg0, %c0_i32 : i32
    %1 = arith.extui %0 : i1 to i32
    %c0_i32_0 = arith.constant 0 : i32
    %2 = arith.cmpi ne, %1, %c0_i32_0 : i32
    scf.if %2 {
      %cst_39 = arith.constant 0.000000e+00 : f32
      %37 = vector.broadcast %cst_39 : f32 to vector<8x128xf32>
      %c0_40 = arith.constant 0 : index
      %c0_41 = arith.constant 0 : index
      %38 = vector.load %arg15[%c0_40, %c0_41] : memref<8x128xf32, #tpu.memory_space<vmem>>, vector<8x128xf32>
      tpu.vector_store %arg15[%c0_40, %c0_41], %37 {strides = array<i32>} : memref<8x128xf32, #tpu.memory_space<vmem>>, vector<8x128xf32>,
      %cst_42 = arith.constant 0.000000e+00 : f32
      %39 = vector.broadcast %cst_42 : f32 to vector<8x128xf32>
      %c0_43 = arith.constant 0 : index
      %c0_44 = arith.constant 0 : index
      %40 = vector.load %arg16[%c0_43, %c0_44] : memref<8x128xf32, #tpu.memory_space<vmem>>, vector<8x128xf32>
      tpu.vector_store %arg16[%c0_43, %c0_44], %39 {strides = array<i32>} : memref<8x128xf32, #tpu.memory_space<vmem>>, vector<8x128xf32>,
      %cst_45 = arith.constant 0.000000e+00 : f32
      %41 = vector.broadcast %cst_45 : f32 to vector<8x128xf32>
      %c0_46 = arith.constant 0 : index
      %c0_47 = arith.constant 0 : index
      %42 = vector.load %arg17[%c0_46, %c0_47] : memref<8x128xf32, #tpu.memory_space<vmem>>, vector<8x128xf32>
      tpu.vector_store %arg17[%c0_46, %c0_47], %41 {strides = array<i32>} : memref<8x128xf32, #tpu.memory_space<vmem>>, vector<8x128xf32>,
      %cst_48 = arith.constant 0.000000e+00 : f32
      %43 = vector.broadcast %cst_48 : f32 to vector<8x128xf32>
      %c0_49 = arith.constant 0 : index
      %c0_50 = arith.constant 0 : index
      %44 = vector.load %arg18[%c0_49, %c0_50] : memref<8x128xf32, #tpu.memory_space<vmem>>, vector<8x128xf32>
      tpu.vector_store %arg18[%c0_49, %c0_50], %43 {strides = array<i32>} : memref<8x128xf32, #tpu.memory_space<vmem>>, vector<8x128xf32>,
    } else {
    }
    %c0 = arith.constant 0 : index
    %c0_1 = arith.constant 0 : index
    %3 = vector.load %arg2[%c0, %c0_1] : memref<64x128xf32, #tpu.memory_space<vmem>>, vector<64x128xf32>
    %c0_2 = arith.constant 0 : index
    %c0_3 = arith.constant 0 : index
    %c0_4 = arith.constant 0 : index
    %4 = vector.load %arg6[%c0_2, %c0_3, %c0_4] : memref<2x128x512xf32, #tpu.memory_space<vmem>>, vector<1x128x512xf32>
    %5 = vector.shape_cast %4 : vector<1x128x512xf32> to vector<128x512xf32>
    %cst = arith.constant dense<0.000000e+00> : vector<64x512xf32>
    %6 = tpu.matmul %3, %5, %cst {dimension_numbers = #tpu.dot_dimension_numbers<[1], [0], [0], [1], [0, 0, 1, 1], [], []>} : vector<64x128xf32>, vector<128x512xf32>, vector<64x512xf32> -> vector<64x512xf32>
    %c0_5 = arith.constant 0 : index
    %c0_6 = arith.constant 0 : index
    %7 = vector.load %arg4[%c0_5, %c0_6] : memref<64x128xf32, #tpu.memory_space<vmem>>, vector<64x128xf32>
    %c1 = arith.constant 1 : index
    %c0_7 = arith.constant 0 : index
    %c0_8 = arith.constant 0 : index
    %8 = vector.load %arg6[%c1, %c0_7, %c0_8] : memref<2x128x512xf32, #tpu.memory_space<vmem>>, vector<1x128x512xf32>
    %9 = vector.shape_cast %8 : vector<1x128x512xf32> to vector<128x512xf32>
    %cst_9 = arith.constant dense<0.000000e+00> : vector<64x512xf32>
    %10 = tpu.matmul %7, %9, %cst_9 {dimension_numbers = #tpu.dot_dimension_numbers<[1], [0], [0], [1], [0, 0, 1, 1], [], []>} : vector<64x128xf32>, vector<128x512xf32>, vector<64x512xf32> -> vector<64x512xf32>
    %c0_10 = arith.constant 0 : index
    %c0_11 = arith.constant 0 : index
    %11 = vector.load %arg3[%c0_10, %c0_11] : memref<64x128xf32, #tpu.memory_space<vmem>>, vector<64x128xf32>
    %c0_12 = arith.constant 0 : index
    %c0_13 = arith.constant 0 : index
    %c0_14 = arith.constant 0 : index
    %12 = vector.load %arg7[%c0_12, %c0_13, %c0_14] : memref<2x128x512xf32, #tpu.memory_space<vmem>>, vector<1x128x512xf32>
    %13 = vector.shape_cast %12 : vector<1x128x512xf32> to vector<128x512xf32>
    %cst_15 = arith.constant dense<0.000000e+00> : vector<64x512xf32>
    %14 = tpu.matmul %11, %13, %cst_15 {dimension_numbers = #tpu.dot_dimension_numbers<[1], [0], [0], [1], [0, 0, 1, 1], [], []>} : vector<64x128xf32>, vector<128x512xf32>, vector<64x512xf32> -> vector<64x512xf32>
    %15 = arith.addf %6, %14 : vector<64x512xf32>
    %c0_16 = arith.constant 0 : index
    %c0_17 = arith.constant 0 : index
    %16 = vector.load %arg5[%c0_16, %c0_17] : memref<64x128xf32, #tpu.memory_space<vmem>>, vector<64x128xf32>
    %c1_18 = arith.constant 1 : index
    %c0_19 = arith.constant 0 : index
    %c0_20 = arith.constant 0 : index
    %17 = vector.load %arg7[%c1_18, %c0_19, %c0_20] : memref<2x128x512xf32, #tpu.memory_space<vmem>>, vector<1x128x512xf32>
    %18 = vector.shape_cast %17 : vector<1x128x512xf32> to vector<128x512xf32>
    %cst_21 = arith.constant dense<0.000000e+00> : vector<64x512xf32>
    %19 = tpu.matmul %16, %18, %cst_21 {dimension_numbers = #tpu.dot_dimension_numbers<[1], [0], [0], [1], [0, 0, 1, 1], [], []>} : vector<64x128xf32>, vector<128x512xf32>, vector<64x512xf32> -> vector<64x512xf32>
    %20 = arith.addf %10, %19 : vector<64x512xf32>
    %c0_22 = arith.constant 0 : index
    %c0_23 = arith.constant 0 : index
    %c0_24 = arith.constant 0 : index
    %21 = vector.load %arg9[%c0_22, %c0_23, %c0_24] : memref<2x1x512xf32, #tpu.memory_space<vmem>>, vector<1x1x512xf32>
    %22 = vector.shape_cast %21 : vector<1x1x512xf32> to vector<1x512xf32>
    %23 = vector.broadcast %22 : vector<1x512xf32> to vector<64x512xf32>
    %24 = arith.addf %15, %23 : vector<64x512xf32>
    %c0_25 = arith.constant 0 : index
    %c0_26 = arith.constant 0 : index
    %25 = vector.load %arg13[%c0_25, %c0_26] : memref<64x512xf32, #tpu.memory_space<vmem>>, vector<64x512xf32>
    tpu.vector_store %arg13[%c0_25, %c0_26], %24 {strides = array<i32>} : memref<64x512xf32, #tpu.memory_space<vmem>>, vector<64x512xf32>,
    %c1_27 = arith.constant 1 : index
    %c0_28 = arith.constant 0 : index
    %c0_29 = arith.constant 0 : index
    %26 = vector.load %arg9[%c1_27, %c0_28, %c0_29] : memref<2x1x512xf32, #tpu.memory_space<vmem>>, vector<1x1x512xf32>
    %27 = vector.shape_cast %26 : vector<1x1x512xf32> to vector<1x512xf32>
    %28 = vector.broadcast %27 : vector<1x512xf32> to vector<64x512xf32>
    %29 = arith.addf %20, %28 : vector<64x512xf32>
    %c0_30 = arith.constant 0 : index
    %c0_31 = arith.constant 0 : index
    %30 = vector.load %arg14[%c0_30, %c0_31] : memref<64x512xf32, #tpu.memory_space<vmem>>, vector<64x512xf32>
    tpu.vector_store %arg14[%c0_30, %c0_31], %29 {strides = array<i32>} : memref<64x512xf32, #tpu.memory_space<vmem>>, vector<64x512xf32>,
    %c0_32 = arith.constant 0 : index
    %c0_33 = arith.constant 0 : index
    %31 = vector.load %arg1[%c0_32, %c0_33] : memref<8x1xi32, #tpu.memory_space<vmem>>, vector<8x1xi32>
    %c8_i32 = arith.constant 8 : i32
    %32 = arith.muli %arg0, %c8_i32 : i32
    %c0_i32_34 = arith.constant 0 : i32
    %c8_i32_35 = arith.constant 8 : i32
    %33 = arith.addi %c0_i32_34, %c8_i32_35 : i32
    %c1_i32 = arith.constant 1 : i32
    scf.for %arg19 = %c0_i32_34 to %33 step %c1_i32  : i32 {
      %37 = arith.addi %32, %arg19 : i32
      %c8_i32_39 = arith.constant 8 : i32
      %38 = arith.muli %arg19, %c8_i32_39 : i32
      %39 = tpu.assume_multiple %38, 8 : i32
      %c0_40 = arith.constant 0 : index
      %c0_41 = arith.constant 0 : index
      %40 = vector.load %arg15[%c0_40, %c0_41] : memref<8x128xf32, #tpu.memory_space<vmem>>, vector<8x128xf32>
      %41 = arith.index_cast %39 : i32 to index
      %c0_42 = arith.constant 0 : index
      %42 = vector.load %arg13[%41, %c0_42] : memref<64x512xf32, #tpu.memory_space<vmem>>, vector<8x512xf32>
      %c0_43 = arith.constant 0 : index
      %c0_44 = arith.constant 0 : index
      %c0_45 = arith.constant 0 : index
      %43 = vector.load %arg8[%c0_43, %c0_44, %c0_45] : memref<2x128x512xf32, #tpu.memory_space<vmem>>, vector<1x128x512xf32>
      %44 = vector.shape_cast %43 : vector<1x128x512xf32> to vector<128x512xf32>
      %cst_46 = arith.constant dense<0.000000e+00> : vector<8x512xf32>
      %45 = tpu.matmul %40, %44, %cst_46 {dimension_numbers = #tpu.dot_dimension_numbers<[1], [0], [0], [1], [0, 0, 1, 1], [], []>} : vector<8x128xf32>, vector<128x512xf32>, vector<8x512xf32> -> vector<8x512xf32>
      %46 = arith.addf %42, %45 : vector<8x512xf32>
      %47 = vector.extract_strided_slice %46 {offsets = [0, 0], sizes = [8, 128], strides = [1, 1]} : vector<8x512xf32> to vector<8x128xf32>
      %48 = arith.negf %47 : vector<8x128xf32>
      %49 = math.exp %48 : vector<8x128xf32>
      %cst_47 = arith.constant 1.000000e+00 : f32
      %50 = vector.broadcast %cst_47 : f32 to vector<8x128xf32>
      %51 = arith.addf %50, %49 : vector<8x128xf32>
      %52 = arith.divf %50, %51 : vector<8x128xf32>
      %53 = vector.extract_strided_slice %46 {offsets = [0, 128], sizes = [8, 128], strides = [1, 1]} : vector<8x512xf32> to vector<8x128xf32>
      %54 = arith.negf %53 : vector<8x128xf32>
      %55 = math.exp %54 : vector<8x128xf32>
      %cst_48 = arith.constant 1.000000e+00 : f32
      %56 = vector.broadcast %cst_48 : f32 to vector<8x128xf32>
      %57 = arith.addf %56, %55 : vector<8x128xf32>
      %58 = arith.divf %56, %57 : vector<8x128xf32>
      %59 = vector.extract_strided_slice %46 {offsets = [0, 256], sizes = [8, 128], strides = [1, 1]} : vector<8x512xf32> to vector<8x128xf32>
      %60 = math.tanh %59 : vector<8x128xf32>
      %61 = vector.extract_strided_slice %46 {offsets = [0, 384], sizes = [8, 128], strides = [1, 1]} : vector<8x512xf32> to vector<8x128xf32>
      %62 = arith.negf %61 : vector<8x128xf32>
      %63 = math.exp %62 : vector<8x128xf32>
      %cst_49 = arith.constant 1.000000e+00 : f32
      %64 = vector.broadcast %cst_49 : f32 to vector<8x128xf32>
      %65 = arith.addf %64, %63 : vector<8x128xf32>
      %66 = arith.divf %64, %65 : vector<8x128xf32>
      %c0_50 = arith.constant 0 : index
      %c0_51 = arith.constant 0 : index
      %67 = vector.load %arg16[%c0_50, %c0_51] : memref<8x128xf32, #tpu.memory_space<vmem>>, vector<8x128xf32>
      %68 = arith.mulf %58, %67 : vector<8x128xf32>
      %69 = arith.mulf %52, %60 : vector<8x128xf32>
      %70 = arith.addf %68, %69 : vector<8x128xf32>
      %71 = math.tanh %70 : vector<8x128xf32>
      %72 = arith.mulf %66, %71 : vector<8x128xf32>
      %73 = vector.broadcast %37 : i32 to vector<8x1xi32>
      %74 = arith.cmpi slt, %73, %31 : vector<8x1xi32>
      %75 = vector.shape_cast %74 : vector<8x1xi1> to vector<8x1xi1>
      %76 = vector.broadcast %75 : vector<8x1xi1> to vector<8x128xi1>
      %77 = arith.select %76, %72, %40 : vector<8x128xi1>, vector<8x128xf32>
      %c0_52 = arith.constant 0 : index
      %c0_53 = arith.constant 0 : index
      %78 = vector.load %arg15[%c0_52, %c0_53] : memref<8x128xf32, #tpu.memory_space<vmem>>, vector<8x128xf32>
      tpu.vector_store %arg15[%c0_52, %c0_53], %77 {strides = array<i32>} : memref<8x128xf32, #tpu.memory_space<vmem>>, vector<8x128xf32>,
      %c0_54 = arith.constant 0 : index
      %c0_55 = arith.constant 0 : index
      %79 = vector.load %arg16[%c0_54, %c0_55] : memref<8x128xf32, #tpu.memory_space<vmem>>, vector<8x128xf32>
      %80 = vector.shape_cast %74 : vector<8x1xi1> to vector<8x1xi1>
      %81 = vector.broadcast %80 : vector<8x1xi1> to vector<8x128xi1>
      %82 = arith.select %81, %70, %79 : vector<8x128xi1>, vector<8x128xf32>
      %c0_56 = arith.constant 0 : index
      %c0_57 = arith.constant 0 : index
      %83 = vector.load %arg16[%c0_56, %c0_57] : memref<8x128xf32, #tpu.memory_space<vmem>>, vector<8x128xf32>
      tpu.vector_store %arg16[%c0_56, %c0_57], %82 {strides = array<i32>} : memref<8x128xf32, #tpu.memory_space<vmem>>, vector<8x128xf32>,
      %c7_i32 = arith.constant 7 : i32
      %84 = arith.subi %c7_i32, %37 : i32
      %c7_i32_58 = arith.constant 7 : i32
      %85 = arith.subi %c7_i32_58, %arg19 : i32
      %c8_i32_59 = arith.constant 8 : i32
      %86 = arith.muli %85, %c8_i32_59 : i32
      %87 = tpu.assume_multiple %86, 8 : i32
      %c0_60 = arith.constant 0 : index
      %c0_61 = arith.constant 0 : index
      %88 = vector.load %arg17[%c0_60, %c0_61] : memref<8x128xf32, #tpu.memory_space<vmem>>, vector<8x128xf32>
      %89 = arith.index_cast %87 : i32 to index
      %c0_62 = arith.constant 0 : index
      %90 = vector.load %arg14[%89, %c0_62] : memref<64x512xf32, #tpu.memory_space<vmem>>, vector<8x512xf32>
      %c1_63 = arith.constant 1 : index
      %c0_64 = arith.constant 0 : index
      %c0_65 = arith.constant 0 : index
      %91 = vector.load %arg8[%c1_63, %c0_64, %c0_65] : memref<2x128x512xf32, #tpu.memory_space<vmem>>, vector<1x128x512xf32>
      %92 = vector.shape_cast %91 : vector<1x128x512xf32> to vector<128x512xf32>
      %cst_66 = arith.constant dense<0.000000e+00> : vector<8x512xf32>
      %93 = tpu.matmul %88, %92, %cst_66 {dimension_numbers = #tpu.dot_dimension_numbers<[1], [0], [0], [1], [0, 0, 1, 1], [], []>} : vector<8x128xf32>, vector<128x512xf32>, vector<8x512xf32> -> vector<8x512xf32>
      %94 = arith.addf %90, %93 : vector<8x512xf32>
      %95 = vector.extract_strided_slice %94 {offsets = [0, 0], sizes = [8, 128], strides = [1, 1]} : vector<8x512xf32> to vector<8x128xf32>
      %96 = arith.negf %95 : vector<8x128xf32>
      %97 = math.exp %96 : vector<8x128xf32>
      %cst_67 = arith.constant 1.000000e+00 : f32
      %98 = vector.broadcast %cst_67 : f32 to vector<8x128xf32>
      %99 = arith.addf %98, %97 : vector<8x128xf32>
      %100 = arith.divf %98, %99 : vector<8x128xf32>
      %101 = vector.extract_strided_slice %94 {offsets = [0, 128], sizes = [8, 128], strides = [1, 1]} : vector<8x512xf32> to vector<8x128xf32>
      %102 = arith.negf %101 : vector<8x128xf32>
      %103 = math.exp %102 : vector<8x128xf32>
      %cst_68 = arith.constant 1.000000e+00 : f32
      %104 = vector.broadcast %cst_68 : f32 to vector<8x128xf32>
      %105 = arith.addf %104, %103 : vector<8x128xf32>
      %106 = arith.divf %104, %105 : vector<8x128xf32>
      %107 = vector.extract_strided_slice %94 {offsets = [0, 256], sizes = [8, 128], strides = [1, 1]} : vector<8x512xf32> to vector<8x128xf32>
      %108 = math.tanh %107 : vector<8x128xf32>
      %109 = vector.extract_strided_slice %94 {offsets = [0, 384], sizes = [8, 128], strides = [1, 1]} : vector<8x512xf32> to vector<8x128xf32>
      %110 = arith.negf %109 : vector<8x128xf32>
      %111 = math.exp %110 : vector<8x128xf32>
      %cst_69 = arith.constant 1.000000e+00 : f32
      %112 = vector.broadcast %cst_69 : f32 to vector<8x128xf32>
      %113 = arith.addf %112, %111 : vector<8x128xf32>
      %114 = arith.divf %112, %113 : vector<8x128xf32>
      %c0_70 = arith.constant 0 : index
      %c0_71 = arith.constant 0 : index
      %115 = vector.load %arg18[%c0_70, %c0_71] : memref<8x128xf32, #tpu.memory_space<vmem>>, vector<8x128xf32>
      %116 = arith.mulf %106, %115 : vector<8x128xf32>
      %117 = arith.mulf %100, %108 : vector<8x128xf32>
      %118 = arith.addf %116, %117 : vector<8x128xf32>
      %119 = math.tanh %118 : vector<8x128xf32>
      %120 = arith.mulf %114, %119 : vector<8x128xf32>
      %121 = vector.broadcast %84 : i32 to vector<8x1xi32>
      %122 = arith.cmpi slt, %121, %31 : vector<8x1xi32>
      %123 = vector.shape_cast %122 : vector<8x1xi1> to vector<8x1xi1>
      %124 = vector.broadcast %123 : vector<8x1xi1> to vector<8x128xi1>
      %125 = arith.select %124, %120, %88 : vector<8x128xi1>, vector<8x128xf32>
      %c0_72 = arith.constant 0 : index
      %c0_73 = arith.constant 0 : index
      %126 = vector.load %arg17[%c0_72, %c0_73] : memref<8x128xf32, #tpu.memory_space<vmem>>, vector<8x128xf32>
      tpu.vector_store %arg17[%c0_72, %c0_73], %125 {strides = array<i32>} : memref<8x128xf32, #tpu.memory_space<vmem>>, vector<8x128xf32>,
      %c0_74 = arith.constant 0 : index
      %c0_75 = arith.constant 0 : index
      %127 = vector.load %arg18[%c0_74, %c0_75] : memref<8x128xf32, #tpu.memory_space<vmem>>, vector<8x128xf32>
      %128 = vector.shape_cast %122 : vector<8x1xi1> to vector<8x1xi1>
      %129 = vector.broadcast %128 : vector<8x1xi1> to vector<8x128xi1>
      %130 = arith.select %129, %118, %127 : vector<8x128xi1>, vector<8x128xf32>
      %c0_76 = arith.constant 0 : index
      %c0_77 = arith.constant 0 : index
      %131 = vector.load %arg18[%c0_76, %c0_77] : memref<8x128xf32, #tpu.memory_space<vmem>>, vector<8x128xf32>
      tpu.vector_store %arg18[%c0_76, %c0_77], %130 {strides = array<i32>} : memref<8x128xf32, #tpu.memory_space<vmem>>, vector<8x128xf32>,
    }
    %c8_i32_36 = arith.constant 8 : i32
    %c0_i32_37 = arith.constant 0 : i32
    %34 = arith.cmpi eq, %arg0, %c0_i32_37 : i32
    %35 = arith.extui %34 : i1 to i32
    %c0_i32_38 = arith.constant 0 : i32
    %36 = arith.cmpi ne, %35, %c0_i32_38 : i32
    scf.if %36 {
      %c0_39 = arith.constant 0 : index
      %c0_40 = arith.constant 0 : index
      %37 = vector.load %arg15[%c0_39, %c0_40] : memref<8x128xf32, #tpu.memory_space<vmem>>, vector<8x128xf32>
      %c0_41 = arith.constant 0 : index
      %c0_42 = arith.constant 0 : index
      %c0_43 = arith.constant 0 : index
      %38 = vector.load %arg10[%c0_41, %c0_42, %c0_43] : memref<2x128x128xf32, #tpu.memory_space<vmem>>, vector<1x128x128xf32>
      %39 = vector.shape_cast %38 : vector<1x128x128xf32> to vector<128x128xf32>
      %cst_44 = arith.constant dense<0.000000e+00> : vector<8x128xf32>
      %40 = tpu.matmul %37, %39, %cst_44 {dimension_numbers = #tpu.dot_dimension_numbers<[1], [0], [0], [1], [0, 0, 1, 1], [], []>} : vector<8x128xf32>, vector<128x128xf32>, vector<8x128xf32> -> vector<8x128xf32>
      %c0_45 = arith.constant 0 : index
      %c0_46 = arith.constant 0 : index
      %41 = vector.load %arg17[%c0_45, %c0_46] : memref<8x128xf32, #tpu.memory_space<vmem>>, vector<8x128xf32>
      %c1_47 = arith.constant 1 : index
      %c0_48 = arith.constant 0 : index
      %c0_49 = arith.constant 0 : index
      %42 = vector.load %arg10[%c1_47, %c0_48, %c0_49] : memref<2x128x128xf32, #tpu.memory_space<vmem>>, vector<1x128x128xf32>
      %43 = vector.shape_cast %42 : vector<1x128x128xf32> to vector<128x128xf32>
      %cst_50 = arith.constant dense<0.000000e+00> : vector<8x128xf32>
      %44 = tpu.matmul %41, %43, %cst_50 {dimension_numbers = #tpu.dot_dimension_numbers<[1], [0], [0], [1], [0, 0, 1, 1], [], []>} : vector<8x128xf32>, vector<128x128xf32>, vector<8x128xf32> -> vector<8x128xf32>
      %45 = arith.addf %40, %44 : vector<8x128xf32>
      %c0_51 = arith.constant 0 : index
      %c0_52 = arith.constant 0 : index
      %46 = vector.load %arg11[%c0_51, %c0_52] : memref<1x128xf32, #tpu.memory_space<vmem>>, vector<1x128xf32>
      %47 = vector.broadcast %46 : vector<1x128xf32> to vector<8x128xf32>
      %48 = arith.addf %45, %47 : vector<8x128xf32>
      %c0_53 = arith.constant 0 : index
      %c0_54 = arith.constant 0 : index
      %49 = vector.load %arg12[%c0_53, %c0_54] : memref<8x128xf32, #tpu.memory_space<vmem>>, vector<8x128xf32>
      tpu.vector_store %arg12[%c0_53, %c0_54], %48 {strides = array<i32>} : memref<8x128xf32, #tpu.memory_space<vmem>>, vector<8x128xf32>,
    } else {
    }
    return
  }
  func.func @transform_0(%arg0: i32) -> (i32, i32) {
    %c0_i32 = arith.constant 0 : i32
    %c0_i32_0 = arith.constant 0 : i32
    %c0_i32_1 = arith.constant 0 : i32
    return %c0_i32, %c0_i32_0 : i32, i32
  }
  func.func @transform_1(%arg0: i32) -> (i32, i32) {
    %c0_i32 = arith.constant 0 : i32
    %c0_i32_0 = arith.constant 0 : i32
    return %arg0, %c0_i32 : i32, i32
  }
  func.func @transform_2(%arg0: i32) -> (i32, i32) {
    %c0_i32 = arith.constant 0 : i32
    %c0_i32_0 = arith.constant 0 : i32
    return %arg0, %c0_i32 : i32, i32
  }
  func.func @transform_3(%arg0: i32) -> (i32, i32) {
    %c0_i32 = arith.constant 0 : i32
    %0 = arith.subi %c0_i32, %arg0 : i32
    %c0_i32_0 = arith.constant 0 : i32
    %c0_i32_1 = arith.constant 0 : i32
    return %0, %c0_i32_0 : i32, i32
  }
  func.func @transform_4(%arg0: i32) -> (i32, i32) {
    %c0_i32 = arith.constant 0 : i32
    %0 = arith.subi %c0_i32, %arg0 : i32
    %c0_i32_0 = arith.constant 0 : i32
    %c0_i32_1 = arith.constant 0 : i32
    return %0, %c0_i32_0 : i32, i32
  }
  func.func @transform_5(%arg0: i32) -> (i32, i32, i32) {
    %c0_i32 = arith.constant 0 : i32
    %c0_i32_0 = arith.constant 0 : i32
    %c0_i32_1 = arith.constant 0 : i32
    %c0_i32_2 = arith.constant 0 : i32
    return %c0_i32, %c0_i32_0, %c0_i32_1 : i32, i32, i32
  }
  func.func @transform_6(%arg0: i32) -> (i32, i32, i32) {
    %c0_i32 = arith.constant 0 : i32
    %c0_i32_0 = arith.constant 0 : i32
    %c0_i32_1 = arith.constant 0 : i32
    %c0_i32_2 = arith.constant 0 : i32
    return %c0_i32, %c0_i32_0, %c0_i32_1 : i32, i32, i32
  }
  func.func @transform_7(%arg0: i32) -> (i32, i32, i32) {
    %c0_i32 = arith.constant 0 : i32
    %c0_i32_0 = arith.constant 0 : i32
    %c0_i32_1 = arith.constant 0 : i32
    %c0_i32_2 = arith.constant 0 : i32
    return %c0_i32, %c0_i32_0, %c0_i32_1 : i32, i32, i32
  }
  func.func @transform_8(%arg0: i32) -> (i32, i32, i32) {
    %c0_i32 = arith.constant 0 : i32
    %c0_i32_0 = arith.constant 0 : i32
    %c0_i32_1 = arith.constant 0 : i32
    %c0_i32_2 = arith.constant 0 : i32
    return %c0_i32, %c0_i32_0, %c0_i32_1 : i32, i32, i32
  }
  func.func @transform_9(%arg0: i32) -> (i32, i32, i32) {
    %c0_i32 = arith.constant 0 : i32
    %c0_i32_0 = arith.constant 0 : i32
    %c0_i32_1 = arith.constant 0 : i32
    %c0_i32_2 = arith.constant 0 : i32
    return %c0_i32, %c0_i32_0, %c0_i32_1 : i32, i32, i32
  }
  func.func @transform_10(%arg0: i32) -> (i32, i32) {
    %c0_i32 = arith.constant 0 : i32
    %c0_i32_0 = arith.constant 0 : i32
    %c0_i32_1 = arith.constant 0 : i32
    return %c0_i32, %c0_i32_0 : i32, i32
  }
  func.func @transform_11(%arg0: i32) -> (i32, i32) {
    %c0_i32 = arith.constant 0 : i32
    %c0_i32_0 = arith.constant 0 : i32
    %c0_i32_1 = arith.constant 0 : i32
    return %c0_i32, %c0_i32_0 : i32, i32
  }
}

</mosaic_0001>

<llo_original>
// kernel: _lambda_.2
$region0: #{_lambda_.2}
  #allocation0 [shape = 'u32[]', space=smem, size = 0x4, offset = 0x4, fixed_abs, tag = 'smem constant byte address 0x4 - core index']
  #allocation1 [shape = 'u32[144,128]{1,0:T(1,128)}', space=vmem, size = 0x12000, scoped, tag = 'internal scratch']
  #allocation2 [shape = 'f32[64,512]{1,0:T(8,128)}', space=vmem, size = 0x20000, scoped, tag = 'scratch operand']
  #allocation3 [shape = 'f32[64,512]{1,0:T(8,128)}', space=vmem, size = 0x20000, scoped, tag = 'scratch operand']
  #allocation4 [shape = 'f32[8,128]{1,0:T(8,128)}', space=vmem, size = 0x1000, scoped, tag = 'scratch operand']
  #allocation5 [shape = 'f32[8,128]{1,0:T(8,128)}', space=vmem, size = 0x1000, scoped, tag = 'scratch operand']
  #allocation6 [shape = 'f32[8,128]{1,0:T(8,128)}', space=vmem, size = 0x1000, scoped, tag = 'scratch operand']
  #allocation7 [shape = 'f32[8,128]{1,0:T(8,128)}', space=vmem, size = 0x1000, scoped, tag = 'scratch operand']
  %s0 = inlined_call_operand.vmem [shape: s32[8,1], index: 0, kind: input, shape index: {}]
  %s1 = inlined_call_operand.vmem [shape: f32[64,128], index: 1, kind: input, shape index: {}, may-alias: {1,2}]
  %s2 = inlined_call_operand.vmem [shape: f32[64,128], index: 2, kind: input, shape index: {}, may-alias: {1,2}]
  %s3 = inlined_call_operand.hbm [shape: f32[2,128,512], index: 3, kind: input, shape index: {}]
  %s4 = inlined_call_operand.hbm [shape: f32[2,128,512], index: 4, kind: input, shape index: {}]
  %s5 = inlined_call_operand.vmem [shape: f32[2,1,512], index: 5, kind: input, shape index: {}]
  %s6 = inlined_call_operand.vmem [shape: f32[64,128], index: 6, kind: output, shape index: {0}]
  %s7 = inlined_call_operand.vmem [shape: f32[64,128], index: 7, kind: output, shape index: {1}]
  %8 = xla_tuple %s6, %s7
  %s9 = sld [smem:[#allocation0]]
  $region61: #{_lambda_.2} parent=0
    _
  %s11 = ssub.s32 1, %s9
  %s12 = scalar_select 0, %s11, %s9
  $region1: #{_lambda_.2} parent=0
    #allocation8 [shape = 'u8[524288]{0}', space=vmem, size = 0x80000, scoped, tag = 'input window, operand 3, single buffered']
    #allocation9 [shape = 's32[1]{0}', space=sflag, size = 0x4, scoped, tag = 'scoped memory for _lambda_.2']
    #allocation10 [shape = 'u8[524288]{0}', space=vmem, size = 0x80000, scoped, tag = 'input window, operand 4, single buffered']
    #allocation11 [shape = 's32[1]{0}', space=sflag, size = 0x4, scoped, tag = 'scoped memory for _lambda_.2']
    %13 = vsyncpa [#allocation9], 0
    %14 = vsyncpa [#allocation11], 0
    // Predicated region
    $region2: #{_lambda_.2} parent=1 // pred_check
      _
    $region3: #{_lambda_.2} parent=1 // pred_check_branch
      %16 = sbr.rel (0) target = $region5
    $region4: #{_lambda_.2} parent=1 // pred_region
      _
    $region5: #{_lambda_.2} parent=1 // pred_fallthru
      _
    // Predicated region
    $region6: #{_lambda_.2} parent=1 // pred_check
      _
    $region7: #{_lambda_.2} parent=1 // pred_check_branch
      %18 = sbr.rel (0) target = $region9
    $region8: #{_lambda_.2} parent=1 // pred_region
      _
    $region9: #{_lambda_.2} parent=1 // pred_fallthru
      _
    // Predicated region
    $region10: #{_lambda_.2} parent=1 // pred_check
      _
    $region11: #{_lambda_.2} parent=1 // pred_check_branch
      %20 = sbr.rel (0) target = $region13
    $region12: #{_lambda_.2} parent=1 // pred_region
      %s21 = ssub.s32 0, 0
      %s22 = smul.u32 8, %s21
      %p23 = scmp.lt.s32.totalorder %s22, 7
      %s24 = scalar_select %p23, %s22, 7
      %s25 = smul.addr %s24, 8
      %s26 = scalar_lea.vmem %s2, %s25
      %s27 = ssub.s32 0, 0
      %s28 = smul.u32 8, %s27
    $region13: #{_lambda_.2} parent=1 // pred_fallthru
      _
    // Predicated region
    $region14: #{_lambda_.2} parent=1 // pred_check
      _
    $region15: #{_lambda_.2} parent=1 // pred_check_branch
      %30 = sbr.rel (0) target = $region17
    $region16: #{_lambda_.2} parent=1 // pred_region
      %s32 = ssub.s32 16384, 16384
      %33 = vsyncadd [#allocation9], %s32
      %s34 = sshll.u32 [#allocation8], 4
      %s35 = int_to_ptr.vmem [resolvable:$true] %s34
      %40 = dma.hbm_to_vmem [thread:$0]  %s3, 16384, %s35, [#allocation9], 512, 512, 32
    $region17: #{_lambda_.2} parent=1 // pred_fallthru
      _
    // Predicated region
    $region18: #{_lambda_.2} parent=1 // pred_check
      _
    $region19: #{_lambda_.2} parent=1 // pred_check_branch
      %42 = sbr.rel (0) target = $region21
    $region20: #{_lambda_.2} parent=1 // pred_region
      %s44 = ssub.s32 16384, 16384
      %45 = vsyncadd [#allocation11], %s44
      %s46 = sshll.u32 [#allocation10], 4
      %s47 = int_to_ptr.vmem [resolvable:$true] %s46
      %52 = dma.hbm_to_vmem [thread:$0]  %s4, 16384, %s47, [#allocation11], 512, 512, 32
    $region21: #{_lambda_.2} parent=1 // pred_fallthru
      _
    // Predicated region
    $region22: #{_lambda_.2} parent=1 // pred_check
      _
    $region23: #{_lambda_.2} parent=1 // pred_check_branch
      %54 = sbr.rel (0) target = $region25
    $region24: #{_lambda_.2} parent=1 // pred_region
      _
    $region25: #{_lambda_.2} parent=1 // pred_fallthru
      _
    // Predicated region
    $region26: #{_lambda_.2} parent=1 // pred_check
      _
    $region27: #{_lambda_.2} parent=1 // pred_check_branch
      %56 = sbr.rel (0) target = $region29
    $region28: #{_lambda_.2} parent=1 // pred_region
      %57 = dma.done [#allocation9], 16384
    $region29: #{_lambda_.2} parent=1 // pred_fallthru
      _
    // Predicated region
    $region30: #{_lambda_.2} parent=1 // pred_check
      _
    $region31: #{_lambda_.2} parent=1 // pred_check_branch
      %59 = sbr.rel (0) target = $region33
    $region32: #{_lambda_.2} parent=1 // pred_region
      %60 = dma.done [#allocation11], 16384
    $region33: #{_lambda_.2} parent=1 // pred_fallthru
      _
    %s61 = ssub.s32 0, 0
    %s62 = smul.u32 8, %s61
    %p63 = scmp.lt.s32.totalorder %s62, 7
    %s64 = scalar_select %p63, %s62, 7
    %s65 = smul.addr %s64, 8
    %s66 = scalar_lea.vmem %s2, %s65
    %s67 = ssub.s32 0, 0
    %s68 = smul.u32 8, %s67
    %p69 = scmp.lt.s32.totalorder %s68, 7
    %s70 = scalar_select %p69, %s68, 7
    %s71 = smul.addr %s70, 8
    %s72 = scalar_lea.vmem %s7, %s71
    %s73 = ssub.s32 0, 0
    %s74 = smul.u32 8, %s73
    %p75 = scmp.lt.s32.totalorder %s74, 7
    %s76 = scalar_select %p75, %s74, 7
    %s77 = smul.addr %s76, 8
    %s78 = scalar_lea.vmem %s2, %s77
    %s79 = ssub.s32 0, 0
    %s80 = smul.u32 8, %s79
    %s81 = ssub.s32 0, 0
    %s82 = smul.u32 8, %s81
    %p83 = scmp.lt.s32.totalorder %s82, 7
    %s84 = scalar_select %p83, %s82, 7
    %s85 = smul.addr %s84, 8
    %s86 = scalar_lea.vmem %s7, %s85
    %s87 = ssub.s32 0, 0
    %s88 = smul.u32 8, %s87
    %p89 = scmp.eq.s32.totalorder 0, 0
    // Predicated region
    $region34: #{_lambda_.2} parent=1 // pred_check
      %p90 = pneg %p89
    $region35: #{_lambda_.2} parent=1 // pred_check_branch
      %92 = sbr.rel (%p90) target = $region37
    $region36: #{_lambda_.2} parent=1 // pred_region
      %93 = vst [vmem:[#allocation4] sm:$0xff] 0.0
      %94 = vst [vmem:[#allocation5] sm:$0xff] 0.0
      %95 = vst [vmem:[#allocation6] sm:$0xff] 0.0
      %96 = vst [vmem:[#allocation7] sm:$0xff] 0.0
    $region37: #{_lambda_.2} parent=1 // pred_fallthru
      _
    %v97 = vld [vmem:[%s1] sm:$0xff]
    %v98 = vld [vmem:[%s1 + $0x8] sm:$0xff]
    %v99 = vld [vmem:[%s1 + $0x10] sm:$0xff]
    %v100 = vld [vmem:[%s1 + $0x18] sm:$0xff]
    %v101 = vld [vmem:[%s1 + $0x20] sm:$0xff]
    %v102 = vld [vmem:[%s1 + $0x28] sm:$0xff]
    %v103 = vld [vmem:[%s1 + $0x30] sm:$0xff]
    %v104 = vld [vmem:[%s1 + $0x38] sm:$0xff]
    %v105 = vld [vmem:[#allocation8] sm:$0xff]
    %v106 = vld [vmem:[#allocation8 + $0x8] sm:$0xff]
    %v107 = vld [vmem:[#allocation8 + $0x10] sm:$0xff]
    %v108 = vld [vmem:[#allocation8 + $0x18] sm:$0xff]
    %v109 = vld [vmem:[#allocation8 + $0x20] sm:$0xff]
    %v110 = vld [vmem:[#allocation8 + $0x28] sm:$0xff]
    %v111 = vld [vmem:[#allocation8 + $0x30] sm:$0xff]
    %v112 = vld [vmem:[#allocation8 + $0x38] sm:$0xff]
    %v113 = vld [vmem:[#allocation8 + $0x40] sm:$0xff]
    %v114 = vld [vmem:[#allocation8 + $0x48] sm:$0xff]
    %v115 = vld [vmem:[#allocation8 + $0x50] sm:$0xff]
    %v116 = vld [vmem:[#allocation8 + $0x58] sm:$0xff]
    %v117 = vld [vmem:[#allocation8 + $0x60] sm:$0xff]
    %v118 = vld [vmem:[#allocation8 + $0x68] sm:$0xff]
    %v119 = vld [vmem:[#allocation8 + $0x70] sm:$0xff]
    %v120 = vld [vmem:[#allocation8 + $0x78] sm:$0xff]
    %v121 = vld [vmem:[#allocation8 + $0x80] sm:$0xff]
    %v122 = vld [vmem:[#allocation8 + $0x88] sm:$0xff]
    %v123 = vld [vmem:[#allocation8 + $0x90] sm:$0xff]
    %v124 = vld [vmem:[#allocation8 + $0x98] sm:$0xff]
    %v125 = vld [vmem:[#allocation8 + $0xa0] sm:$0xff]
    %v126 = vld [vmem:[#allocation8 + $0xa8] sm:$0xff]
    %v127 = vld [vmem:[#allocation8 + $0xb0] sm:$0xff]
    %v128 = vld [vmem:[#allocation8 + $0xb8] sm:$0xff]
    %v129 = vld [vmem:[#allocation8 + $0xc0] sm:$0xff]
    %v130 = vld [vmem:[#allocation8 + $0xc8] sm:$0xff]
    %v131 = vld [vmem:[#allocation8 + $0xd0] sm:$0xff]
    %v132 = vld [vmem:[#allocation8 + $0xd8] sm:$0xff]
    %v133 = vld [vmem:[#allocation8 + $0xe0] sm:$0xff]
    %v134 = vld [vmem:[#allocation8 + $0xe8] sm:$0xff]
    %v135 = vld [vmem:[#allocation8 + $0xf0] sm:$0xff]
    %v136 = vld [vmem:[#allocation8 + $0xf8] sm:$0xff]
    %v137 = vld [vmem:[#allocation8 + $0x100] sm:$0xff]
    %v138 = vld [vmem:[#allocation8 + $0x108] sm:$0xff]
    %v139 = vld [vmem:[#allocation8 + $0x110] sm:$0xff]
    %v140 = vld [vmem:[#allocation8 + $0x118] sm:$0xff]
    %v141 = vld [vmem:[#allocation8 + $0x120] sm:$0xff]
    %v142 = vld [vmem:[#allocation8 + $0x128] sm:$0xff]
    %v143 = vld [vmem:[#allocation8 + $0x130] sm:$0xff]
    %v144 = vld [vmem:[#allocation8 + $0x138] sm:$0xff]
    %v145 = vld [vmem:[#allocation8 + $0x140] sm:$0xff]
    %v146 = vld [vmem:[#allocation8 + $0x148] sm:$0xff]
    %v147 = vld [vmem:[#allocation8 + $0x150] sm:$0xff]
    %v148 = vld [vmem:[#allocation8 + $0x158] sm:$0xff]
    %v149 = vld [vmem:[#allocation8 + $0x160] sm:$0xff]
    %v150 = vld [vmem:[#allocation8 + $0x168] sm:$0xff]
    %v151 = vld [vmem:[#allocation8 + $0x170] sm:$0xff]
    %v152 = vld [vmem:[#allocation8 + $0x178] sm:$0xff]
    %v153 = vld [vmem:[#allocation8 + $0x180] sm:$0xff]
    %v154 = vld [vmem:[#allocation8 + $0x188] sm:$0xff]
    %v155 = vld [vmem:[#allocation8 + $0x190] sm:$0xff]
    %v156 = vld [vmem:[#allocation8 + $0x198] sm:$0xff]
    %v157 = vld [vmem:[#allocation8 + $0x1a0] sm:$0xff]
    %v158 = vld [vmem:[#allocation8 + $0x1a8] sm:$0xff]
    %v159 = vld [vmem:[#allocation8 + $0x1b0] sm:$0xff]
    %v160 = vld [vmem:[#allocation8 + $0x1b8] sm:$0xff]
    %v161 = vld [vmem:[#allocation8 + $0x1c0] sm:$0xff]
    %v162 = vld [vmem:[#allocation8 + $0x1c8] sm:$0xff]
    %v163 = vld [vmem:[#allocation8 + $0x1d0] sm:$0xff]
    %v164 = vld [vmem:[#allocation8 + $0x1d8] sm:$0xff]
    %v165 = vld [vmem:[#allocation8 + $0x1e0] sm:$0xff]
    %v166 = vld [vmem:[#allocation8 + $0x1e8] sm:$0xff]
    %v167 = vld [vmem:[#allocation8 + $0x1f0] sm:$0xff]
    %v168 = vld [vmem:[#allocation8 + $0x1f8] sm:$0xff]
    %v169 = vld [vmem:[%s78] sm:$0xff]
    %v170 = vld [vmem:[%s78 + $0x8] sm:$0xff]
    %v171 = vld [vmem:[%s78 + $0x10] sm:$0xff]
    %v172 = vld [vmem:[%s78 + $0x18] sm:$0xff]
    %v173 = vld [vmem:[%s78 + $0x20] sm:$0xff]
    %v174 = vld [vmem:[%s78 + $0x28] sm:$0xff]
    %v175 = vld [vmem:[%s78 + $0x30] sm:$0xff]
    %v176 = vld [vmem:[%s78 + $0x38] sm:$0xff]
    %s177 = scalar_lea.vmem [#allocation8], 512
    %v178 = vld [vmem:[%s177] sm:$0xff]
    %v179 = vld [vmem:[%s177 + $0x8] sm:$0xff]
    %v180 = vld [vmem:[%s177 + $0x10] sm:$0xff]
    %v181 = vld [vmem:[%s177 + $0x18] sm:$0xff]
    %v182 = vld [vmem:[%s177 + $0x20] sm:$0xff]
    %v183 = vld [vmem:[%s177 + $0x28] sm:$0xff]
    %v184 = vld [vmem:[%s177 + $0x30] sm:$0xff]
    %v185 = vld [vmem:[%s177 + $0x38] sm:$0xff]
    %v186 = vld [vmem:[%s177 + $0x40] sm:$0xff]
    %v187 = vld [vmem:[%s177 + $0x48] sm:$0xff]
    %v188 = vld [vmem:[%s177 + $0x50] sm:$0xff]
    %v189 = vld [vmem:[%s177 + $0x58] sm:$0xff]
    %v190 = vld [vmem:[%s177 + $0x60] sm:$0xff]
    %v191 = vld [vmem:[%s177 + $0x68] sm:$0xff]
    %v192 = vld [vmem:[%s177 + $0x70] sm:$0xff]
    %v193 = vld [vmem:[%s177 + $0x78] sm:$0xff]
    %v194 = vld [vmem:[%s177 + $0x80] sm:$0xff]
    %v195 = vld [vmem:[%s177 + $0x88] sm:$0xff]
    %v196 = vld [vmem:[%s177 + $0x90] sm:$0xff]
    %v197 = vld [vmem:[%s177 + $0x98] sm:$0xff]
    %v198 = vld [vmem:[%s177 + $0xa0] sm:$0xff]
    %v199 = vld [vmem:[%s177 + $0xa8] sm:$0xff]
    %v200 = vld [vmem:[%s177 + $0xb0] sm:$0xff]
    %v201 = vld [vmem:[%s177 + $0xb8] sm:$0xff]
    %v202 = vld [vmem:[%s177 + $0xc0] sm:$0xff]
    %v203 = vld [vmem:[%s177 + $0xc8] sm:$0xff]
    %v204 = vld [vmem:[%s177 + $0xd0] sm:$0xff]
    %v205 = vld [vmem:[%s177 + $0xd8] sm:$0xff]
    %v206 = vld [vmem:[%s177 + $0xe0] sm:$0xff]
    %v207 = vld [vmem:[%s177 + $0xe8] sm:$0xff]
    %v208 = vld [vmem:[%s177 + $0xf0] sm:$0xff]
    %v209 = vld [vmem:[%s177 + $0xf8] sm:$0xff]
    %v210 = vld [vmem:[%s177 + $0x100] sm:$0xff]
    %v211 = vld [vmem:[%s177 + $0x108] sm:$0xff]
    %v212 = vld [vmem:[%s177 + $0x110] sm:$0xff]
    %v213 = vld [vmem:[%s177 + $0x118] sm:$0xff]
    %v214 = vld [vmem:[%s177 + $0x120] sm:$0xff]
    %v215 = vld [vmem:[%s177 + $0x128] sm:$0xff]
    %v216 = vld [vmem:[%s177 + $0x130] sm:$0xff]
    %v217 = vld [vmem:[%s177 + $0x138] sm:$0xff]
    %v218 = vld [vmem:[%s177 + $0x140] sm:$0xff]
    %v219 = vld [vmem:[%s177 + $0x148] sm:$0xff]
    %v220 = vld [vmem:[%s177 + $0x150] sm:$0xff]
    %v221 = vld [vmem:[%s177 + $0x158] sm:$0xff]
    %v222 = vld [vmem:[%s177 + $0x160] sm:$0xff]
    %v223 = vld [vmem:[%s177 + $0x168] sm:$0xff]
    %v224 = vld [vmem:[%s177 + $0x170] sm:$0xff]
    %v225 = vld [vmem:[%s177 + $0x178] sm:$0xff]
    %v226 = vld [vmem:[%s177 + $0x180] sm:$0xff]
    %v227 = vld [vmem:[%s177 + $0x188] sm:$0xff]
    %v228 = vld [vmem:[%s177 + $0x190] sm:$0xff]
    %v229 = vld [vmem:[%s177 + $0x198] sm:$0xff]
    %v230 = vld [vmem:[%s177 + $0x1a0] sm:$0xff]
    %v231 = vld [vmem:[%s177 + $0x1a8] sm:$0xff]
    %v232 = vld [vmem:[%s177 + $0x1b0] sm:$0xff]
    %v233 = vld [vmem:[%s177 + $0x1b8] sm:$0xff]
    %v234 = vld [vmem:[%s177 + $0x1c0] sm:$0xff]
    %v235 = vld [vmem:[%s177 + $0x1c8] sm:$0xff]
    %v236 = vld [vmem:[%s177 + $0x1d0] sm:$0xff]
    %v237 = vld [vmem:[%s177 + $0x1d8] sm:$0xff]
    %v238 = vld [vmem:[%s177 + $0x1e0] sm:$0xff]
    %v239 = vld [vmem:[%s177 + $0x1e8] sm:$0xff]
    %v240 = vld [vmem:[%s177 + $0x1f0] sm:$0xff]
    %v241 = vld [vmem:[%s177 + $0x1f8] sm:$0xff]
    %v242 = vld [vmem:[%s5] sm:$0xf]
    %v244 = vlaneseq
    %v245 = vshrl.u32 %v244, 7
    %v246 = vsub.s32 0, %v245
    %v247 = vrot.slane %v242, %v246
    %v248 = vlaneseq
    %v249 = vshrl.u32 %v248, 7
    %v250 = vsub.s32 1, %v249
    %v251 = vrot.slane %v242, %v250
    %v252 = vlaneseq
    %v253 = vshrl.u32 %v252, 7
    %v254 = vsub.s32 2, %v253
    %v255 = vrot.slane %v242, %v254
    %v256 = vlaneseq
    %v257 = vshrl.u32 %v256, 7
    %v258 = vsub.s32 3, %v257
    %v259 = vrot.slane %v242, %v258
    %264 = vmatprep.subr.mxu0 %v166
    %265 = vmatpush1.msra.mxu0 %v165
    %266 = vmatprep.subr.mxu0 %v162
    %267 = vmatpush1.msra.mxu0 %v161
    %268 = vmatprep.subr.mxu0 %v158
    %269 = vmatpush1.msra.mxu0 %v157
    %270 = vmatprep.subr.mxu0 %v154
    %271 = vmatpush1.msra.mxu0 %v153
    %272 = vmatprep.subr.mxu0 %v150
    %273 = vmatpush1.msra.mxu0 %v149
    %274 = vmatprep.subr.mxu0 %v146
    %275 = vmatpush1.msra.mxu0 %v145
    %276 = vmatprep.subr.mxu0 %v142
    %277 = vmatpush1.msra.mxu0 %v141
    %278 = vmatprep.subr.mxu0 %v138
    %279 = vmatpush1.msra.mxu0 %v137
    %280 = vmatprep.subr.mxu0 %v134
    %281 = vmatpush1.msra.mxu0 %v133
    %282 = vmatprep.subr.mxu0 %v130
    %283 = vmatpush1.msra.mxu0 %v129
    %284 = vmatprep.subr.mxu0 %v126
    %285 = vmatpush1.msra.mxu0 %v125
    %286 = vmatprep.subr.mxu0 %v122
    %287 = vmatpush1.msra.mxu0 %v121
    %288 = vmatprep.subr.mxu0 %v118
    %289 = vmatpush1.msra.mxu0 %v117
    %290 = vmatprep.subr.mxu0 %v114
    %291 = vmatpush1.msra.mxu0 %v113
    %292 = vmatprep.subr.mxu0 %v110
    %293 = vmatpush1.msra.mxu0 %v109
    %294 = vmatprep.subr.mxu0 %v106
    %295 = vmatpush1.msra.mxu0 %v105
    %296 = vmatprep.subr.mxu0 0.0
    %297 = vmatpush2.msra.mxu0 0.0
    %298 = vmatprep.subr.mxu0 0.0
    %299 = vmatpush2.msra.mxu0 0.0
    %300 = vmatprep.subr.mxu0 0.0
    %301 = vmatpush2.msra.mxu0 0.0
    %302 = vmatprep.subr.mxu0 0.0
    %303 = vmatpush2.msra.mxu0 0.0
    %304 = vmatprep.subr.mxu0 0.0
    %305 = vmatpush2.msra.mxu0 0.0
    %306 = vmatprep.subr.mxu0 0.0
    %307 = vmatpush2.msra.mxu0 0.0
    %308 = vmatprep.subr.mxu0 0.0
    %309 = vmatpush2.msra.mxu0 0.0
    %310 = vmatprep.subr.mxu0 0.0
    %311 = vmatpush2.msra.mxu0 0.0
    %312 = vmatprep.subr.mxu0 0.0
    %313 = vmatpush2.msra.mxu0 0.0
    %314 = vmatprep.subr.mxu0 0.0
    %315 = vmatpush2.msra.mxu0 0.0
    %316 = vmatprep.subr.mxu0 0.0
    %317 = vmatpush2.msra.mxu0 0.0
    %318 = vmatprep.subr.mxu0 0.0
    %319 = vmatpush2.msra.mxu0 0.0
    %320 = vmatprep.subr.mxu0 0.0
    %321 = vmatpush2.msra.mxu0 0.0
    %322 = vmatprep.subr.mxu0 0.0
    %323 = vmatpush2.msra.mxu0 0.0
    %324 = vmatprep.subr.mxu0 0.0
    %325 = vmatpush2.msra.mxu0 0.0
    %326 = vmatprep.subr.mxu0 0.0
    %327 = vmatpush2.msra.mxu0 0.0
    %328 = vmatprep.mubr.f32.mxu0 0.0
    %329 = vmatmul.mubr.f32.gmra.mxu0 %v97
    %v330 = vpop.f32.mrf.mxu0
    %v331 = vadd.f32 %v247, %v330
    %v332 = vpop.f32.mrf.mxu0
    %v333 = vadd.f32 %v251, %v332
    %334 = vmatprep.mubr.f32.mxu0 0.0
    %335 = vmatmul.mubr.f32.gmra.mxu0 %v98
    %v336 = vpop.f32.mrf.mxu0
    %v337 = vadd.f32 %v247, %v336
    %v338 = vpop.f32.mrf.mxu0
    %v339 = vadd.f32 %v251, %v338
    %340 = vmatprep.mubr.f32.mxu0 0.0
    %341 = vmatmul.mubr.f32.gmra.mxu0 %v99
    %v342 = vpop.f32.mrf.mxu0
    %v343 = vadd.f32 %v247, %v342
    %v344 = vpop.f32.mrf.mxu0
    %v345 = vadd.f32 %v251, %v344
    %346 = vmatprep.mubr.f32.mxu0 0.0
    %347 = vmatmul.mubr.f32.gmra.mxu0 %v100
    %v348 = vpop.f32.mrf.mxu0
    %v349 = vadd.f32 %v247, %v348
    %v350 = vpop.f32.mrf.mxu0
    %v351 = vadd.f32 %v251, %v350
    %352 = vmatprep.mubr.f32.mxu0 0.0
    %353 = vmatmul.mubr.f32.gmra.mxu0 %v101
    %v354 = vpop.f32.mrf.mxu0
    %v355 = vadd.f32 %v247, %v354
    %v356 = vpop.f32.mrf.mxu0
    %v357 = vadd.f32 %v251, %v356
    %358 = vmatprep.mubr.f32.mxu0 0.0
    %359 = vmatmul.mubr.f32.gmra.mxu0 %v102
    %v360 = vpop.f32.mrf.mxu0
    %v361 = vadd.f32 %v247, %v360
    %v362 = vpop.f32.mrf.mxu0
    %v363 = vadd.f32 %v251, %v362
    %364 = vmatprep.mubr.f32.mxu0 0.0
    %365 = vmatmul.mubr.f32.gmra.mxu0 %v103
    %v366 = vpop.f32.mrf.mxu0
    %v367 = vadd.f32 %v247, %v366
    %v368 = vpop.f32.mrf.mxu0
    %v369 = vadd.f32 %v251, %v368
    %370 = vmatprep.mubr.f32.mxu0 0.0
    %371 = vmatmul.mubr.f32.gmra.mxu0 %v104
    %v372 = vpop.f32.mrf.mxu0
    %v373 = vadd.f32 %v247, %v372
    %v374 = vpop.f32.mrf.mxu0
    %v375 = vadd.f32 %v251, %v374
    %376 = vdwg.mxu0
    %377 = vmatprep.subr.mxu0 %v168
    %378 = vmatpush1.msra.mxu0 %v167
    %379 = vmatprep.subr.mxu0 %v164
    %380 = vmatpush1.msra.mxu0 %v163
    %381 = vmatprep.subr.mxu0 %v160
    %382 = vmatpush1.msra.mxu0 %v159
    %383 = vmatprep.subr.mxu0 %v156
    %384 = vmatpush1.msra.mxu0 %v155
    %385 = vmatprep.subr.mxu0 %v152
    %386 = vmatpush1.msra.mxu0 %v151
    %387 = vmatprep.subr.mxu0 %v148
    %388 = vmatpush1.msra.mxu0 %v147
    %389 = vmatprep.subr.mxu0 %v144
    %390 = vmatpush1.msra.mxu0 %v143
    %391 = vmatprep.subr.mxu0 %v140
    %392 = vmatpush1.msra.mxu0 %v139
    %393 = vmatprep.subr.mxu0 %v136
    %394 = vmatpush1.msra.mxu0 %v135
    %395 = vmatprep.subr.mxu0 %v132
    %396 = vmatpush1.msra.mxu0 %v131
    %397 = vmatprep.subr.mxu0 %v128
    %398 = vmatpush1.msra.mxu0 %v127
    %399 = vmatprep.subr.mxu0 %v124
    %400 = vmatpush1.msra.mxu0 %v123
    %401 = vmatprep.subr.mxu0 %v120
    %402 = vmatpush1.msra.mxu0 %v119
    %403 = vmatprep.subr.mxu0 %v116
    %404 = vmatpush1.msra.mxu0 %v115
    %405 = vmatprep.subr.mxu0 %v112
    %406 = vmatpush1.msra.mxu0 %v111
    %407 = vmatprep.subr.mxu0 %v108
    %408 = vmatpush1.msra.mxu0 %v107
    %409 = vmatprep.subr.mxu0 0.0
    %410 = vmatpush2.msra.mxu0 0.0
    %411 = vmatprep.subr.mxu0 0.0
    %412 = vmatpush2.msra.mxu0 0.0
    %413 = vmatprep.subr.mxu0 0.0
    %414 = vmatpush2.msra.mxu0 0.0
    %415 = vmatprep.subr.mxu0 0.0
    %416 = vmatpush2.msra.mxu0 0.0
    %417 = vmatprep.subr.mxu0 0.0
    %418 = vmatpush2.msra.mxu0 0.0
    %419 = vmatprep.subr.mxu0 0.0
    %420 = vmatpush2.msra.mxu0 0.0
    %421 = vmatprep.subr.mxu0 0.0
    %422 = vmatpush2.msra.mxu0 0.0
    %423 = vmatprep.subr.mxu0 0.0
    %424 = vmatpush2.msra.mxu0 0.0
    %425 = vmatprep.subr.mxu0 0.0
    %426 = vmatpush2.msra.mxu0 0.0
    %427 = vmatprep.subr.mxu0 0.0
    %428 = vmatpush2.msra.mxu0 0.0
    %429 = vmatprep.subr.mxu0 0.0
    %430 = vmatpush2.msra.mxu0 0.0
    %431 = vmatprep.subr.mxu0 0.0
    %432 = vmatpush2.msra.mxu0 0.0
    %433 = vmatprep.subr.mxu0 0.0
    %434 = vmatpush2.msra.mxu0 0.0
    %435 = vmatprep.subr.mxu0 0.0
    %436 = vmatpush2.msra.mxu0 0.0
    %437 = vmatprep.subr.mxu0 0.0
    %438 = vmatpush2.msra.mxu0 0.0
    %439 = vmatprep.subr.mxu0 0.0
    %440 = vmatpush2.msra.mxu0 0.0
    %441 = vmatprep.mubr.f32.mxu0 0.0
    %442 = vmatmul.mubr.f32.gmra.mxu0 %v97
    %v443 = vpop.f32.mrf.mxu0
    %v444 = vadd.f32 %v255, %v443
    %v445 = vpop.f32.mrf.mxu0
    %v446 = vadd.f32 %v259, %v445
    %447 = vmatprep.mubr.f32.mxu0 0.0
    %448 = vmatmul.mubr.f32.gmra.mxu0 %v98
    %v449 = vpop.f32.mrf.mxu0
    %v450 = vadd.f32 %v255, %v449
    %v451 = vpop.f32.mrf.mxu0
    %v452 = vadd.f32 %v259, %v451
    %453 = vmatprep.mubr.f32.mxu0 0.0
    %454 = vmatmul.mubr.f32.gmra.mxu0 %v99
    %v455 = vpop.f32.mrf.mxu0
    %v456 = vadd.f32 %v255, %v455
    %v457 = vpop.f32.mrf.mxu0
    %v458 = vadd.f32 %v259, %v457
    %459 = vmatprep.mubr.f32.mxu0 0.0
    %460 = vmatmul.mubr.f32.gmra.mxu0 %v100
    %v461 = vpop.f32.mrf.mxu0
    %v462 = vadd.f32 %v255, %v461
    %v463 = vpop.f32.mrf.mxu0
    %v464 = vadd.f32 %v259, %v463
    %465 = vmatprep.mubr.f32.mxu0 0.0
    %466 = vmatmul.mubr.f32.gmra.mxu0 %v101
    %v467 = vpop.f32.mrf.mxu0
    %v468 = vadd.f32 %v255, %v467
    %v469 = vpop.f32.mrf.mxu0
    %v470 = vadd.f32 %v259, %v469
    %471 = vmatprep.mubr.f32.mxu0 0.0
    %472 = vmatmul.mubr.f32.gmra.mxu0 %v102
    %v473 = vpop.f32.mrf.mxu0
    %v474 = vadd.f32 %v255, %v473
    %v475 = vpop.f32.mrf.mxu0
    %v476 = vadd.f32 %v259, %v475
    %477 = vmatprep.mubr.f32.mxu0 0.0
    %478 = vmatmul.mubr.f32.gmra.mxu0 %v103
    %v479 = vpop.f32.mrf.mxu0
    %v480 = vadd.f32 %v255, %v479
    %v481 = vpop.f32.mrf.mxu0
    %v482 = vadd.f32 %v259, %v481
    %483 = vmatprep.mubr.f32.mxu0 0.0
    %484 = vmatmul.mubr.f32.gmra.mxu0 %v104
    %v485 = vpop.f32.mrf.mxu0
    %v486 = vadd.f32 %v255, %v485
    %v487 = vpop.f32.mrf.mxu0
    %v488 = vadd.f32 %v259, %v487
    %489 = vdwg.mxu0
    %490 = vst [vmem:[#allocation2] sm:$0xff] %v331
    %491 = vst [vmem:[#allocation2 + $0x8] sm:$0xff] %v333
    %492 = vst [vmem:[#allocation2 + $0x10] sm:$0xff] %v444
    %493 = vst [vmem:[#allocation2 + $0x18] sm:$0xff] %v446
    %494 = vst [vmem:[#allocation2 + $0x20] sm:$0xff] %v337
    %495 = vst [vmem:[#allocation2 + $0x28] sm:$0xff] %v339
    %496 = vst [vmem:[#allocation2 + $0x30] sm:$0xff] %v450
    %497 = vst [vmem:[#allocation2 + $0x38] sm:$0xff] %v452
    %498 = vst [vmem:[#allocation2 + $0x40] sm:$0xff] %v343
    %499 = vst [vmem:[#allocation2 + $0x48] sm:$0xff] %v345
    %500 = vst [vmem:[#allocation2 + $0x50] sm:$0xff] %v456
    %501 = vst [vmem:[#allocation2 + $0x58] sm:$0xff] %v458
    %502 = vst [vmem:[#allocation2 + $0x60] sm:$0xff] %v349
    %503 = vst [vmem:[#allocation2 + $0x68] sm:$0xff] %v351
    %504 = vst [vmem:[#allocation2 + $0x70] sm:$0xff] %v462
    %505 = vst [vmem:[#allocation2 + $0x78] sm:$0xff] %v464
    %506 = vst [vmem:[#allocation2 + $0x80] sm:$0xff] %v355
    %507 = vst [vmem:[#allocation2 + $0x88] sm:$0xff] %v357
    %508 = vst [vmem:[#allocation2 + $0x90] sm:$0xff] %v468
    %509 = vst [vmem:[#allocation2 + $0x98] sm:$0xff] %v470
    %510 = vst [vmem:[#allocation2 + $0xa0] sm:$0xff] %v361
    %511 = vst [vmem:[#allocation2 + $0xa8] sm:$0xff] %v363
    %512 = vst [vmem:[#allocation2 + $0xb0] sm:$0xff] %v474
    %513 = vst [vmem:[#allocation2 + $0xb8] sm:$0xff] %v476
    %514 = vst [vmem:[#allocation2 + $0xc0] sm:$0xff] %v367
    %515 = vst [vmem:[#allocation2 + $0xc8] sm:$0xff] %v369
    %516 = vst [vmem:[#allocation2 + $0xd0] sm:$0xff] %v480
    %517 = vst [vmem:[#allocation2 + $0xd8] sm:$0xff] %v482
    %518 = vst [vmem:[#allocation2 + $0xe0] sm:$0xff] %v373
    %519 = vst [vmem:[#allocation2 + $0xe8] sm:$0xff] %v375
    %520 = vst [vmem:[#allocation2 + $0xf0] sm:$0xff] %v486
    %521 = vst [vmem:[#allocation2 + $0xf8] sm:$0xff] %v488
    %s522 = scalar_lea.vmem %s5, 4
    %v523 = vld [vmem:[%s522] sm:$0xf]
    %v525 = vlaneseq
    %v526 = vshrl.u32 %v525, 7
    %v527 = vsub.s32 0, %v526
    %v528 = vrot.slane %v523, %v527
    %v529 = vlaneseq
    %v530 = vshrl.u32 %v529, 7
    %v531 = vsub.s32 1, %v530
    %v532 = vrot.slane %v523, %v531
    %v533 = vlaneseq
    %v534 = vshrl.u32 %v533, 7
    %v535 = vsub.s32 2, %v534
    %v536 = vrot.slane %v523, %v535
    %v537 = vlaneseq
    %v538 = vshrl.u32 %v537, 7
    %v539 = vsub.s32 3, %v538
    %v540 = vrot.slane %v523, %v539
    %545 = vmatprep.subr.mxu0 %v239
    %546 = vmatpush1.msra.mxu0 %v238
    %547 = vmatprep.subr.mxu0 %v235
    %548 = vmatpush1.msra.mxu0 %v234
    %549 = vmatprep.subr.mxu0 %v231
    %550 = vmatpush1.msra.mxu0 %v230
    %551 = vmatprep.subr.mxu0 %v227
    %552 = vmatpush1.msra.mxu0 %v226
    %553 = vmatprep.subr.mxu0 %v223
    %554 = vmatpush1.msra.mxu0 %v222
    %555 = vmatprep.subr.mxu0 %v219
    %556 = vmatpush1.msra.mxu0 %v218
    %557 = vmatprep.subr.mxu0 %v215
    %558 = vmatpush1.msra.mxu0 %v214
    %559 = vmatprep.subr.mxu0 %v211
    %560 = vmatpush1.msra.mxu0 %v210
    %561 = vmatprep.subr.mxu0 %v207
    %562 = vmatpush1.msra.mxu0 %v206
    %563 = vmatprep.subr.mxu0 %v203
    %564 = vmatpush1.msra.mxu0 %v202
    %565 = vmatprep.subr.mxu0 %v199
    %566 = vmatpush1.msra.mxu0 %v198
    %567 = vmatprep.subr.mxu0 %v195
    %568 = vmatpush1.msra.mxu0 %v194
    %569 = vmatprep.subr.mxu0 %v191
    %570 = vmatpush1.msra.mxu0 %v190
    %571 = vmatprep.subr.mxu0 %v187
    %572 = vmatpush1.msra.mxu0 %v186
    %573 = vmatprep.subr.mxu0 %v183
    %574 = vmatpush1.msra.mxu0 %v182
    %575 = vmatprep.subr.mxu0 %v179
    %576 = vmatpush1.msra.mxu0 %v178
    %577 = vmatprep.subr.mxu0 0.0
    %578 = vmatpush2.msra.mxu0 0.0
    %579 = vmatprep.subr.mxu0 0.0
    %580 = vmatpush2.msra.mxu0 0.0
    %581 = vmatprep.subr.mxu0 0.0
    %582 = vmatpush2.msra.mxu0 0.0
    %583 = vmatprep.subr.mxu0 0.0
    %584 = vmatpush2.msra.mxu0 0.0
    %585 = vmatprep.subr.mxu0 0.0
    %586 = vmatpush2.msra.mxu0 0.0
    %587 = vmatprep.subr.mxu0 0.0
    %588 = vmatpush2.msra.mxu0 0.0
    %589 = vmatprep.subr.mxu0 0.0
    %590 = vmatpush2.msra.mxu0 0.0
    %591 = vmatprep.subr.mxu0 0.0
    %592 = vmatpush2.msra.mxu0 0.0
    %593 = vmatprep.subr.mxu0 0.0
    %594 = vmatpush2.msra.mxu0 0.0
    %595 = vmatprep.subr.mxu0 0.0
    %596 = vmatpush2.msra.mxu0 0.0
    %597 = vmatprep.subr.mxu0 0.0
    %598 = vmatpush2.msra.mxu0 0.0
    %599 = vmatprep.subr.mxu0 0.0
    %600 = vmatpush2.msra.mxu0 0.0
    %601 = vmatprep.subr.mxu0 0.0
    %602 = vmatpush2.msra.mxu0 0.0
    %603 = vmatprep.subr.mxu0 0.0
    %604 = vmatpush2.msra.mxu0 0.0
    %605 = vmatprep.subr.mxu0 0.0
    %606 = vmatpush2.msra.mxu0 0.0
    %607 = vmatprep.subr.mxu0 0.0
    %608 = vmatpush2.msra.mxu0 0.0
    %609 = vmatprep.mubr.f32.mxu0 0.0
    %610 = vmatmul.mubr.f32.gmra.mxu0 %v169
    %v611 = vpop.f32.mrf.mxu0
    %v612 = vadd.f32 %v528, %v611
    %v613 = vpop.f32.mrf.mxu0
    %v614 = vadd.f32 %v532, %v613
    %615 = vmatprep.mubr.f32.mxu0 0.0
    %616 = vmatmul.mubr.f32.gmra.mxu0 %v170
    %v617 = vpop.f32.mrf.mxu0
    %v618 = vadd.f32 %v528, %v617
    %v619 = vpop.f32.mrf.mxu0
    %v620 = vadd.f32 %v532, %v619
    %621 = vmatprep.mubr.f32.mxu0 0.0
    %622 = vmatmul.mubr.f32.gmra.mxu0 %v171
    %v623 = vpop.f32.mrf.mxu0
    %v624 = vadd.f32 %v528, %v623
    %v625 = vpop.f32.mrf.mxu0
    %v626 = vadd.f32 %v532, %v625
    %627 = vmatprep.mubr.f32.mxu0 0.0
    %628 = vmatmul.mubr.f32.gmra.mxu0 %v172
    %v629 = vpop.f32.mrf.mxu0
    %v630 = vadd.f32 %v528, %v629
    %v631 = vpop.f32.mrf.mxu0
    %v632 = vadd.f32 %v532, %v631
    %633 = vmatprep.mubr.f32.mxu0 0.0
    %634 = vmatmul.mubr.f32.gmra.mxu0 %v173
    %v635 = vpop.f32.mrf.mxu0
    %v636 = vadd.f32 %v528, %v635
    %v637 = vpop.f32.mrf.mxu0
    %v638 = vadd.f32 %v532, %v637
    %639 = vmatprep.mubr.f32.mxu0 0.0
    %640 = vmatmul.mubr.f32.gmra.mxu0 %v174
    %v641 = vpop.f32.mrf.mxu0
    %v642 = vadd.f32 %v528, %v641
    %v643 = vpop.f32.mrf.mxu0
    %v644 = vadd.f32 %v532, %v643
    %645 = vmatprep.mubr.f32.mxu0 0.0
    %646 = vmatmul.mubr.f32.gmra.mxu0 %v175
    %v647 = vpop.f32.mrf.mxu0
    %v648 = vadd.f32 %v528, %v647
    %v649 = vpop.f32.mrf.mxu0
    %v650 = vadd.f32 %v532, %v649
    %651 = vmatprep.mubr.f32.mxu0 0.0
    %652 = vmatmul.mubr.f32.gmra.mxu0 %v176
    %v653 = vpop.f32.mrf.mxu0
    %v654 = vadd.f32 %v528, %v653
    %v655 = vpop.f32.mrf.mxu0
    %v656 = vadd.f32 %v532, %v655
    %657 = vdwg.mxu0
    %658 = vmatprep.subr.mxu0 %v241
    %659 = vmatpush1.msra.mxu0 %v240
    %660 = vmatprep.subr.mxu0 %v237
    %661 = vmatpush1.msra.mxu0 %v236
    %662 = vmatprep.subr.mxu0 %v233
    %663 = vmatpush1.msra.mxu0 %v232
    %664 = vmatprep.subr.mxu0 %v229
    %665 = vmatpush1.msra.mxu0 %v228
    %666 = vmatprep.subr.mxu0 %v225
    %667 = vmatpush1.msra.mxu0 %v224
    %668 = vmatprep.subr.mxu0 %v221
    %669 = vmatpush1.msra.mxu0 %v220
    %670 = vmatprep.subr.mxu0 %v217
    %671 = vmatpush1.msra.mxu0 %v216
    %672 = vmatprep.subr.mxu0 %v213
    %673 = vmatpush1.msra.mxu0 %v212
    %674 = vmatprep.subr.mxu0 %v209
    %675 = vmatpush1.msra.mxu0 %v208
    %676 = vmatprep.subr.mxu0 %v205
    %677 = vmatpush1.msra.mxu0 %v204
    %678 = vmatprep.subr.mxu0 %v201
    %679 = vmatpush1.msra.mxu0 %v200
    %680 = vmatprep.subr.mxu0 %v197
    %681 = vmatpush1.msra.mxu0 %v196
    %682 = vmatprep.subr.mxu0 %v193
    %683 = vmatpush1.msra.mxu0 %v192
    %684 = vmatprep.subr.mxu0 %v189
    %685 = vmatpush1.msra.mxu0 %v188
    %686 = vmatprep.subr.mxu0 %v185
    %687 = vmatpush1.msra.mxu0 %v184
    %688 = vmatprep.subr.mxu0 %v181
    %689 = vmatpush1.msra.mxu0 %v180
    %690 = vmatprep.subr.mxu0 0.0
    %691 = vmatpush2.msra.mxu0 0.0
    %692 = vmatprep.subr.mxu0 0.0
    %693 = vmatpush2.msra.mxu0 0.0
    %694 = vmatprep.subr.mxu0 0.0
    %695 = vmatpush2.msra.mxu0 0.0
    %696 = vmatprep.subr.mxu0 0.0
    %697 = vmatpush2.msra.mxu0 0.0
    %698 = vmatprep.subr.mxu0 0.0
    %699 = vmatpush2.msra.mxu0 0.0
    %700 = vmatprep.subr.mxu0 0.0
    %701 = vmatpush2.msra.mxu0 0.0
    %702 = vmatprep.subr.mxu0 0.0
    %703 = vmatpush2.msra.mxu0 0.0
    %704 = vmatprep.subr.mxu0 0.0
    %705 = vmatpush2.msra.mxu0 0.0
    %706 = vmatprep.subr.mxu0 0.0
    %707 = vmatpush2.msra.mxu0 0.0
    %708 = vmatprep.subr.mxu0 0.0
    %709 = vmatpush2.msra.mxu0 0.0
    %710 = vmatprep.subr.mxu0 0.0
    %711 = vmatpush2.msra.mxu0 0.0
    %712 = vmatprep.subr.mxu0 0.0
    %713 = vmatpush2.msra.mxu0 0.0
    %714 = vmatprep.subr.mxu0 0.0
    %715 = vmatpush2.msra.mxu0 0.0
    %716 = vmatprep.subr.mxu0 0.0
    %717 = vmatpush2.msra.mxu0 0.0
    %718 = vmatprep.subr.mxu0 0.0
    %719 = vmatpush2.msra.mxu0 0.0
    %720 = vmatprep.subr.mxu0 0.0
    %721 = vmatpush2.msra.mxu0 0.0
    %722 = vmatprep.mubr.f32.mxu0 0.0
    %723 = vmatmul.mubr.f32.gmra.mxu0 %v169
    %v724 = vpop.f32.mrf.mxu0
    %v725 = vadd.f32 %v536, %v724
    %v726 = vpop.f32.mrf.mxu0
    %v727 = vadd.f32 %v540, %v726
    %728 = vmatprep.mubr.f32.mxu0 0.0
    %729 = vmatmul.mubr.f32.gmra.mxu0 %v170
    %v730 = vpop.f32.mrf.mxu0
    %v731 = vadd.f32 %v536, %v730
    %v732 = vpop.f32.mrf.mxu0
    %v733 = vadd.f32 %v540, %v732
    %734 = vmatprep.mubr.f32.mxu0 0.0
    %735 = vmatmul.mubr.f32.gmra.mxu0 %v171
    %v736 = vpop.f32.mrf.mxu0
    %v737 = vadd.f32 %v536, %v736
    %v738 = vpop.f32.mrf.mxu0
    %v739 = vadd.f32 %v540, %v738
    %740 = vmatprep.mubr.f32.mxu0 0.0
    %741 = vmatmul.mubr.f32.gmra.mxu0 %v172
    %v742 = vpop.f32.mrf.mxu0
    %v743 = vadd.f32 %v536, %v742
    %v744 = vpop.f32.mrf.mxu0
    %v745 = vadd.f32 %v540, %v744
    %746 = vmatprep.mubr.f32.mxu0 0.0
    %747 = vmatmul.mubr.f32.gmra.mxu0 %v173
    %v748 = vpop.f32.mrf.mxu0
    %v749 = vadd.f32 %v536, %v748
    %v750 = vpop.f32.mrf.mxu0
    %v751 = vadd.f32 %v540, %v750
    %752 = vmatprep.mubr.f32.mxu0 0.0
    %753 = vmatmul.mubr.f32.gmra.mxu0 %v174
    %v754 = vpop.f32.mrf.mxu0
    %v755 = vadd.f32 %v536, %v754
    %v756 = vpop.f32.mrf.mxu0
    %v757 = vadd.f32 %v540, %v756
    %758 = vmatprep.mubr.f32.mxu0 0.0
    %759 = vmatmul.mubr.f32.gmra.mxu0 %v175
    %v760 = vpop.f32.mrf.mxu0
    %v761 = vadd.f32 %v536, %v760
    %v762 = vpop.f32.mrf.mxu0
    %v763 = vadd.f32 %v540, %v762
    %764 = vmatprep.mubr.f32.mxu0 0.0
    %765 = vmatmul.mubr.f32.gmra.mxu0 %v176
    %v766 = vpop.f32.mrf.mxu0
    %v767 = vadd.f32 %v536, %v766
    %v768 = vpop.f32.mrf.mxu0
    %v769 = vadd.f32 %v540, %v768
    %770 = vdwg.mxu0
    %771 = vst [vmem:[#allocation3] sm:$0xff] %v612
    %772 = vst [vmem:[#allocation3 + $0x8] sm:$0xff] %v614
    %773 = vst [vmem:[#allocation3 + $0x10] sm:$0xff] %v725
    %774 = vst [vmem:[#allocation3 + $0x18] sm:$0xff] %v727
    %775 = vst [vmem:[#allocation3 + $0x20] sm:$0xff] %v618
    %776 = vst [vmem:[#allocation3 + $0x28] sm:$0xff] %v620
    %777 = vst [vmem:[#allocation3 + $0x30] sm:$0xff] %v731
    %778 = vst [vmem:[#allocation3 + $0x38] sm:$0xff] %v733
    %779 = vst [vmem:[#allocation3 + $0x40] sm:$0xff] %v624
    %780 = vst [vmem:[#allocation3 + $0x48] sm:$0xff] %v626
    %781 = vst [vmem:[#allocation3 + $0x50] sm:$0xff] %v737
    %782 = vst [vmem:[#allocation3 + $0x58] sm:$0xff] %v739
    %783 = vst [vmem:[#allocation3 + $0x60] sm:$0xff] %v630
    %784 = vst [vmem:[#allocation3 + $0x68] sm:$0xff] %v632
    %785 = vst [vmem:[#allocation3 + $0x70] sm:$0xff] %v743
    %786 = vst [vmem:[#allocation3 + $0x78] sm:$0xff] %v745
    %787 = vst [vmem:[#allocation3 + $0x80] sm:$0xff] %v636
    %788 = vst [vmem:[#allocation3 + $0x88] sm:$0xff] %v638
    %789 = vst [vmem:[#allocation3 + $0x90] sm:$0xff] %v749
    %790 = vst [vmem:[#allocation3 + $0x98] sm:$0xff] %v751
    %791 = vst [vmem:[#allocation3 + $0xa0] sm:$0xff] %v642
    %792 = vst [vmem:[#allocation3 + $0xa8] sm:$0xff] %v644
    %793 = vst [vmem:[#allocation3 + $0xb0] sm:$0xff] %v755
    %794 = vst [vmem:[#allocation3 + $0xb8] sm:$0xff] %v757
    %795 = vst [vmem:[#allocation3 + $0xc0] sm:$0xff] %v648
    %796 = vst [vmem:[#allocation3 + $0xc8] sm:$0xff] %v650
    %797 = vst [vmem:[#allocation3 + $0xd0] sm:$0xff] %v761
    %798 = vst [vmem:[#allocation3 + $0xd8] sm:$0xff] %v763
    %799 = vst [vmem:[#allocation3 + $0xe0] sm:$0xff] %v654
    %800 = vst [vmem:[#allocation3 + $0xe8] sm:$0xff] %v656
    %801 = vst [vmem:[#allocation3 + $0xf0] sm:$0xff] %v767
    %802 = vst [vmem:[#allocation3 + $0xf8] sm:$0xff] %v769
    %v803 = vld [vmem:[%s0] sm:$0xff]
    %s804 = smul.u32 0, 8
    loop: start=0, step=1, limit=8
    $region38: #{_lambda_.2} parent=1 // loop_pre_header
      _
    $region39: #{_lambda_.2} parent=1 // loop_header
      %s806 = sphi 0, %s810
      %p807 = scmp.ge.s32.totalorder %s806, 8
    $region40: #{_lambda_.2} parent=1 // loop_header_branch
      %809 = sbr.rel (%p807) target = $region44
    $region41: #{_lambda_.2} parent=1 // loop_body
      %s811 = sadd.s32 %s804, %s806
      %s812 = smul.u32 %s806, 8
      %v813 = vld [vmem:[#allocation4] sm:$0xff]
      %s814 = sshra.s32 %s812, 3
      %s815 = sand.u32 %s812, 7
      %s816 = smul.u32 %s814, 4
      %s817 = smul.addr %s816, 8
      %s818 = scalar_lea.vmem [#allocation2], %s817
      %v819 = vld [vmem:[%s818] sm:$0xff]
      %v820 = vld [vmem:[%s818 + $0x8] sm:$0xff]
      %v821 = vld [vmem:[%s818 + $0x10] sm:$0xff]
      %v822 = vld [vmem:[%s818 + $0x18] sm:$0xff]
      %v823 = vld [vmem:[#allocation10] sm:$0xff]
      %v824 = vld [vmem:[#allocation10 + $0x8] sm:$0xff]
      %v825 = vld [vmem:[#allocation10 + $0x10] sm:$0xff]
      %v826 = vld [vmem:[#allocation10 + $0x18] sm:$0xff]
      %v827 = vld [vmem:[#allocation10 + $0x20] sm:$0xff]
      %v828 = vld [vmem:[#allocation10 + $0x28] sm:$0xff]
      %v829 = vld [vmem:[#allocation10 + $0x30] sm:$0xff]
      %v830 = vld [vmem:[#allocation10 + $0x38] sm:$0xff]
      %v831 = vld [vmem:[#allocation10 + $0x40] sm:$0xff]
      %v832 = vld [vmem:[#allocation10 + $0x48] sm:$0xff]
      %v833 = vld [vmem:[#allocation10 + $0x50] sm:$0xff]
      %v834 = vld [vmem:[#allocation10 + $0x58] sm:$0xff]
      %v835 = vld [vmem:[#allocation10 + $0x60] sm:$0xff]
      %v836 = vld [vmem:[#allocation10 + $0x68] sm:$0xff]
      %v837 = vld [vmem:[#allocation10 + $0x70] sm:$0xff]
      %v838 = vld [vmem:[#allocation10 + $0x78] sm:$0xff]
      %v839 = vld [vmem:[#allocation10 + $0x80] sm:$0xff]
      %v840 = vld [vmem:[#allocation10 + $0x88] sm:$0xff]
      %v841 = vld [vmem:[#allocation10 + $0x90] sm:$0xff]
      %v842 = vld [vmem:[#allocation10 + $0x98] sm:$0xff]
      %v843 = vld [vmem:[#allocation10 + $0xa0] sm:$0xff]
      %v844 = vld [vmem:[#allocation10 + $0xa8] sm:$0xff]
      %v845 = vld [vmem:[#allocation10 + $0xb0] sm:$0xff]
      %v846 = vld [vmem:[#allocation10 + $0xb8] sm:$0xff]
      %v847 = vld [vmem:[#allocation10 + $0xc0] sm:$0xff]
      %v848 = vld [vmem:[#allocation10 + $0xc8] sm:$0xff]
      %v849 = vld [vmem:[#allocation10 + $0xd0] sm:$0xff]
      %v850 = vld [vmem:[#allocation10 + $0xd8] sm:$0xff]
      %v851 = vld [vmem:[#allocation10 + $0xe0] sm:$0xff]
      %v852 = vld [vmem:[#allocation10 + $0xe8] sm:$0xff]
      %v853 = vld [vmem:[#allocation10 + $0xf0] sm:$0xff]
      %v854 = vld [vmem:[#allocation10 + $0xf8] sm:$0xff]
      %v855 = vld [vmem:[#allocation10 + $0x100] sm:$0xff]
      %v856 = vld [vmem:[#allocation10 + $0x108] sm:$0xff]
      %v857 = vld [vmem:[#allocation10 + $0x110] sm:$0xff]
      %v858 = vld [vmem:[#allocation10 + $0x118] sm:$0xff]
      %v859 = vld [vmem:[#allocation10 + $0x120] sm:$0xff]
      %v860 = vld [vmem:[#allocation10 + $0x128] sm:$0xff]
      %v861 = vld [vmem:[#allocation10 + $0x130] sm:$0xff]
      %v862 = vld [vmem:[#allocation10 + $0x138] sm:$0xff]
      %v863 = vld [vmem:[#allocation10 + $0x140] sm:$0xff]
      %v864 = vld [vmem:[#allocation10 + $0x148] sm:$0xff]
      %v865 = vld [vmem:[#allocation10 + $0x150] sm:$0xff]
      %v866 = vld [vmem:[#allocation10 + $0x158] sm:$0xff]
      %v867 = vld [vmem:[#allocation10 + $0x160] sm:$0xff]
      %v868 = vld [vmem:[#allocation10 + $0x168] sm:$0xff]
      %v869 = vld [vmem:[#allocation10 + $0x170] sm:$0xff]
      %v870 = vld [vmem:[#allocation10 + $0x178] sm:$0xff]
      %v871 = vld [vmem:[#allocation10 + $0x180] sm:$0xff]
      %v872 = vld [vmem:[#allocation10 + $0x188] sm:$0xff]
      %v873 = vld [vmem:[#allocation10 + $0x190] sm:$0xff]
      %v874 = vld [vmem:[#allocation10 + $0x198] sm:$0xff]
      %v875 = vld [vmem:[#allocation10 + $0x1a0] sm:$0xff]
      %v876 = vld [vmem:[#allocation10 + $0x1a8] sm:$0xff]
      %v877 = vld [vmem:[#allocation10 + $0x1b0] sm:$0xff]
      %v878 = vld [vmem:[#allocation10 + $0x1b8] sm:$0xff]
      %v879 = vld [vmem:[#allocation10 + $0x1c0] sm:$0xff]
      %v880 = vld [vmem:[#allocation10 + $0x1c8] sm:$0xff]
      %v881 = vld [vmem:[#allocation10 + $0x1d0] sm:$0xff]
      %v882 = vld [vmem:[#allocation10 + $0x1d8] sm:$0xff]
      %v883 = vld [vmem:[#allocation10 + $0x1e0] sm:$0xff]
      %v884 = vld [vmem:[#allocation10 + $0x1e8] sm:$0xff]
      %v885 = vld [vmem:[#allocation10 + $0x1f0] sm:$0xff]
      %v886 = vld [vmem:[#allocation10 + $0x1f8] sm:$0xff]
      %887 = vmatprep.subr.mxu0 %v884
      %888 = vmatpush1.msra.mxu0 %v883
      %889 = vmatprep.subr.mxu0 %v880
      %890 = vmatpush1.msra.mxu0 %v879
      %891 = vmatprep.subr.mxu0 %v876
      %892 = vmatpush1.msra.mxu0 %v875
      %893 = vmatprep.subr.mxu0 %v872
      %894 = vmatpush1.msra.mxu0 %v871
      %895 = vmatprep.subr.mxu0 %v868
      %896 = vmatpush1.msra.mxu0 %v867
      %897 = vmatprep.subr.mxu0 %v864
      %898 = vmatpush1.msra.mxu0 %v863
      %899 = vmatprep.subr.mxu0 %v860
      %900 = vmatpush1.msra.mxu0 %v859
      %901 = vmatprep.subr.mxu0 %v856
      %902 = vmatpush1.msra.mxu0 %v855
      %903 = vmatprep.subr.mxu0 %v852
      %904 = vmatpush1.msra.mxu0 %v851
      %905 = vmatprep.subr.mxu0 %v848
      %906 = vmatpush1.msra.mxu0 %v847
      %907 = vmatprep.subr.mxu0 %v844
      %908 = vmatpush1.msra.mxu0 %v843
      %909 = vmatprep.subr.mxu0 %v840
      %910 = vmatpush1.msra.mxu0 %v839
      %911 = vmatprep.subr.mxu0 %v836
      %912 = vmatpush1.msra.mxu0 %v835
      %913 = vmatprep.subr.mxu0 %v832
      %914 = vmatpush1.msra.mxu0 %v831
      %915 = vmatprep.subr.mxu0 %v828
      %916 = vmatpush1.msra.mxu0 %v827
      %917 = vmatprep.subr.mxu0 %v824
      %918 = vmatpush1.msra.mxu0 %v823
      %919 = vmatprep.subr.mxu0 0.0
      %920 = vmatpush2.msra.mxu0 0.0
      %921 = vmatprep.subr.mxu0 0.0
      %922 = vmatpush2.msra.mxu0 0.0
      %923 = vmatprep.subr.mxu0 0.0
      %924 = vmatpush2.msra.mxu0 0.0
      %925 = vmatprep.subr.mxu0 0.0
      %926 = vmatpush2.msra.mxu0 0.0
      %927 = vmatprep.subr.mxu0 0.0
      %928 = vmatpush2.msra.mxu0 0.0
      %929 = vmatprep.subr.mxu0 0.0
      %930 = vmatpush2.msra.mxu0 0.0
      %931 = vmatprep.subr.mxu0 0.0
      %932 = vmatpush2.msra.mxu0 0.0
      %933 = vmatprep.subr.mxu0 0.0
      %934 = vmatpush2.msra.mxu0 0.0
      %935 = vmatprep.subr.mxu0 0.0
      %936 = vmatpush2.msra.mxu0 0.0
      %937 = vmatprep.subr.mxu0 0.0
      %938 = vmatpush2.msra.mxu0 0.0
      %939 = vmatprep.subr.mxu0 0.0
      %940 = vmatpush2.msra.mxu0 0.0
      %941 = vmatprep.subr.mxu0 0.0
      %942 = vmatpush2.msra.mxu0 0.0
      %943 = vmatprep.subr.mxu0 0.0
      %944 = vmatpush2.msra.mxu0 0.0
      %945 = vmatprep.subr.mxu0 0.0
      %946 = vmatpush2.msra.mxu0 0.0
      %947 = vmatprep.subr.mxu0 0.0
      %948 = vmatpush2.msra.mxu0 0.0
      %949 = vmatprep.subr.mxu0 0.0
      %950 = vmatpush2.msra.mxu0 0.0
      %951 = vmatprep.mubr.f32.mxu0 0.0
      %952 = vmatmul.mubr.f32.gmra.mxu0 %v813
      %v953 = vpop.f32.mrf.mxu0
      %v954 = vadd.f32 0.0, %v953
      %v955 = vpop.f32.mrf.mxu0
      %v956 = vadd.f32 0.0, %v955
      %957 = vdwg.mxu0
      %958 = vmatprep.subr.mxu0 %v886
      %959 = vmatpush1.msra.mxu0 %v885
      %960 = vmatprep.subr.mxu0 %v882
      %961 = vmatpush1.msra.mxu0 %v881
      %962 = vmatprep.subr.mxu0 %v878
      %963 = vmatpush1.msra.mxu0 %v877
      %964 = vmatprep.subr.mxu0 %v874
      %965 = vmatpush1.msra.mxu0 %v873
      %966 = vmatprep.subr.mxu0 %v870
      %967 = vmatpush1.msra.mxu0 %v869
      %968 = vmatprep.subr.mxu0 %v866
      %969 = vmatpush1.msra.mxu0 %v865
      %970 = vmatprep.subr.mxu0 %v862
      %971 = vmatpush1.msra.mxu0 %v861
      %972 = vmatprep.subr.mxu0 %v858
      %973 = vmatpush1.msra.mxu0 %v857
      %974 = vmatprep.subr.mxu0 %v854
      %975 = vmatpush1.msra.mxu0 %v853
      %976 = vmatprep.subr.mxu0 %v850
      %977 = vmatpush1.msra.mxu0 %v849
      %978 = vmatprep.subr.mxu0 %v846
      %979 = vmatpush1.msra.mxu0 %v845
      %980 = vmatprep.subr.mxu0 %v842
      %981 = vmatpush1.msra.mxu0 %v841
      %982 = vmatprep.subr.mxu0 %v838
      %983 = vmatpush1.msra.mxu0 %v837
      %984 = vmatprep.subr.mxu0 %v834
      %985 = vmatpush1.msra.mxu0 %v833
      %986 = vmatprep.subr.mxu0 %v830
      %987 = vmatpush1.msra.mxu0 %v829
      %988 = vmatprep.subr.mxu0 %v826
      %989 = vmatpush1.msra.mxu0 %v825
      %990 = vmatprep.subr.mxu0 0.0
      %991 = vmatpush2.msra.mxu0 0.0
      %992 = vmatprep.subr.mxu0 0.0
      %993 = vmatpush2.msra.mxu0 0.0
      %994 = vmatprep.subr.mxu0 0.0
      %995 = vmatpush2.msra.mxu0 0.0
      %996 = vmatprep.subr.mxu0 0.0
      %997 = vmatpush2.msra.mxu0 0.0
      %998 = vmatprep.subr.mxu0 0.0
      %999 = vmatpush2.msra.mxu0 0.0
      %1000 = vmatprep.subr.mxu0 0.0
      %1001 = vmatpush2.msra.mxu0 0.0
      %1002 = vmatprep.subr.mxu0 0.0
      %1003 = vmatpush2.msra.mxu0 0.0
      %1004 = vmatprep.subr.mxu0 0.0
      %1005 = vmatpush2.msra.mxu0 0.0
      %1006 = vmatprep.subr.mxu0 0.0
      %1007 = vmatpush2.msra.mxu0 0.0
      %1008 = vmatprep.subr.mxu0 0.0
      %1009 = vmatpush2.msra.mxu0 0.0
      %1010 = vmatprep.subr.mxu0 0.0
      %1011 = vmatpush2.msra.mxu0 0.0
      %1012 = vmatprep.subr.mxu0 0.0
      %1013 = vmatpush2.msra.mxu0 0.0
      %1014 = vmatprep.subr.mxu0 0.0
      %1015 = vmatpush2.msra.mxu0 0.0
      %1016 = vmatprep.subr.mxu0 0.0
      %1017 = vmatpush2.msra.mxu0 0.0
      %1018 = vmatprep.subr.mxu0 0.0
      %1019 = vmatpush2.msra.mxu0 0.0
      %1020 = vmatprep.subr.mxu0 0.0
      %1021 = vmatpush2.msra.mxu0 0.0
      %1022 = vmatprep.mubr.f32.mxu0 0.0
      %1023 = vmatmul.mubr.f32.gmra.mxu0 %v813
      %v1024 = vpop.f32.mrf.mxu0
      %v1025 = vadd.f32 0.0, %v1024
      %v1026 = vpop.f32.mrf.mxu0
      %v1027 = vadd.f32 0.0, %v1026
      %1028 = vdwg.mxu0
      %v1029 = vadd.f32 %v819, %v954
      %v1030 = vadd.f32 %v820, %v956
      %v1031 = vadd.f32 %v821, %v1025
      %v1032 = vadd.f32 %v822, %v1027
      %v1033 = vxor.u32 %v1029, 2147483648
      %v1034 = vmul.f32 %v1033, 1.442695
      %v1035 = vpow.pop %v1034
      %v1036 = vadd.f32 %v1035, 1.0
      %v1037 = vrcp.pop %v1036
      %v1038 = vmul.f32 1.0, %v1037
      %v1039 = vxor.u32 %v1030, 2147483648
      %v1040 = vmul.f32 %v1039, 1.442695
      %v1041 = vpow.pop %v1040
      %v1042 = vadd.f32 %v1041, 1.0
      %v1043 = vrcp.pop %v1042
      %v1044 = vmul.f32 1.0, %v1043
      %v1045 = vtanh.pop %v1031
      %v1046 = vxor.u32 %v1032, 2147483648
      %v1047 = vmul.f32 %v1046, 1.442695
      %v1048 = vpow.pop %v1047
      %v1049 = vadd.f32 %v1048, 1.0
      %v1050 = vrcp.pop %v1049
      %v1051 = vmul.f32 1.0, %v1050
      %v1052 = vld [vmem:[#allocation5] sm:$0xff]
      %v1053 = vmul.f32 %v1044, %v1052
      %v1054 = vmul.f32 %v1038, %v1045
      %v1055 = vadd.f32 %v1053, %v1054
      %v1056 = vtanh.pop %v1055
      %v1057 = vmul.f32 %v1051, %v1056
      %v1058 = vstv %s811
      %vm1059 = vcmp.lt.s32.totalorder %v1058, %v803
      %v1060 = vsel %vm1059, 1, 0
      %1061 = vset.pattern.permute.xlu0 0
      %1062 = vperm.xlu0 %1061, %v1060
      %v1063 = vpop.permute.xlu0 %1062
      %vm1064 = vcmp.eq.s32.totalorder %v1063, 1
      %v1065 = vsel %vm1064, %v1057, %v813
      %1066 = vst [vmem:[#allocation4] sm:$0xff] %v1065
      %v1067 = vld [vmem:[#allocation5] sm:$0xff]
      %v1068 = vsel %vm1064, %v1055, %v1067
      %1069 = vst [vmem:[#allocation5] sm:$0xff] %v1068
      %v1070 = vsel %vm1064, %v1057, 0.0
      %s1071 = scalar_lea.vmem %s6, %s812
      %1072 = vst [vmem:[%s1071] sm:$0xff] %v1070
      %s1073 = ssub.s32 7, %s811
      %s1074 = ssub.s32 7, %s806
      %s1075 = smul.u32 %s1074, 8
      %v1076 = vld [vmem:[#allocation6] sm:$0xff]
      %s1077 = sshra.s32 %s1075, 3
      %s1078 = sand.u32 %s1075, 7
      %s1079 = smul.u32 %s1077, 4
      %s1080 = smul.addr %s1079, 8
      %s1081 = scalar_lea.vmem [#allocation3], %s1080
      %v1082 = vld [vmem:[%s1081] sm:$0xff]
      %v1083 = vld [vmem:[%s1081 + $0x8] sm:$0xff]
      %v1084 = vld [vmem:[%s1081 + $0x10] sm:$0xff]
      %v1085 = vld [vmem:[%s1081 + $0x18] sm:$0xff]
      %s1086 = scalar_lea.vmem [#allocation10], 512
      %v1087 = vld [vmem:[%s1086] sm:$0xff]
      %v1088 = vld [vmem:[%s1086 + $0x8] sm:$0xff]
      %v1089 = vld [vmem:[%s1086 + $0x10] sm:$0xff]
      %v1090 = vld [vmem:[%s1086 + $0x18] sm:$0xff]
      %v1091 = vld [vmem:[%s1086 + $0x20] sm:$0xff]
      %v1092 = vld [vmem:[%s1086 + $0x28] sm:$0xff]
      %v1093 = vld [vmem:[%s1086 + $0x30] sm:$0xff]
      %v1094 = vld [vmem:[%s1086 + $0x38] sm:$0xff]
      %v1095 = vld [vmem:[%s1086 + $0x40] sm:$0xff]
      %v1096 = vld [vmem:[%s1086 + $0x48] sm:$0xff]
      %v1097 = vld [vmem:[%s1086 + $0x50] sm:$0xff]
      %v1098 = vld [vmem:[%s1086 + $0x58] sm:$0xff]
      %v1099 = vld [vmem:[%s1086 + $0x60] sm:$0xff]
      %v1100 = vld [vmem:[%s1086 + $0x68] sm:$0xff]
      %v1101 = vld [vmem:[%s1086 + $0x70] sm:$0xff]
      %v1102 = vld [vmem:[%s1086 + $0x78] sm:$0xff]
      %v1103 = vld [vmem:[%s1086 + $0x80] sm:$0xff]
      %v1104 = vld [vmem:[%s1086 + $0x88] sm:$0xff]
      %v1105 = vld [vmem:[%s1086 + $0x90] sm:$0xff]
      %v1106 = vld [vmem:[%s1086 + $0x98] sm:$0xff]
      %v1107 = vld [vmem:[%s1086 + $0xa0] sm:$0xff]
      %v1108 = vld [vmem:[%s1086 + $0xa8] sm:$0xff]
      %v1109 = vld [vmem:[%s1086 + $0xb0] sm:$0xff]
      %v1110 = vld [vmem:[%s1086 + $0xb8] sm:$0xff]
      %v1111 = vld [vmem:[%s1086 + $0xc0] sm:$0xff]
      %v1112 = vld [vmem:[%s1086 + $0xc8] sm:$0xff]
      %v1113 = vld [vmem:[%s1086 + $0xd0] sm:$0xff]
      %v1114 = vld [vmem:[%s1086 + $0xd8] sm:$0xff]
      %v1115 = vld [vmem:[%s1086 + $0xe0] sm:$0xff]
      %v1116 = vld [vmem:[%s1086 + $0xe8] sm:$0xff]
      %v1117 = vld [vmem:[%s1086 + $0xf0] sm:$0xff]
      %v1118 = vld [vmem:[%s1086 + $0xf8] sm:$0xff]
      %v1119 = vld [vmem:[%s1086 + $0x100] sm:$0xff]
      %v1120 = vld [vmem:[%s1086 + $0x108] sm:$0xff]
      %v1121 = vld [vmem:[%s1086 + $0x110] sm:$0xff]
      %v1122 = vld [vmem:[%s1086 + $0x118] sm:$0xff]
      %v1123 = vld [vmem:[%s1086 + $0x120] sm:$0xff]
      %v1124 = vld [vmem:[%s1086 + $0x128] sm:$0xff]
      %v1125 = vld [vmem:[%s1086 + $0x130] sm:$0xff]
      %v1126 = vld [vmem:[%s1086 + $0x138] sm:$0xff]
      %v1127 = vld [vmem:[%s1086 + $0x140] sm:$0xff]
      %v1128 = vld [vmem:[%s1086 + $0x148] sm:$0xff]
      %v1129 = vld [vmem:[%s1086 + $0x150] sm:$0xff]
      %v1130 = vld [vmem:[%s1086 + $0x158] sm:$0xff]
      %v1131 = vld [vmem:[%s1086 + $0x160] sm:$0xff]
      %v1132 = vld [vmem:[%s1086 + $0x168] sm:$0xff]
      %v1133 = vld [vmem:[%s1086 + $0x170] sm:$0xff]
      %v1134 = vld [vmem:[%s1086 + $0x178] sm:$0xff]
      %v1135 = vld [vmem:[%s1086 + $0x180] sm:$0xff]
      %v1136 = vld [vmem:[%s1086 + $0x188] sm:$0xff]
      %v1137 = vld [vmem:[%s1086 + $0x190] sm:$0xff]
      %v1138 = vld [vmem:[%s1086 + $0x198] sm:$0xff]
      %v1139 = vld [vmem:[%s1086 + $0x1a0] sm:$0xff]
      %v1140 = vld [vmem:[%s1086 + $0x1a8] sm:$0xff]
      %v1141 = vld [vmem:[%s1086 + $0x1b0] sm:$0xff]
      %v1142 = vld [vmem:[%s1086 + $0x1b8] sm:$0xff]
      %v1143 = vld [vmem:[%s1086 + $0x1c0] sm:$0xff]
      %v1144 = vld [vmem:[%s1086 + $0x1c8] sm:$0xff]
      %v1145 = vld [vmem:[%s1086 + $0x1d0] sm:$0xff]
      %v1146 = vld [vmem:[%s1086 + $0x1d8] sm:$0xff]
      %v1147 = vld [vmem:[%s1086 + $0x1e0] sm:$0xff]
      %v1148 = vld [vmem:[%s1086 + $0x1e8] sm:$0xff]
      %v1149 = vld [vmem:[%s1086 + $0x1f0] sm:$0xff]
      %v1150 = vld [vmem:[%s1086 + $0x1f8] sm:$0xff]
      %1151 = vmatprep.subr.mxu0 %v1148
      %1152 = vmatpush1.msra.mxu0 %v1147
      %1153 = vmatprep.subr.mxu0 %v1144
      %1154 = vmatpush1.msra.mxu0 %v1143
      %1155 = vmatprep.subr.mxu0 %v1140
      %1156 = vmatpush1.msra.mxu0 %v1139
      %1157 = vmatprep.subr.mxu0 %v1136
      %1158 = vmatpush1.msra.mxu0 %v1135
      %1159 = vmatprep.subr.mxu0 %v1132
      %1160 = vmatpush1.msra.mxu0 %v1131
      %1161 = vmatprep.subr.mxu0 %v1128
      %1162 = vmatpush1.msra.mxu0 %v1127
      %1163 = vmatprep.subr.mxu0 %v1124
      %1164 = vmatpush1.msra.mxu0 %v1123
      %1165 = vmatprep.subr.mxu0 %v1120
      %1166 = vmatpush1.msra.mxu0 %v1119
      %1167 = vmatprep.subr.mxu0 %v1116
      %1168 = vmatpush1.msra.mxu0 %v1115
      %1169 = vmatprep.subr.mxu0 %v1112
      %1170 = vmatpush1.msra.mxu0 %v1111
      %1171 = vmatprep.subr.mxu0 %v1108
      %1172 = vmatpush1.msra.mxu0 %v1107
      %1173 = vmatprep.subr.mxu0 %v1104
      %1174 = vmatpush1.msra.mxu0 %v1103
      %1175 = vmatprep.subr.mxu0 %v1100
      %1176 = vmatpush1.msra.mxu0 %v1099
      %1177 = vmatprep.subr.mxu0 %v1096
      %1178 = vmatpush1.msra.mxu0 %v1095
      %1179 = vmatprep.subr.mxu0 %v1092
      %1180 = vmatpush1.msra.mxu0 %v1091
      %1181 = vmatprep.subr.mxu0 %v1088
      %1182 = vmatpush1.msra.mxu0 %v1087
      %1183 = vmatprep.subr.mxu0 0.0
      %1184 = vmatpush2.msra.mxu0 0.0
      %1185 = vmatprep.subr.mxu0 0.0
      %1186 = vmatpush2.msra.mxu0 0.0
      %1187 = vmatprep.subr.mxu0 0.0
      %1188 = vmatpush2.msra.mxu0 0.0
      %1189 = vmatprep.subr.mxu0 0.0
      %1190 = vmatpush2.msra.mxu0 0.0
      %1191 = vmatprep.subr.mxu0 0.0
      %1192 = vmatpush2.msra.mxu0 0.0
      %1193 = vmatprep.subr.mxu0 0.0
      %1194 = vmatpush2.msra.mxu0 0.0
      %1195 = vmatprep.subr.mxu0 0.0
      %1196 = vmatpush2.msra.mxu0 0.0
      %1197 = vmatprep.subr.mxu0 0.0
      %1198 = vmatpush2.msra.mxu0 0.0
      %1199 = vmatprep.subr.mxu0 0.0
      %1200 = vmatpush2.msra.mxu0 0.0
      %1201 = vmatprep.subr.mxu0 0.0
      %1202 = vmatpush2.msra.mxu0 0.0
      %1203 = vmatprep.subr.mxu0 0.0
      %1204 = vmatpush2.msra.mxu0 0.0
      %1205 = vmatprep.subr.mxu0 0.0
      %1206 = vmatpush2.msra.mxu0 0.0
      %1207 = vmatprep.subr.mxu0 0.0
      %1208 = vmatpush2.msra.mxu0 0.0
      %1209 = vmatprep.subr.mxu0 0.0
      %1210 = vmatpush2.msra.mxu0 0.0
      %1211 = vmatprep.subr.mxu0 0.0
      %1212 = vmatpush2.msra.mxu0 0.0
      %1213 = vmatprep.subr.mxu0 0.0
      %1214 = vmatpush2.msra.mxu0 0.0
      %1215 = vmatprep.mubr.f32.mxu0 0.0
      %1216 = vmatmul.mubr.f32.gmra.mxu0 %v1076
      %v1217 = vpop.f32.mrf.mxu0
      %v1218 = vadd.f32 0.0, %v1217
      %v1219 = vpop.f32.mrf.mxu0
      %v1220 = vadd.f32 0.0, %v1219
      %1221 = vdwg.mxu0
      %1222 = vmatprep.subr.mxu0 %v1150
      %1223 = vmatpush1.msra.mxu0 %v1149
      %1224 = vmatprep.subr.mxu0 %v1146
      %1225 = vmatpush1.msra.mxu0 %v1145
      %1226 = vmatprep.subr.mxu0 %v1142
      %1227 = vmatpush1.msra.mxu0 %v1141
      %1228 = vmatprep.subr.mxu0 %v1138
      %1229 = vmatpush1.msra.mxu0 %v1137
      %1230 = vmatprep.subr.mxu0 %v1134
      %1231 = vmatpush1.msra.mxu0 %v1133
      %1232 = vmatprep.subr.mxu0 %v1130
      %1233 = vmatpush1.msra.mxu0 %v1129
      %1234 = vmatprep.subr.mxu0 %v1126
      %1235 = vmatpush1.msra.mxu0 %v1125
      %1236 = vmatprep.subr.mxu0 %v1122
      %1237 = vmatpush1.msra.mxu0 %v1121
      %1238 = vmatprep.subr.mxu0 %v1118
      %1239 = vmatpush1.msra.mxu0 %v1117
      %1240 = vmatprep.subr.mxu0 %v1114
      %1241 = vmatpush1.msra.mxu0 %v1113
      %1242 = vmatprep.subr.mxu0 %v1110
      %1243 = vmatpush1.msra.mxu0 %v1109
      %1244 = vmatprep.subr.mxu0 %v1106
      %1245 = vmatpush1.msra.mxu0 %v1105
      %1246 = vmatprep.subr.mxu0 %v1102
      %1247 = vmatpush1.msra.mxu0 %v1101
      %1248 = vmatprep.subr.mxu0 %v1098
      %1249 = vmatpush1.msra.mxu0 %v1097
      %1250 = vmatprep.subr.mxu0 %v1094
      %1251 = vmatpush1.msra.mxu0 %v1093
      %1252 = vmatprep.subr.mxu0 %v1090
      %1253 = vmatpush1.msra.mxu0 %v1089
      %1254 = vmatprep.subr.mxu0 0.0
      %1255 = vmatpush2.msra.mxu0 0.0
      %1256 = vmatprep.subr.mxu0 0.0
      %1257 = vmatpush2.msra.mxu0 0.0
      %1258 = vmatprep.subr.mxu0 0.0
      %1259 = vmatpush2.msra.mxu0 0.0
      %1260 = vmatprep.subr.mxu0 0.0
      %1261 = vmatpush2.msra.mxu0 0.0
      %1262 = vmatprep.subr.mxu0 0.0
      %1263 = vmatpush2.msra.mxu0 0.0
      %1264 = vmatprep.subr.mxu0 0.0
      %1265 = vmatpush2.msra.mxu0 0.0
      %1266 = vmatprep.subr.mxu0 0.0
      %1267 = vmatpush2.msra.mxu0 0.0
      %1268 = vmatprep.subr.mxu0 0.0
      %1269 = vmatpush2.msra.mxu0 0.0
      %1270 = vmatprep.subr.mxu0 0.0
      %1271 = vmatpush2.msra.mxu0 0.0
      %1272 = vmatprep.subr.mxu0 0.0
      %1273 = vmatpush2.msra.mxu0 0.0
      %1274 = vmatprep.subr.mxu0 0.0
      %1275 = vmatpush2.msra.mxu0 0.0
      %1276 = vmatprep.subr.mxu0 0.0
      %1277 = vmatpush2.msra.mxu0 0.0
      %1278 = vmatprep.subr.mxu0 0.0
      %1279 = vmatpush2.msra.mxu0 0.0
      %1280 = vmatprep.subr.mxu0 0.0
      %1281 = vmatpush2.msra.mxu0 0.0
      %1282 = vmatprep.subr.mxu0 0.0
      %1283 = vmatpush2.msra.mxu0 0.0
      %1284 = vmatprep.subr.mxu0 0.0
      %1285 = vmatpush2.msra.mxu0 0.0
      %1286 = vmatprep.mubr.f32.mxu0 0.0
      %1287 = vmatmul.mubr.f32.gmra.mxu0 %v1076
      %v1288 = vpop.f32.mrf.mxu0
      %v1289 = vadd.f32 0.0, %v1288
      %v1290 = vpop.f32.mrf.mxu0
      %v1291 = vadd.f32 0.0, %v1290
      %1292 = vdwg.mxu0
      %v1293 = vadd.f32 %v1082, %v1218
      %v1294 = vadd.f32 %v1083, %v1220
      %v1295 = vadd.f32 %v1084, %v1289
      %v1296 = vadd.f32 %v1085, %v1291
      %v1297 = vxor.u32 %v1293, 2147483648
      %v1298 = vmul.f32 %v1297, 1.442695
      %v1299 = vpow.pop %v1298
      %v1300 = vadd.f32 %v1299, 1.0
      %v1301 = vrcp.pop %v1300
      %v1302 = vmul.f32 1.0, %v1301
      %v1303 = vxor.u32 %v1294, 2147483648
      %v1304 = vmul.f32 %v1303, 1.442695
      %v1305 = vpow.pop %v1304
      %v1306 = vadd.f32 %v1305, 1.0
      %v1307 = vrcp.pop %v1306
      %v1308 = vmul.f32 1.0, %v1307
      %v1309 = vtanh.pop %v1295
      %v1310 = vxor.u32 %v1296, 2147483648
      %v1311 = vmul.f32 %v1310, 1.442695
      %v1312 = vpow.pop %v1311
      %v1313 = vadd.f32 %v1312, 1.0
      %v1314 = vrcp.pop %v1313
      %v1315 = vmul.f32 1.0, %v1314
      %v1316 = vld [vmem:[#allocation7] sm:$0xff]
      %v1317 = vmul.f32 %v1308, %v1316
      %v1318 = vmul.f32 %v1302, %v1309
      %v1319 = vadd.f32 %v1317, %v1318
      %v1320 = vtanh.pop %v1319
      %v1321 = vmul.f32 %v1315, %v1320
      %v1322 = vstv %s1073
      %vm1323 = vcmp.lt.s32.totalorder %v1322, %v803
      %v1324 = vsel %vm1323, 1, 0
      %1325 = vset.pattern.permute.xlu0 0
      %1326 = vperm.xlu0 %1325, %v1324
      %v1327 = vpop.permute.xlu0 %1326
      %vm1328 = vcmp.eq.s32.totalorder %v1327, 1
      %v1329 = vsel %vm1328, %v1321, %v1076
      %1330 = vst [vmem:[#allocation6] sm:$0xff] %v1329
      %v1331 = vld [vmem:[#allocation7] sm:$0xff]
      %v1332 = vsel %vm1328, %v1319, %v1331
      %1333 = vst [vmem:[#allocation7] sm:$0xff] %v1332
      %v1334 = vsel %vm1328, %v1321, 0.0
      %s1335 = scalar_lea.vmem %s86, %s1075
      %1336 = vst [vmem:[%s1335] sm:$0xff] %v1334
    $region42: #{_lambda_.2} parent=1 // loop_footer
      %s810 = sadd.s32 1, %s806
    $region43: #{_lambda_.2} parent=1 // loop_footer_branch
      %805 = sbr.rel target = $region39
    $region44: #{_lambda_.2} parent=1 // loop_exit
      _
    %s1337 = ssub.s32 0, 0
    %s1338 = smul.u32 8, %s1337
    %p1339 = scmp.lt.s32.totalorder %s1338, 7
    %s1340 = scalar_select %p1339, %s1338, 7
    %s1341 = smul.addr %s1340, 8
    %s1342 = scalar_lea.vmem %s7, %s1341
    // Predicated region
    $region45: #{_lambda_.2} parent=1 // pred_check
      _
    $region46: #{_lambda_.2} parent=1 // pred_check_branch
      %1344 = sbr.rel (0) target = $region48
    $region47: #{_lambda_.2} parent=1 // pred_region
      _
    $region48: #{_lambda_.2} parent=1 // pred_fallthru
      _
    // Predicated region
    $region49: #{_lambda_.2} parent=1 // pred_check
      _
    $region50: #{_lambda_.2} parent=1 // pred_check_branch
      %1346 = sbr.rel (0) target = $region52
    $region51: #{_lambda_.2} parent=1 // pred_region
      %s1347 = ssub.s32 0, 0
      %s1348 = smul.u32 8, %s1347
    $region52: #{_lambda_.2} parent=1 // pred_fallthru
      _
    // Predicated region
    $region53: #{_lambda_.2} parent=1 // pred_check
      _
    $region54: #{_lambda_.2} parent=1 // pred_check_branch
      %1350 = sbr.rel (0) target = $region56
    $region55: #{_lambda_.2} parent=1 // pred_region
      _
    $region56: #{_lambda_.2} parent=1 // pred_fallthru
      _
    // Predicated region
    $region57: #{_lambda_.2} parent=1 // pred_check
      _
    $region58: #{_lambda_.2} parent=1 // pred_check_branch
      %1352 = sbr.rel (0) target = $region60
    $region59: #{_lambda_.2} parent=1 // pred_region
      %s1353 = ssub.s32 0, 0
      %s1354 = smul.u32 8, %s1353
      %p1355 = scmp.lt.s32.totalorder %s1354, 7
      %s1356 = scalar_select %p1355, %s1354, 7
      %s1357 = smul.addr %s1356, 8
      %s1358 = scalar_lea.vmem %s7, %s1357
    $region60: #{_lambda_.2} parent=1 // pred_fallthru
      _
    %1359 = vsyncpa [#allocation9], 1
    %1360 = vsyncpa [#allocation11], 1

// kernel: _lambda_.3
$region0: #{_lambda_.3}
  #allocation0 [shape = 'u32[]', space=smem, size = 0x4, offset = 0x4, fixed_abs, tag = 'smem constant byte address 0x4 - core index']
  #allocation1 [shape = 'u32[144,128]{1,0:T(1,128)}', space=vmem, size = 0x12000, scoped, tag = 'internal scratch']
  #allocation2 [shape = 'f32[64,512]{1,0:T(8,128)}', space=vmem, size = 0x20000, scoped, tag = 'scratch operand']
  #allocation3 [shape = 'f32[64,512]{1,0:T(8,128)}', space=vmem, size = 0x20000, scoped, tag = 'scratch operand']
  #allocation4 [shape = 'f32[8,128]{1,0:T(8,128)}', space=vmem, size = 0x1000, scoped, tag = 'scratch operand']
  #allocation5 [shape = 'f32[8,128]{1,0:T(8,128)}', space=vmem, size = 0x1000, scoped, tag = 'scratch operand']
  #allocation6 [shape = 'f32[8,128]{1,0:T(8,128)}', space=vmem, size = 0x1000, scoped, tag = 'scratch operand']
  #allocation7 [shape = 'f32[8,128]{1,0:T(8,128)}', space=vmem, size = 0x1000, scoped, tag = 'scratch operand']
  %s0 = inlined_call_operand.vmem [shape: s32[8,1], index: 0, kind: input, shape index: {}]
  %s1 = inlined_call_operand.vmem [shape: f32[64,128], index: 1, kind: input, shape index: {}, may-alias: {1,3}]
  %s2 = inlined_call_operand.vmem [shape: f32[64,128], index: 2, kind: input, shape index: {}, may-alias: {2,4}]
  %s3 = inlined_call_operand.vmem [shape: f32[64,128], index: 3, kind: input, shape index: {}, may-alias: {1,3}]
  %s4 = inlined_call_operand.vmem [shape: f32[64,128], index: 4, kind: input, shape index: {}, may-alias: {2,4}]
  %s5 = inlined_call_operand.hbm [shape: f32[2,128,512], index: 5, kind: input, shape index: {}]
  %s6 = inlined_call_operand.vmem [shape: f32[2,128,512], index: 6, kind: input, shape index: {}]
  %s7 = inlined_call_operand.vmem [shape: f32[2,128,512], index: 7, kind: input, shape index: {}]
  %s8 = inlined_call_operand.vmem [shape: f32[2,1,512], index: 8, kind: input, shape index: {}]
  %s9 = inlined_call_operand.vmem [shape: f32[2,128,128], index: 9, kind: input, shape index: {}]
  %s10 = inlined_call_operand.vmem [shape: f32[1,128], index: 10, kind: input, shape index: {}]
  %s11 = inlined_call_operand.vmem [shape: f32[8,128], index: 11, kind: output, shape index: {}]
  %s12 = sld [smem:[#allocation0]]
  $region73: #{_lambda_.3} parent=0
    _
  %s14 = ssub.s32 1, %s12
  %s15 = scalar_select 0, %s14, %s12
  $region1: #{_lambda_.3} parent=0
    #allocation8 [shape = 'u8[524288]{0}', space=vmem, size = 0x80000, scoped, tag = 'input window, operand 5, single buffered']
    #allocation9 [shape = 's32[1]{0}', space=sflag, size = 0x4, scoped, tag = 'scoped memory for _lambda_.3']
    %16 = vsyncpa [#allocation9], 0
    // Predicated region
    $region2: #{_lambda_.3} parent=1 // pred_check
      _
    $region3: #{_lambda_.3} parent=1 // pred_check_branch
      %18 = sbr.rel (0) target = $region5
    $region4: #{_lambda_.3} parent=1 // pred_region
      _
    $region5: #{_lambda_.3} parent=1 // pred_fallthru
      _
    // Predicated region
    $region6: #{_lambda_.3} parent=1 // pred_check
      _
    $region7: #{_lambda_.3} parent=1 // pred_check_branch
      %20 = sbr.rel (0) target = $region9
    $region8: #{_lambda_.3} parent=1 // pred_region
      _
    $region9: #{_lambda_.3} parent=1 // pred_fallthru
      _
    // Predicated region
    $region10: #{_lambda_.3} parent=1 // pred_check
      _
    $region11: #{_lambda_.3} parent=1 // pred_check_branch
      %22 = sbr.rel (0) target = $region13
    $region12: #{_lambda_.3} parent=1 // pred_region
      _
    $region13: #{_lambda_.3} parent=1 // pred_fallthru
      _
    // Predicated region
    $region14: #{_lambda_.3} parent=1 // pred_check
      _
    $region15: #{_lambda_.3} parent=1 // pred_check_branch
      %24 = sbr.rel (0) target = $region17
    $region16: #{_lambda_.3} parent=1 // pred_region
      %s25 = ssub.s32 0, 0
      %s26 = smul.u32 8, %s25
      %p27 = scmp.lt.s32.totalorder %s26, 7
      %s28 = scalar_select %p27, %s26, 7
      %s29 = smul.addr %s28, 8
      %s30 = scalar_lea.vmem %s3, %s29
      %s31 = ssub.s32 0, 0
      %s32 = smul.u32 8, %s31
    $region17: #{_lambda_.3} parent=1 // pred_fallthru
      _
    // Predicated region
    $region18: #{_lambda_.3} parent=1 // pred_check
      _
    $region19: #{_lambda_.3} parent=1 // pred_check_branch
      %34 = sbr.rel (0) target = $region21
    $region20: #{_lambda_.3} parent=1 // pred_region
      %s35 = ssub.s32 0, 0
      %s36 = smul.u32 8, %s35
      %p37 = scmp.lt.s32.totalorder %s36, 7
      %s38 = scalar_select %p37, %s36, 7
      %s39 = smul.addr %s38, 8
      %s40 = scalar_lea.vmem %s4, %s39
      %s41 = ssub.s32 0, 0
      %s42 = smul.u32 8, %s41
    $region21: #{_lambda_.3} parent=1 // pred_fallthru
      _
    // Predicated region
    $region22: #{_lambda_.3} parent=1 // pred_check
      _
    $region23: #{_lambda_.3} parent=1 // pred_check_branch
      %44 = sbr.rel (0) target = $region25
    $region24: #{_lambda_.3} parent=1 // pred_region
      %s46 = ssub.s32 16384, 16384
      %47 = vsyncadd [#allocation9], %s46
      %s48 = sshll.u32 [#allocation8], 4
      %s49 = int_to_ptr.vmem [resolvable:$true] %s48
      %54 = dma.hbm_to_vmem [thread:$0]  %s5, 16384, %s49, [#allocation9], 512, 512, 32
    $region25: #{_lambda_.3} parent=1 // pred_fallthru
      _
    // Predicated region
    $region26: #{_lambda_.3} parent=1 // pred_check
      _
    $region27: #{_lambda_.3} parent=1 // pred_check_branch
      %56 = sbr.rel (0) target = $region29
    $region28: #{_lambda_.3} parent=1 // pred_region
      _
    $region29: #{_lambda_.3} parent=1 // pred_fallthru
      _
    // Predicated region
    $region30: #{_lambda_.3} parent=1 // pred_check
      _
    $region31: #{_lambda_.3} parent=1 // pred_check_branch
      %58 = sbr.rel (0) target = $region33
    $region32: #{_lambda_.3} parent=1 // pred_region
      _
    $region33: #{_lambda_.3} parent=1 // pred_fallthru
      _
    // Predicated region
    $region34: #{_lambda_.3} parent=1 // pred_check
      _
    $region35: #{_lambda_.3} parent=1 // pred_check_branch
      %60 = sbr.rel (0) target = $region37
    $region36: #{_lambda_.3} parent=1 // pred_region
      _
    $region37: #{_lambda_.3} parent=1 // pred_fallthru
      _
    // Predicated region
    $region38: #{_lambda_.3} parent=1 // pred_check
      _
    $region39: #{_lambda_.3} parent=1 // pred_check_branch
      %62 = sbr.rel (0) target = $region41
    $region40: #{_lambda_.3} parent=1 // pred_region
      _
    $region41: #{_lambda_.3} parent=1 // pred_fallthru
      _
    // Predicated region
    $region42: #{_lambda_.3} parent=1 // pred_check
      _
    $region43: #{_lambda_.3} parent=1 // pred_check_branch
      %64 = sbr.rel (0) target = $region45
    $region44: #{_lambda_.3} parent=1 // pred_region
      _
    $region45: #{_lambda_.3} parent=1 // pred_fallthru
      _
    // Predicated region
    $region46: #{_lambda_.3} parent=1 // pred_check
      _
    $region47: #{_lambda_.3} parent=1 // pred_check_branch
      %66 = sbr.rel (0) target = $region49
    $region48: #{_lambda_.3} parent=1 // pred_region
      %67 = dma.done [#allocation9], 16384
    $region49: #{_lambda_.3} parent=1 // pred_fallthru
      _
    %s68 = ssub.s32 0, 0
    %s69 = smul.u32 8, %s68
    %p70 = scmp.lt.s32.totalorder %s69, 7
    %s71 = scalar_select %p70, %s69, 7
    %s72 = smul.addr %s71, 8
    %s73 = scalar_lea.vmem %s3, %s72
    %s74 = ssub.s32 0, 0
    %s75 = smul.u32 8, %s74
    %p76 = scmp.lt.s32.totalorder %s75, 7
    %s77 = scalar_select %p76, %s75, 7
    %s78 = smul.addr %s77, 8
    %s79 = scalar_lea.vmem %s4, %s78
    %s80 = ssub.s32 0, 0
    %s81 = smul.u32 8, %s80
    %p82 = scmp.lt.s32.totalorder %s81, 7
    %s83 = scalar_select %p82, %s81, 7
    %s84 = smul.addr %s83, 8
    %s85 = scalar_lea.vmem %s3, %s84
    %s86 = ssub.s32 0, 0
    %s87 = smul.u32 8, %s86
    %s88 = ssub.s32 0, 0
    %s89 = smul.u32 8, %s88
    %p90 = scmp.lt.s32.totalorder %s89, 7
    %s91 = scalar_select %p90, %s89, 7
    %s92 = smul.addr %s91, 8
    %s93 = scalar_lea.vmem %s4, %s92
    %s94 = ssub.s32 0, 0
    %s95 = smul.u32 8, %s94
    %p96 = scmp.eq.s32.totalorder 0, 0
    // Predicated region
    $region50: #{_lambda_.3} parent=1 // pred_check
      %p97 = pneg %p96
    $region51: #{_lambda_.3} parent=1 // pred_check_branch
      %99 = sbr.rel (%p97) target = $region53
    $region52: #{_lambda_.3} parent=1 // pred_region
      %100 = vst [vmem:[#allocation4] sm:$0xff] 0.0
      %101 = vst [vmem:[#allocation5] sm:$0xff] 0.0
      %102 = vst [vmem:[#allocation6] sm:$0xff] 0.0
      %103 = vst [vmem:[#allocation7] sm:$0xff] 0.0
    $region53: #{_lambda_.3} parent=1 // pred_fallthru
      _
    %v104 = vld [vmem:[%s1] sm:$0xff]
    %v105 = vld [vmem:[%s1 + $0x8] sm:$0xff]
    %v106 = vld [vmem:[%s1 + $0x10] sm:$0xff]
    %v107 = vld [vmem:[%s1 + $0x18] sm:$0xff]
    %v108 = vld [vmem:[%s1 + $0x20] sm:$0xff]
    %v109 = vld [vmem:[%s1 + $0x28] sm:$0xff]
    %v110 = vld [vmem:[%s1 + $0x30] sm:$0xff]
    %v111 = vld [vmem:[%s1 + $0x38] sm:$0xff]
    %v112 = vld [vmem:[#allocation8] sm:$0xff]
    %v113 = vld [vmem:[#allocation8 + $0x8] sm:$0xff]
    %v114 = vld [vmem:[#allocation8 + $0x10] sm:$0xff]
    %v115 = vld [vmem:[#allocation8 + $0x18] sm:$0xff]
    %v116 = vld [vmem:[#allocation8 + $0x20] sm:$0xff]
    %v117 = vld [vmem:[#allocation8 + $0x28] sm:$0xff]
    %v118 = vld [vmem:[#allocation8 + $0x30] sm:$0xff]
    %v119 = vld [vmem:[#allocation8 + $0x38] sm:$0xff]
    %v120 = vld [vmem:[#allocation8 + $0x40] sm:$0xff]
    %v121 = vld [vmem:[#allocation8 + $0x48] sm:$0xff]
    %v122 = vld [vmem:[#allocation8 + $0x50] sm:$0xff]
    %v123 = vld [vmem:[#allocation8 + $0x58] sm:$0xff]
    %v124 = vld [vmem:[#allocation8 + $0x60] sm:$0xff]
    %v125 = vld [vmem:[#allocation8 + $0x68] sm:$0xff]
    %v126 = vld [vmem:[#allocation8 + $0x70] sm:$0xff]
    %v127 = vld [vmem:[#allocation8 + $0x78] sm:$0xff]
    %v128 = vld [vmem:[#allocation8 + $0x80] sm:$0xff]
    %v129 = vld [vmem:[#allocation8 + $0x88] sm:$0xff]
    %v130 = vld [vmem:[#allocation8 + $0x90] sm:$0xff]
    %v131 = vld [vmem:[#allocation8 + $0x98] sm:$0xff]
    %v132 = vld [vmem:[#allocation8 + $0xa0] sm:$0xff]
    %v133 = vld [vmem:[#allocation8 + $0xa8] sm:$0xff]
    %v134 = vld [vmem:[#allocation8 + $0xb0] sm:$0xff]
    %v135 = vld [vmem:[#allocation8 + $0xb8] sm:$0xff]
    %v136 = vld [vmem:[#allocation8 + $0xc0] sm:$0xff]
    %v137 = vld [vmem:[#allocation8 + $0xc8] sm:$0xff]
    %v138 = vld [vmem:[#allocation8 + $0xd0] sm:$0xff]
    %v139 = vld [vmem:[#allocation8 + $0xd8] sm:$0xff]
    %v140 = vld [vmem:[#allocation8 + $0xe0] sm:$0xff]
    %v141 = vld [vmem:[#allocation8 + $0xe8] sm:$0xff]
    %v142 = vld [vmem:[#allocation8 + $0xf0] sm:$0xff]
    %v143 = vld [vmem:[#allocation8 + $0xf8] sm:$0xff]
    %v144 = vld [vmem:[#allocation8 + $0x100] sm:$0xff]
    %v145 = vld [vmem:[#allocation8 + $0x108] sm:$0xff]
    %v146 = vld [vmem:[#allocation8 + $0x110] sm:$0xff]
    %v147 = vld [vmem:[#allocation8 + $0x118] sm:$0xff]
    %v148 = vld [vmem:[#allocation8 + $0x120] sm:$0xff]
    %v149 = vld [vmem:[#allocation8 + $0x128] sm:$0xff]
    %v150 = vld [vmem:[#allocation8 + $0x130] sm:$0xff]
    %v151 = vld [vmem:[#allocation8 + $0x138] sm:$0xff]
    %v152 = vld [vmem:[#allocation8 + $0x140] sm:$0xff]
    %v153 = vld [vmem:[#allocation8 + $0x148] sm:$0xff]
    %v154 = vld [vmem:[#allocation8 + $0x150] sm:$0xff]
    %v155 = vld [vmem:[#allocation8 + $0x158] sm:$0xff]
    %v156 = vld [vmem:[#allocation8 + $0x160] sm:$0xff]
    %v157 = vld [vmem:[#allocation8 + $0x168] sm:$0xff]
    %v158 = vld [vmem:[#allocation8 + $0x170] sm:$0xff]
    %v159 = vld [vmem:[#allocation8 + $0x178] sm:$0xff]
    %v160 = vld [vmem:[#allocation8 + $0x180] sm:$0xff]
    %v161 = vld [vmem:[#allocation8 + $0x188] sm:$0xff]
    %v162 = vld [vmem:[#allocation8 + $0x190] sm:$0xff]
    %v163 = vld [vmem:[#allocation8 + $0x198] sm:$0xff]
    %v164 = vld [vmem:[#allocation8 + $0x1a0] sm:$0xff]
    %v165 = vld [vmem:[#allocation8 + $0x1a8] sm:$0xff]
    %v166 = vld [vmem:[#allocation8 + $0x1b0] sm:$0xff]
    %v167 = vld [vmem:[#allocation8 + $0x1b8] sm:$0xff]
    %v168 = vld [vmem:[#allocation8 + $0x1c0] sm:$0xff]
    %v169 = vld [vmem:[#allocation8 + $0x1c8] sm:$0xff]
    %v170 = vld [vmem:[#allocation8 + $0x1d0] sm:$0xff]
    %v171 = vld [vmem:[#allocation8 + $0x1d8] sm:$0xff]
    %v172 = vld [vmem:[#allocation8 + $0x1e0] sm:$0xff]
    %v173 = vld [vmem:[#allocation8 + $0x1e8] sm:$0xff]
    %v174 = vld [vmem:[#allocation8 + $0x1f0] sm:$0xff]
    %v175 = vld [vmem:[#allocation8 + $0x1f8] sm:$0xff]
    %v176 = vld [vmem:[%s85] sm:$0xff]
    %v177 = vld [vmem:[%s85 + $0x8] sm:$0xff]
    %v178 = vld [vmem:[%s85 + $0x10] sm:$0xff]
    %v179 = vld [vmem:[%s85 + $0x18] sm:$0xff]
    %v180 = vld [vmem:[%s85 + $0x20] sm:$0xff]
    %v181 = vld [vmem:[%s85 + $0x28] sm:$0xff]
    %v182 = vld [vmem:[%s85 + $0x30] sm:$0xff]
    %v183 = vld [vmem:[%s85 + $0x38] sm:$0xff]
    %s184 = scalar_lea.vmem [#allocation8], 512
    %v185 = vld [vmem:[%s184] sm:$0xff]
    %v186 = vld [vmem:[%s184 + $0x8] sm:$0xff]
    %v187 = vld [vmem:[%s184 + $0x10] sm:$0xff]
    %v188 = vld [vmem:[%s184 + $0x18] sm:$0xff]
    %v189 = vld [vmem:[%s184 + $0x20] sm:$0xff]
    %v190 = vld [vmem:[%s184 + $0x28] sm:$0xff]
    %v191 = vld [vmem:[%s184 + $0x30] sm:$0xff]
    %v192 = vld [vmem:[%s184 + $0x38] sm:$0xff]
    %v193 = vld [vmem:[%s184 + $0x40] sm:$0xff]
    %v194 = vld [vmem:[%s184 + $0x48] sm:$0xff]
    %v195 = vld [vmem:[%s184 + $0x50] sm:$0xff]
    %v196 = vld [vmem:[%s184 + $0x58] sm:$0xff]
    %v197 = vld [vmem:[%s184 + $0x60] sm:$0xff]
    %v198 = vld [vmem:[%s184 + $0x68] sm:$0xff]
    %v199 = vld [vmem:[%s184 + $0x70] sm:$0xff]
    %v200 = vld [vmem:[%s184 + $0x78] sm:$0xff]
    %v201 = vld [vmem:[%s184 + $0x80] sm:$0xff]
    %v202 = vld [vmem:[%s184 + $0x88] sm:$0xff]
    %v203 = vld [vmem:[%s184 + $0x90] sm:$0xff]
    %v204 = vld [vmem:[%s184 + $0x98] sm:$0xff]
    %v205 = vld [vmem:[%s184 + $0xa0] sm:$0xff]
    %v206 = vld [vmem:[%s184 + $0xa8] sm:$0xff]
    %v207 = vld [vmem:[%s184 + $0xb0] sm:$0xff]
    %v208 = vld [vmem:[%s184 + $0xb8] sm:$0xff]
    %v209 = vld [vmem:[%s184 + $0xc0] sm:$0xff]
    %v210 = vld [vmem:[%s184 + $0xc8] sm:$0xff]
    %v211 = vld [vmem:[%s184 + $0xd0] sm:$0xff]
    %v212 = vld [vmem:[%s184 + $0xd8] sm:$0xff]
    %v213 = vld [vmem:[%s184 + $0xe0] sm:$0xff]
    %v214 = vld [vmem:[%s184 + $0xe8] sm:$0xff]
    %v215 = vld [vmem:[%s184 + $0xf0] sm:$0xff]
    %v216 = vld [vmem:[%s184 + $0xf8] sm:$0xff]
    %v217 = vld [vmem:[%s184 + $0x100] sm:$0xff]
    %v218 = vld [vmem:[%s184 + $0x108] sm:$0xff]
    %v219 = vld [vmem:[%s184 + $0x110] sm:$0xff]
    %v220 = vld [vmem:[%s184 + $0x118] sm:$0xff]
    %v221 = vld [vmem:[%s184 + $0x120] sm:$0xff]
    %v222 = vld [vmem:[%s184 + $0x128] sm:$0xff]
    %v223 = vld [vmem:[%s184 + $0x130] sm:$0xff]
    %v224 = vld [vmem:[%s184 + $0x138] sm:$0xff]
    %v225 = vld [vmem:[%s184 + $0x140] sm:$0xff]
    %v226 = vld [vmem:[%s184 + $0x148] sm:$0xff]
    %v227 = vld [vmem:[%s184 + $0x150] sm:$0xff]
    %v228 = vld [vmem:[%s184 + $0x158] sm:$0xff]
    %v229 = vld [vmem:[%s184 + $0x160] sm:$0xff]
    %v230 = vld [vmem:[%s184 + $0x168] sm:$0xff]
    %v231 = vld [vmem:[%s184 + $0x170] sm:$0xff]
    %v232 = vld [vmem:[%s184 + $0x178] sm:$0xff]
    %v233 = vld [vmem:[%s184 + $0x180] sm:$0xff]
    %v234 = vld [vmem:[%s184 + $0x188] sm:$0xff]
    %v235 = vld [vmem:[%s184 + $0x190] sm:$0xff]
    %v236 = vld [vmem:[%s184 + $0x198] sm:$0xff]
    %v237 = vld [vmem:[%s184 + $0x1a0] sm:$0xff]
    %v238 = vld [vmem:[%s184 + $0x1a8] sm:$0xff]
    %v239 = vld [vmem:[%s184 + $0x1b0] sm:$0xff]
    %v240 = vld [vmem:[%s184 + $0x1b8] sm:$0xff]
    %v241 = vld [vmem:[%s184 + $0x1c0] sm:$0xff]
    %v242 = vld [vmem:[%s184 + $0x1c8] sm:$0xff]
    %v243 = vld [vmem:[%s184 + $0x1d0] sm:$0xff]
    %v244 = vld [vmem:[%s184 + $0x1d8] sm:$0xff]
    %v245 = vld [vmem:[%s184 + $0x1e0] sm:$0xff]
    %v246 = vld [vmem:[%s184 + $0x1e8] sm:$0xff]
    %v247 = vld [vmem:[%s184 + $0x1f0] sm:$0xff]
    %v248 = vld [vmem:[%s184 + $0x1f8] sm:$0xff]
    %v249 = vld [vmem:[%s2] sm:$0xff]
    %v250 = vld [vmem:[%s2 + $0x8] sm:$0xff]
    %v251 = vld [vmem:[%s2 + $0x10] sm:$0xff]
    %v252 = vld [vmem:[%s2 + $0x18] sm:$0xff]
    %v253 = vld [vmem:[%s2 + $0x20] sm:$0xff]
    %v254 = vld [vmem:[%s2 + $0x28] sm:$0xff]
    %v255 = vld [vmem:[%s2 + $0x30] sm:$0xff]
    %v256 = vld [vmem:[%s2 + $0x38] sm:$0xff]
    %v257 = vld [vmem:[%s6] sm:$0xff]
    %v258 = vld [vmem:[%s6 + $0x8] sm:$0xff]
    %v259 = vld [vmem:[%s6 + $0x10] sm:$0xff]
    %v260 = vld [vmem:[%s6 + $0x18] sm:$0xff]
    %v261 = vld [vmem:[%s6 + $0x20] sm:$0xff]
    %v262 = vld [vmem:[%s6 + $0x28] sm:$0xff]
    %v263 = vld [vmem:[%s6 + $0x30] sm:$0xff]
    %v264 = vld [vmem:[%s6 + $0x38] sm:$0xff]
    %v265 = vld [vmem:[%s6 + $0x40] sm:$0xff]
    %v266 = vld [vmem:[%s6 + $0x48] sm:$0xff]
    %v267 = vld [vmem:[%s6 + $0x50] sm:$0xff]
    %v268 = vld [vmem:[%s6 + $0x58] sm:$0xff]
    %v269 = vld [vmem:[%s6 + $0x60] sm:$0xff]
    %v270 = vld [vmem:[%s6 + $0x68] sm:$0xff]
    %v271 = vld [vmem:[%s6 + $0x70] sm:$0xff]
    %v272 = vld [vmem:[%s6 + $0x78] sm:$0xff]
    %v273 = vld [vmem:[%s6 + $0x80] sm:$0xff]
    %v274 = vld [vmem:[%s6 + $0x88] sm:$0xff]
    %v275 = vld [vmem:[%s6 + $0x90] sm:$0xff]
    %v276 = vld [vmem:[%s6 + $0x98] sm:$0xff]
    %v277 = vld [vmem:[%s6 + $0xa0] sm:$0xff]
    %v278 = vld [vmem:[%s6 + $0xa8] sm:$0xff]
    %v279 = vld [vmem:[%s6 + $0xb0] sm:$0xff]
    %v280 = vld [vmem:[%s6 + $0xb8] sm:$0xff]
    %v281 = vld [vmem:[%s6 + $0xc0] sm:$0xff]
    %v282 = vld [vmem:[%s6 + $0xc8] sm:$0xff]
    %v283 = vld [vmem:[%s6 + $0xd0] sm:$0xff]
    %v284 = vld [vmem:[%s6 + $0xd8] sm:$0xff]
    %v285 = vld [vmem:[%s6 + $0xe0] sm:$0xff]
    %v286 = vld [vmem:[%s6 + $0xe8] sm:$0xff]
    %v287 = vld [vmem:[%s6 + $0xf0] sm:$0xff]
    %v288 = vld [vmem:[%s6 + $0xf8] sm:$0xff]
    %v289 = vld [vmem:[%s6 + $0x100] sm:$0xff]
    %v290 = vld [vmem:[%s6 + $0x108] sm:$0xff]
    %v291 = vld [vmem:[%s6 + $0x110] sm:$0xff]
    %v292 = vld [vmem:[%s6 + $0x118] sm:$0xff]
    %v293 = vld [vmem:[%s6 + $0x120] sm:$0xff]
    %v294 = vld [vmem:[%s6 + $0x128] sm:$0xff]
    %v295 = vld [vmem:[%s6 + $0x130] sm:$0xff]
    %v296 = vld [vmem:[%s6 + $0x138] sm:$0xff]
    %v297 = vld [vmem:[%s6 + $0x140] sm:$0xff]
    %v298 = vld [vmem:[%s6 + $0x148] sm:$0xff]
    %v299 = vld [vmem:[%s6 + $0x150] sm:$0xff]
    %v300 = vld [vmem:[%s6 + $0x158] sm:$0xff]
    %v301 = vld [vmem:[%s6 + $0x160] sm:$0xff]
    %v302 = vld [vmem:[%s6 + $0x168] sm:$0xff]
    %v303 = vld [vmem:[%s6 + $0x170] sm:$0xff]
    %v304 = vld [vmem:[%s6 + $0x178] sm:$0xff]
    %v305 = vld [vmem:[%s6 + $0x180] sm:$0xff]
    %v306 = vld [vmem:[%s6 + $0x188] sm:$0xff]
    %v307 = vld [vmem:[%s6 + $0x190] sm:$0xff]
    %v308 = vld [vmem:[%s6 + $0x198] sm:$0xff]
    %v309 = vld [vmem:[%s6 + $0x1a0] sm:$0xff]
    %v310 = vld [vmem:[%s6 + $0x1a8] sm:$0xff]
    %v311 = vld [vmem:[%s6 + $0x1b0] sm:$0xff]
    %v312 = vld [vmem:[%s6 + $0x1b8] sm:$0xff]
    %v313 = vld [vmem:[%s6 + $0x1c0] sm:$0xff]
    %v314 = vld [vmem:[%s6 + $0x1c8] sm:$0xff]
    %v315 = vld [vmem:[%s6 + $0x1d0] sm:$0xff]
    %v316 = vld [vmem:[%s6 + $0x1d8] sm:$0xff]
    %v317 = vld [vmem:[%s6 + $0x1e0] sm:$0xff]
    %v318 = vld [vmem:[%s6 + $0x1e8] sm:$0xff]
    %v319 = vld [vmem:[%s6 + $0x1f0] sm:$0xff]
    %v320 = vld [vmem:[%s6 + $0x1f8] sm:$0xff]
    %321 = vmatprep.subr.mxu0 %v318
    %322 = vmatpush1.msra.mxu0 %v317
    %323 = vmatprep.subr.mxu0 %v314
    %324 = vmatpush1.msra.mxu0 %v313
    %325 = vmatprep.subr.mxu0 %v310
    %326 = vmatpush1.msra.mxu0 %v309
    %327 = vmatprep.subr.mxu0 %v306
    %328 = vmatpush1.msra.mxu0 %v305
    %329 = vmatprep.subr.mxu0 %v302
    %330 = vmatpush1.msra.mxu0 %v301
    %331 = vmatprep.subr.mxu0 %v298
    %332 = vmatpush1.msra.mxu0 %v297
    %333 = vmatprep.subr.mxu0 %v294
    %334 = vmatpush1.msra.mxu0 %v293
    %335 = vmatprep.subr.mxu0 %v290
    %336 = vmatpush1.msra.mxu0 %v289
    %337 = vmatprep.subr.mxu0 %v286
    %338 = vmatpush1.msra.mxu0 %v285
    %339 = vmatprep.subr.mxu0 %v282
    %340 = vmatpush1.msra.mxu0 %v281
    %341 = vmatprep.subr.mxu0 %v278
    %342 = vmatpush1.msra.mxu0 %v277
    %343 = vmatprep.subr.mxu0 %v274
    %344 = vmatpush1.msra.mxu0 %v273
    %345 = vmatprep.subr.mxu0 %v270
    %346 = vmatpush1.msra.mxu0 %v269
    %347 = vmatprep.subr.mxu0 %v266
    %348 = vmatpush1.msra.mxu0 %v265
    %349 = vmatprep.subr.mxu0 %v262
    %350 = vmatpush1.msra.mxu0 %v261
    %351 = vmatprep.subr.mxu0 %v258
    %352 = vmatpush1.msra.mxu0 %v257
    %353 = vmatprep.subr.mxu0 0.0
    %354 = vmatpush2.msra.mxu0 0.0
    %355 = vmatprep.subr.mxu0 0.0
    %356 = vmatpush2.msra.mxu0 0.0
    %357 = vmatprep.subr.mxu0 0.0
    %358 = vmatpush2.msra.mxu0 0.0
    %359 = vmatprep.subr.mxu0 0.0
    %360 = vmatpush2.msra.mxu0 0.0
    %361 = vmatprep.subr.mxu0 0.0
    %362 = vmatpush2.msra.mxu0 0.0
    %363 = vmatprep.subr.mxu0 0.0
    %364 = vmatpush2.msra.mxu0 0.0
    %365 = vmatprep.subr.mxu0 0.0
    %366 = vmatpush2.msra.mxu0 0.0
    %367 = vmatprep.subr.mxu0 0.0
    %368 = vmatpush2.msra.mxu0 0.0
    %369 = vmatprep.subr.mxu0 0.0
    %370 = vmatpush2.msra.mxu0 0.0
    %371 = vmatprep.subr.mxu0 0.0
    %372 = vmatpush2.msra.mxu0 0.0
    %373 = vmatprep.subr.mxu0 0.0
    %374 = vmatpush2.msra.mxu0 0.0
    %375 = vmatprep.subr.mxu0 0.0
    %376 = vmatpush2.msra.mxu0 0.0
    %377 = vmatprep.subr.mxu0 0.0
    %378 = vmatpush2.msra.mxu0 0.0
    %379 = vmatprep.subr.mxu0 0.0
    %380 = vmatpush2.msra.mxu0 0.0
    %381 = vmatprep.subr.mxu0 0.0
    %382 = vmatpush2.msra.mxu0 0.0
    %383 = vmatprep.subr.mxu0 0.0
    %384 = vmatpush2.msra.mxu0 0.0
    %385 = vmatprep.mubr.f32.mxu0 0.0
    %386 = vmatmul.mubr.f32.gmra.mxu0 %v249
    %v387 = vpop.f32.mrf.mxu0
    %v388 = vadd.f32 0.0, %v387
    %v389 = vpop.f32.mrf.mxu0
    %v390 = vadd.f32 0.0, %v389
    %391 = vmatprep.mubr.f32.mxu0 0.0
    %392 = vmatmul.mubr.f32.gmra.mxu0 %v250
    %v393 = vpop.f32.mrf.mxu0
    %v394 = vadd.f32 0.0, %v393
    %v395 = vpop.f32.mrf.mxu0
    %v396 = vadd.f32 0.0, %v395
    %397 = vmatprep.mubr.f32.mxu0 0.0
    %398 = vmatmul.mubr.f32.gmra.mxu0 %v251
    %v399 = vpop.f32.mrf.mxu0
    %v400 = vadd.f32 0.0, %v399
    %v401 = vpop.f32.mrf.mxu0
    %v402 = vadd.f32 0.0, %v401
    %403 = vmatprep.mubr.f32.mxu0 0.0
    %404 = vmatmul.mubr.f32.gmra.mxu0 %v252
    %v405 = vpop.f32.mrf.mxu0
    %v406 = vadd.f32 0.0, %v405
    %v407 = vpop.f32.mrf.mxu0
    %v408 = vadd.f32 0.0, %v407
    %409 = vmatprep.mubr.f32.mxu0 0.0
    %410 = vmatmul.mubr.f32.gmra.mxu0 %v253
    %v411 = vpop.f32.mrf.mxu0
    %v412 = vadd.f32 0.0, %v411
    %v413 = vpop.f32.mrf.mxu0
    %v414 = vadd.f32 0.0, %v413
    %415 = vmatprep.mubr.f32.mxu0 0.0
    %416 = vmatmul.mubr.f32.gmra.mxu0 %v254
    %v417 = vpop.f32.mrf.mxu0
    %v418 = vadd.f32 0.0, %v417
    %v419 = vpop.f32.mrf.mxu0
    %v420 = vadd.f32 0.0, %v419
    %421 = vmatprep.mubr.f32.mxu0 0.0
    %422 = vmatmul.mubr.f32.gmra.mxu0 %v255
    %v423 = vpop.f32.mrf.mxu0
    %v424 = vadd.f32 0.0, %v423
    %v425 = vpop.f32.mrf.mxu0
    %v426 = vadd.f32 0.0, %v425
    %427 = vmatprep.mubr.f32.mxu0 0.0
    %428 = vmatmul.mubr.f32.gmra.mxu0 %v256
    %v429 = vpop.f32.mrf.mxu0
    %v430 = vadd.f32 0.0, %v429
    %v431 = vpop.f32.mrf.mxu0
    %v432 = vadd.f32 0.0, %v431
    %433 = vdwg.mxu0
    %434 = vmatprep.subr.mxu0 %v320
    %435 = vmatpush1.msra.mxu0 %v319
    %436 = vmatprep.subr.mxu0 %v316
    %437 = vmatpush1.msra.mxu0 %v315
    %438 = vmatprep.subr.mxu0 %v312
    %439 = vmatpush1.msra.mxu0 %v311
    %440 = vmatprep.subr.mxu0 %v308
    %441 = vmatpush1.msra.mxu0 %v307
    %442 = vmatprep.subr.mxu0 %v304
    %443 = vmatpush1.msra.mxu0 %v303
    %444 = vmatprep.subr.mxu0 %v300
    %445 = vmatpush1.msra.mxu0 %v299
    %446 = vmatprep.subr.mxu0 %v296
    %447 = vmatpush1.msra.mxu0 %v295
    %448 = vmatprep.subr.mxu0 %v292
    %449 = vmatpush1.msra.mxu0 %v291
    %450 = vmatprep.subr.mxu0 %v288
    %451 = vmatpush1.msra.mxu0 %v287
    %452 = vmatprep.subr.mxu0 %v284
    %453 = vmatpush1.msra.mxu0 %v283
    %454 = vmatprep.subr.mxu0 %v280
    %455 = vmatpush1.msra.mxu0 %v279
    %456 = vmatprep.subr.mxu0 %v276
    %457 = vmatpush1.msra.mxu0 %v275
    %458 = vmatprep.subr.mxu0 %v272
    %459 = vmatpush1.msra.mxu0 %v271
    %460 = vmatprep.subr.mxu0 %v268
    %461 = vmatpush1.msra.mxu0 %v267
    %462 = vmatprep.subr.mxu0 %v264
    %463 = vmatpush1.msra.mxu0 %v263
    %464 = vmatprep.subr.mxu0 %v260
    %465 = vmatpush1.msra.mxu0 %v259
    %466 = vmatprep.subr.mxu0 0.0
    %467 = vmatpush2.msra.mxu0 0.0
    %468 = vmatprep.subr.mxu0 0.0
    %469 = vmatpush2.msra.mxu0 0.0
    %470 = vmatprep.subr.mxu0 0.0
    %471 = vmatpush2.msra.mxu0 0.0
    %472 = vmatprep.subr.mxu0 0.0
    %473 = vmatpush2.msra.mxu0 0.0
    %474 = vmatprep.subr.mxu0 0.0
    %475 = vmatpush2.msra.mxu0 0.0
    %476 = vmatprep.subr.mxu0 0.0
    %477 = vmatpush2.msra.mxu0 0.0
    %478 = vmatprep.subr.mxu0 0.0
    %479 = vmatpush2.msra.mxu0 0.0
    %480 = vmatprep.subr.mxu0 0.0
    %481 = vmatpush2.msra.mxu0 0.0
    %482 = vmatprep.subr.mxu0 0.0
    %483 = vmatpush2.msra.mxu0 0.0
    %484 = vmatprep.subr.mxu0 0.0
    %485 = vmatpush2.msra.mxu0 0.0
    %486 = vmatprep.subr.mxu0 0.0
    %487 = vmatpush2.msra.mxu0 0.0
    %488 = vmatprep.subr.mxu0 0.0
    %489 = vmatpush2.msra.mxu0 0.0
    %490 = vmatprep.subr.mxu0 0.0
    %491 = vmatpush2.msra.mxu0 0.0
    %492 = vmatprep.subr.mxu0 0.0
    %493 = vmatpush2.msra.mxu0 0.0
    %494 = vmatprep.subr.mxu0 0.0
    %495 = vmatpush2.msra.mxu0 0.0
    %496 = vmatprep.subr.mxu0 0.0
    %497 = vmatpush2.msra.mxu0 0.0
    %498 = vmatprep.mubr.f32.mxu0 0.0
    %499 = vmatmul.mubr.f32.gmra.mxu0 %v249
    %v500 = vpop.f32.mrf.mxu0
    %v501 = vadd.f32 0.0, %v500
    %v502 = vpop.f32.mrf.mxu0
    %v503 = vadd.f32 0.0, %v502
    %504 = vmatprep.mubr.f32.mxu0 0.0
    %505 = vmatmul.mubr.f32.gmra.mxu0 %v250
    %v506 = vpop.f32.mrf.mxu0
    %v507 = vadd.f32 0.0, %v506
    %v508 = vpop.f32.mrf.mxu0
    %v509 = vadd.f32 0.0, %v508
    %510 = vmatprep.mubr.f32.mxu0 0.0
    %511 = vmatmul.mubr.f32.gmra.mxu0 %v251
    %v512 = vpop.f32.mrf.mxu0
    %v513 = vadd.f32 0.0, %v512
    %v514 = vpop.f32.mrf.mxu0
    %v515 = vadd.f32 0.0, %v514
    %516 = vmatprep.mubr.f32.mxu0 0.0
    %517 = vmatmul.mubr.f32.gmra.mxu0 %v252
    %v518 = vpop.f32.mrf.mxu0
    %v519 = vadd.f32 0.0, %v518
    %v520 = vpop.f32.mrf.mxu0
    %v521 = vadd.f32 0.0, %v520
    %522 = vmatprep.mubr.f32.mxu0 0.0
    %523 = vmatmul.mubr.f32.gmra.mxu0 %v253
    %v524 = vpop.f32.mrf.mxu0
    %v525 = vadd.f32 0.0, %v524
    %v526 = vpop.f32.mrf.mxu0
    %v527 = vadd.f32 0.0, %v526
    %528 = vmatprep.mubr.f32.mxu0 0.0
    %529 = vmatmul.mubr.f32.gmra.mxu0 %v254
    %v530 = vpop.f32.mrf.mxu0
    %v531 = vadd.f32 0.0, %v530
    %v532 = vpop.f32.mrf.mxu0
    %v533 = vadd.f32 0.0, %v532
    %534 = vmatprep.mubr.f32.mxu0 0.0
    %535 = vmatmul.mubr.f32.gmra.mxu0 %v255
    %v536 = vpop.f32.mrf.mxu0
    %v537 = vadd.f32 0.0, %v536
    %v538 = vpop.f32.mrf.mxu0
    %v539 = vadd.f32 0.0, %v538
    %540 = vmatprep.mubr.f32.mxu0 0.0
    %541 = vmatmul.mubr.f32.gmra.mxu0 %v256
    %v542 = vpop.f32.mrf.mxu0
    %v543 = vadd.f32 0.0, %v542
    %v544 = vpop.f32.mrf.mxu0
    %v545 = vadd.f32 0.0, %v544
    %546 = vdwg.mxu0
    %547 = vmatprep.subr.mxu0 %v173
    %548 = vmatpush1.msra.mxu0 %v172
    %549 = vmatprep.subr.mxu0 %v169
    %550 = vmatpush1.msra.mxu0 %v168
    %551 = vmatprep.subr.mxu0 %v165
    %552 = vmatpush1.msra.mxu0 %v164
    %553 = vmatprep.subr.mxu0 %v161
    %554 = vmatpush1.msra.mxu0 %v160
    %555 = vmatprep.subr.mxu0 %v157
    %556 = vmatpush1.msra.mxu0 %v156
    %557 = vmatprep.subr.mxu0 %v153
    %558 = vmatpush1.msra.mxu0 %v152
    %559 = vmatprep.subr.mxu0 %v149
    %560 = vmatpush1.msra.mxu0 %v148
    %561 = vmatprep.subr.mxu0 %v145
    %562 = vmatpush1.msra.mxu0 %v144
    %563 = vmatprep.subr.mxu0 %v141
    %564 = vmatpush1.msra.mxu0 %v140
    %565 = vmatprep.subr.mxu0 %v137
    %566 = vmatpush1.msra.mxu0 %v136
    %567 = vmatprep.subr.mxu0 %v133
    %568 = vmatpush1.msra.mxu0 %v132
    %569 = vmatprep.subr.mxu0 %v129
    %570 = vmatpush1.msra.mxu0 %v128
    %571 = vmatprep.subr.mxu0 %v125
    %572 = vmatpush1.msra.mxu0 %v124
    %573 = vmatprep.subr.mxu0 %v121
    %574 = vmatpush1.msra.mxu0 %v120
    %575 = vmatprep.subr.mxu0 %v117
    %576 = vmatpush1.msra.mxu0 %v116
    %577 = vmatprep.subr.mxu0 %v113
    %578 = vmatpush1.msra.mxu0 %v112
    %579 = vmatprep.subr.mxu0 0.0
    %580 = vmatpush2.msra.mxu0 0.0
    %581 = vmatprep.subr.mxu0 0.0
    %582 = vmatpush2.msra.mxu0 0.0
    %583 = vmatprep.subr.mxu0 0.0
    %584 = vmatpush2.msra.mxu0 0.0
    %585 = vmatprep.subr.mxu0 0.0
    %586 = vmatpush2.msra.mxu0 0.0
    %587 = vmatprep.subr.mxu0 0.0
    %588 = vmatpush2.msra.mxu0 0.0
    %589 = vmatprep.subr.mxu0 0.0
    %590 = vmatpush2.msra.mxu0 0.0
    %591 = vmatprep.subr.mxu0 0.0
    %592 = vmatpush2.msra.mxu0 0.0
    %593 = vmatprep.subr.mxu0 0.0
    %594 = vmatpush2.msra.mxu0 0.0
    %595 = vmatprep.subr.mxu0 0.0
    %596 = vmatpush2.msra.mxu0 0.0
    %597 = vmatprep.subr.mxu0 0.0
    %598 = vmatpush2.msra.mxu0 0.0
    %599 = vmatprep.subr.mxu0 0.0
    %600 = vmatpush2.msra.mxu0 0.0
    %601 = vmatprep.subr.mxu0 0.0
    %602 = vmatpush2.msra.mxu0 0.0
    %603 = vmatprep.subr.mxu0 0.0
    %604 = vmatpush2.msra.mxu0 0.0
    %605 = vmatprep.subr.mxu0 0.0
    %606 = vmatpush2.msra.mxu0 0.0
    %607 = vmatprep.subr.mxu0 0.0
    %608 = vmatpush2.msra.mxu0 0.0
    %609 = vmatprep.subr.mxu0 0.0
    %610 = vmatpush2.msra.mxu0 0.0
    %611 = vmatprep.mubr.f32.mxu0 0.0
    %612 = vmatmul.mubr.f32.gmra.mxu0 %v104
    %v613 = vpop.f32.mrf.mxu0
    %v614 = vadd.f32 %v388, %v613
    %v615 = vpop.f32.mrf.mxu0
    %v616 = vadd.f32 %v390, %v615
    %617 = vmatprep.mubr.f32.mxu0 0.0
    %618 = vmatmul.mubr.f32.gmra.mxu0 %v105
    %v619 = vpop.f32.mrf.mxu0
    %v620 = vadd.f32 %v394, %v619
    %v621 = vpop.f32.mrf.mxu0
    %v622 = vadd.f32 %v396, %v621
    %623 = vmatprep.mubr.f32.mxu0 0.0
    %624 = vmatmul.mubr.f32.gmra.mxu0 %v106
    %v625 = vpop.f32.mrf.mxu0
    %v626 = vadd.f32 %v400, %v625
    %v627 = vpop.f32.mrf.mxu0
    %v628 = vadd.f32 %v402, %v627
    %629 = vmatprep.mubr.f32.mxu0 0.0
    %630 = vmatmul.mubr.f32.gmra.mxu0 %v107
    %v631 = vpop.f32.mrf.mxu0
    %v632 = vadd.f32 %v406, %v631
    %v633 = vpop.f32.mrf.mxu0
    %v634 = vadd.f32 %v408, %v633
    %635 = vmatprep.mubr.f32.mxu0 0.0
    %636 = vmatmul.mubr.f32.gmra.mxu0 %v108
    %v637 = vpop.f32.mrf.mxu0
    %v638 = vadd.f32 %v412, %v637
    %v639 = vpop.f32.mrf.mxu0
    %v640 = vadd.f32 %v414, %v639
    %641 = vmatprep.mubr.f32.mxu0 0.0
    %642 = vmatmul.mubr.f32.gmra.mxu0 %v109
    %v643 = vpop.f32.mrf.mxu0
    %v644 = vadd.f32 %v418, %v643
    %v645 = vpop.f32.mrf.mxu0
    %v646 = vadd.f32 %v420, %v645
    %647 = vmatprep.mubr.f32.mxu0 0.0
    %648 = vmatmul.mubr.f32.gmra.mxu0 %v110
    %v649 = vpop.f32.mrf.mxu0
    %v650 = vadd.f32 %v424, %v649
    %v651 = vpop.f32.mrf.mxu0
    %v652 = vadd.f32 %v426, %v651
    %653 = vmatprep.mubr.f32.mxu0 0.0
    %654 = vmatmul.mubr.f32.gmra.mxu0 %v111
    %v655 = vpop.f32.mrf.mxu0
    %v656 = vadd.f32 %v430, %v655
    %v657 = vpop.f32.mrf.mxu0
    %v658 = vadd.f32 %v432, %v657
    %659 = vdwg.mxu0
    %660 = vmatprep.subr.mxu0 %v175
    %661 = vmatpush1.msra.mxu0 %v174
    %662 = vmatprep.subr.mxu0 %v171
    %663 = vmatpush1.msra.mxu0 %v170
    %664 = vmatprep.subr.mxu0 %v167
    %665 = vmatpush1.msra.mxu0 %v166
    %666 = vmatprep.subr.mxu0 %v163
    %667 = vmatpush1.msra.mxu0 %v162
    %668 = vmatprep.subr.mxu0 %v159
    %669 = vmatpush1.msra.mxu0 %v158
    %670 = vmatprep.subr.mxu0 %v155
    %671 = vmatpush1.msra.mxu0 %v154
    %672 = vmatprep.subr.mxu0 %v151
    %673 = vmatpush1.msra.mxu0 %v150
    %674 = vmatprep.subr.mxu0 %v147
    %675 = vmatpush1.msra.mxu0 %v146
    %676 = vmatprep.subr.mxu0 %v143
    %677 = vmatpush1.msra.mxu0 %v142
    %678 = vmatprep.subr.mxu0 %v139
    %679 = vmatpush1.msra.mxu0 %v138
    %680 = vmatprep.subr.mxu0 %v135
    %681 = vmatpush1.msra.mxu0 %v134
    %682 = vmatprep.subr.mxu0 %v131
    %683 = vmatpush1.msra.mxu0 %v130
    %684 = vmatprep.subr.mxu0 %v127
    %685 = vmatpush1.msra.mxu0 %v126
    %686 = vmatprep.subr.mxu0 %v123
    %687 = vmatpush1.msra.mxu0 %v122
    %688 = vmatprep.subr.mxu0 %v119
    %689 = vmatpush1.msra.mxu0 %v118
    %690 = vmatprep.subr.mxu0 %v115
    %691 = vmatpush1.msra.mxu0 %v114
    %692 = vmatprep.subr.mxu0 0.0
    %693 = vmatpush2.msra.mxu0 0.0
    %694 = vmatprep.subr.mxu0 0.0
    %695 = vmatpush2.msra.mxu0 0.0
    %696 = vmatprep.subr.mxu0 0.0
    %697 = vmatpush2.msra.mxu0 0.0
    %698 = vmatprep.subr.mxu0 0.0
    %699 = vmatpush2.msra.mxu0 0.0
    %700 = vmatprep.subr.mxu0 0.0
    %701 = vmatpush2.msra.mxu0 0.0
    %702 = vmatprep.subr.mxu0 0.0
    %703 = vmatpush2.msra.mxu0 0.0
    %704 = vmatprep.subr.mxu0 0.0
    %705 = vmatpush2.msra.mxu0 0.0
    %706 = vmatprep.subr.mxu0 0.0
    %707 = vmatpush2.msra.mxu0 0.0
    %708 = vmatprep.subr.mxu0 0.0
    %709 = vmatpush2.msra.mxu0 0.0
    %710 = vmatprep.subr.mxu0 0.0
    %711 = vmatpush2.msra.mxu0 0.0
    %712 = vmatprep.subr.mxu0 0.0
    %713 = vmatpush2.msra.mxu0 0.0
    %714 = vmatprep.subr.mxu0 0.0
    %715 = vmatpush2.msra.mxu0 0.0
    %716 = vmatprep.subr.mxu0 0.0
    %717 = vmatpush2.msra.mxu0 0.0
    %718 = vmatprep.subr.mxu0 0.0
    %719 = vmatpush2.msra.mxu0 0.0
    %720 = vmatprep.subr.mxu0 0.0
    %721 = vmatpush2.msra.mxu0 0.0
    %722 = vmatprep.subr.mxu0 0.0
    %723 = vmatpush2.msra.mxu0 0.0
    %724 = vmatprep.mubr.f32.mxu0 0.0
    %725 = vmatmul.mubr.f32.gmra.mxu0 %v104
    %v726 = vpop.f32.mrf.mxu0
    %v727 = vadd.f32 %v501, %v726
    %v728 = vpop.f32.mrf.mxu0
    %v729 = vadd.f32 %v503, %v728
    %730 = vmatprep.mubr.f32.mxu0 0.0
    %731 = vmatmul.mubr.f32.gmra.mxu0 %v105
    %v732 = vpop.f32.mrf.mxu0
    %v733 = vadd.f32 %v507, %v732
    %v734 = vpop.f32.mrf.mxu0
    %v735 = vadd.f32 %v509, %v734
    %736 = vmatprep.mubr.f32.mxu0 0.0
    %737 = vmatmul.mubr.f32.gmra.mxu0 %v106
    %v738 = vpop.f32.mrf.mxu0
    %v739 = vadd.f32 %v513, %v738
    %v740 = vpop.f32.mrf.mxu0
    %v741 = vadd.f32 %v515, %v740
    %742 = vmatprep.mubr.f32.mxu0 0.0
    %743 = vmatmul.mubr.f32.gmra.mxu0 %v107
    %v744 = vpop.f32.mrf.mxu0
    %v745 = vadd.f32 %v519, %v744
    %v746 = vpop.f32.mrf.mxu0
    %v747 = vadd.f32 %v521, %v746
    %748 = vmatprep.mubr.f32.mxu0 0.0
    %749 = vmatmul.mubr.f32.gmra.mxu0 %v108
    %v750 = vpop.f32.mrf.mxu0
    %v751 = vadd.f32 %v525, %v750
    %v752 = vpop.f32.mrf.mxu0
    %v753 = vadd.f32 %v527, %v752
    %754 = vmatprep.mubr.f32.mxu0 0.0
    %755 = vmatmul.mubr.f32.gmra.mxu0 %v109
    %v756 = vpop.f32.mrf.mxu0
    %v757 = vadd.f32 %v531, %v756
    %v758 = vpop.f32.mrf.mxu0
    %v759 = vadd.f32 %v533, %v758
    %760 = vmatprep.mubr.f32.mxu0 0.0
    %761 = vmatmul.mubr.f32.gmra.mxu0 %v110
    %v762 = vpop.f32.mrf.mxu0
    %v763 = vadd.f32 %v537, %v762
    %v764 = vpop.f32.mrf.mxu0
    %v765 = vadd.f32 %v539, %v764
    %766 = vmatprep.mubr.f32.mxu0 0.0
    %767 = vmatmul.mubr.f32.gmra.mxu0 %v111
    %v768 = vpop.f32.mrf.mxu0
    %v769 = vadd.f32 %v543, %v768
    %v770 = vpop.f32.mrf.mxu0
    %v771 = vadd.f32 %v545, %v770
    %772 = vdwg.mxu0
    %v773 = vld [vmem:[%s93] sm:$0xff]
    %v774 = vld [vmem:[%s93 + $0x8] sm:$0xff]
    %v775 = vld [vmem:[%s93 + $0x10] sm:$0xff]
    %v776 = vld [vmem:[%s93 + $0x18] sm:$0xff]
    %v777 = vld [vmem:[%s93 + $0x20] sm:$0xff]
    %v778 = vld [vmem:[%s93 + $0x28] sm:$0xff]
    %v779 = vld [vmem:[%s93 + $0x30] sm:$0xff]
    %v780 = vld [vmem:[%s93 + $0x38] sm:$0xff]
    %s781 = scalar_lea.vmem %s6, 512
    %v782 = vld [vmem:[%s781] sm:$0xff]
    %v783 = vld [vmem:[%s781 + $0x8] sm:$0xff]
    %v784 = vld [vmem:[%s781 + $0x10] sm:$0xff]
    %v785 = vld [vmem:[%s781 + $0x18] sm:$0xff]
    %v786 = vld [vmem:[%s781 + $0x20] sm:$0xff]
    %v787 = vld [vmem:[%s781 + $0x28] sm:$0xff]
    %v788 = vld [vmem:[%s781 + $0x30] sm:$0xff]
    %v789 = vld [vmem:[%s781 + $0x38] sm:$0xff]
    %v790 = vld [vmem:[%s781 + $0x40] sm:$0xff]
    %v791 = vld [vmem:[%s781 + $0x48] sm:$0xff]
    %v792 = vld [vmem:[%s781 + $0x50] sm:$0xff]
    %v793 = vld [vmem:[%s781 + $0x58] sm:$0xff]
    %v794 = vld [vmem:[%s781 + $0x60] sm:$0xff]
    %v795 = vld [vmem:[%s781 + $0x68] sm:$0xff]
    %v796 = vld [vmem:[%s781 + $0x70] sm:$0xff]
    %v797 = vld [vmem:[%s781 + $0x78] sm:$0xff]
    %v798 = vld [vmem:[%s781 + $0x80] sm:$0xff]
    %v799 = vld [vmem:[%s781 + $0x88] sm:$0xff]
    %v800 = vld [vmem:[%s781 + $0x90] sm:$0xff]
    %v801 = vld [vmem:[%s781 + $0x98] sm:$0xff]
    %v802 = vld [vmem:[%s781 + $0xa0] sm:$0xff]
    %v803 = vld [vmem:[%s781 + $0xa8] sm:$0xff]
    %v804 = vld [vmem:[%s781 + $0xb0] sm:$0xff]
    %v805 = vld [vmem:[%s781 + $0xb8] sm:$0xff]
    %v806 = vld [vmem:[%s781 + $0xc0] sm:$0xff]
    %v807 = vld [vmem:[%s781 + $0xc8] sm:$0xff]
    %v808 = vld [vmem:[%s781 + $0xd0] sm:$0xff]
    %v809 = vld [vmem:[%s781 + $0xd8] sm:$0xff]
    %v810 = vld [vmem:[%s781 + $0xe0] sm:$0xff]
    %v811 = vld [vmem:[%s781 + $0xe8] sm:$0xff]
    %v812 = vld [vmem:[%s781 + $0xf0] sm:$0xff]
    %v813 = vld [vmem:[%s781 + $0xf8] sm:$0xff]
    %v814 = vld [vmem:[%s781 + $0x100] sm:$0xff]
    %v815 = vld [vmem:[%s781 + $0x108] sm:$0xff]
    %v816 = vld [vmem:[%s781 + $0x110] sm:$0xff]
    %v817 = vld [vmem:[%s781 + $0x118] sm:$0xff]
    %v818 = vld [vmem:[%s781 + $0x120] sm:$0xff]
    %v819 = vld [vmem:[%s781 + $0x128] sm:$0xff]
    %v820 = vld [vmem:[%s781 + $0x130] sm:$0xff]
    %v821 = vld [vmem:[%s781 + $0x138] sm:$0xff]
    %v822 = vld [vmem:[%s781 + $0x140] sm:$0xff]
    %v823 = vld [vmem:[%s781 + $0x148] sm:$0xff]
    %v824 = vld [vmem:[%s781 + $0x150] sm:$0xff]
    %v825 = vld [vmem:[%s781 + $0x158] sm:$0xff]
    %v826 = vld [vmem:[%s781 + $0x160] sm:$0xff]
    %v827 = vld [vmem:[%s781 + $0x168] sm:$0xff]
    %v828 = vld [vmem:[%s781 + $0x170] sm:$0xff]
    %v829 = vld [vmem:[%s781 + $0x178] sm:$0xff]
    %v830 = vld [vmem:[%s781 + $0x180] sm:$0xff]
    %v831 = vld [vmem:[%s781 + $0x188] sm:$0xff]
    %v832 = vld [vmem:[%s781 + $0x190] sm:$0xff]
    %v833 = vld [vmem:[%s781 + $0x198] sm:$0xff]
    %v834 = vld [vmem:[%s781 + $0x1a0] sm:$0xff]
    %v835 = vld [vmem:[%s781 + $0x1a8] sm:$0xff]
    %v836 = vld [vmem:[%s781 + $0x1b0] sm:$0xff]
    %v837 = vld [vmem:[%s781 + $0x1b8] sm:$0xff]
    %v838 = vld [vmem:[%s781 + $0x1c0] sm:$0xff]
    %v839 = vld [vmem:[%s781 + $0x1c8] sm:$0xff]
    %v840 = vld [vmem:[%s781 + $0x1d0] sm:$0xff]
    %v841 = vld [vmem:[%s781 + $0x1d8] sm:$0xff]
    %v842 = vld [vmem:[%s781 + $0x1e0] sm:$0xff]
    %v843 = vld [vmem:[%s781 + $0x1e8] sm:$0xff]
    %v844 = vld [vmem:[%s781 + $0x1f0] sm:$0xff]
    %v845 = vld [vmem:[%s781 + $0x1f8] sm:$0xff]
    %846 = vmatprep.subr.mxu0 %v843
    %847 = vmatpush1.msra.mxu0 %v842
    %848 = vmatprep.subr.mxu0 %v839
    %849 = vmatpush1.msra.mxu0 %v838
    %850 = vmatprep.subr.mxu0 %v835
    %851 = vmatpush1.msra.mxu0 %v834
    %852 = vmatprep.subr.mxu0 %v831
    %853 = vmatpush1.msra.mxu0 %v830
    %854 = vmatprep.subr.mxu0 %v827
    %855 = vmatpush1.msra.mxu0 %v826
    %856 = vmatprep.subr.mxu0 %v823
    %857 = vmatpush1.msra.mxu0 %v822
    %858 = vmatprep.subr.mxu0 %v819
    %859 = vmatpush1.msra.mxu0 %v818
    %860 = vmatprep.subr.mxu0 %v815
    %861 = vmatpush1.msra.mxu0 %v814
    %862 = vmatprep.subr.mxu0 %v811
    %863 = vmatpush1.msra.mxu0 %v810
    %864 = vmatprep.subr.mxu0 %v807
    %865 = vmatpush1.msra.mxu0 %v806
    %866 = vmatprep.subr.mxu0 %v803
    %867 = vmatpush1.msra.mxu0 %v802
    %868 = vmatprep.subr.mxu0 %v799
    %869 = vmatpush1.msra.mxu0 %v798
    %870 = vmatprep.subr.mxu0 %v795
    %871 = vmatpush1.msra.mxu0 %v794
    %872 = vmatprep.subr.mxu0 %v791
    %873 = vmatpush1.msra.mxu0 %v790
    %874 = vmatprep.subr.mxu0 %v787
    %875 = vmatpush1.msra.mxu0 %v786
    %876 = vmatprep.subr.mxu0 %v783
    %877 = vmatpush1.msra.mxu0 %v782
    %878 = vmatprep.subr.mxu0 0.0
    %879 = vmatpush2.msra.mxu0 0.0
    %880 = vmatprep.subr.mxu0 0.0
    %881 = vmatpush2.msra.mxu0 0.0
    %882 = vmatprep.subr.mxu0 0.0
    %883 = vmatpush2.msra.mxu0 0.0
    %884 = vmatprep.subr.mxu0 0.0
    %885 = vmatpush2.msra.mxu0 0.0
    %886 = vmatprep.subr.mxu0 0.0
    %887 = vmatpush2.msra.mxu0 0.0
    %888 = vmatprep.subr.mxu0 0.0
    %889 = vmatpush2.msra.mxu0 0.0
    %890 = vmatprep.subr.mxu0 0.0
    %891 = vmatpush2.msra.mxu0 0.0
    %892 = vmatprep.subr.mxu0 0.0
    %893 = vmatpush2.msra.mxu0 0.0
    %894 = vmatprep.subr.mxu0 0.0
    %895 = vmatpush2.msra.mxu0 0.0
    %896 = vmatprep.subr.mxu0 0.0
    %897 = vmatpush2.msra.mxu0 0.0
    %898 = vmatprep.subr.mxu0 0.0
    %899 = vmatpush2.msra.mxu0 0.0
    %900 = vmatprep.subr.mxu0 0.0
    %901 = vmatpush2.msra.mxu0 0.0
    %902 = vmatprep.subr.mxu0 0.0
    %903 = vmatpush2.msra.mxu0 0.0
    %904 = vmatprep.subr.mxu0 0.0
    %905 = vmatpush2.msra.mxu0 0.0
    %906 = vmatprep.subr.mxu0 0.0
    %907 = vmatpush2.msra.mxu0 0.0
    %908 = vmatprep.subr.mxu0 0.0
    %909 = vmatpush2.msra.mxu0 0.0
    %910 = vmatprep.mubr.f32.mxu0 0.0
    %911 = vmatmul.mubr.f32.gmra.mxu0 %v773
    %v912 = vpop.f32.mrf.mxu0
    %v913 = vadd.f32 0.0, %v912
    %v914 = vpop.f32.mrf.mxu0
    %v915 = vadd.f32 0.0, %v914
    %916 = vmatprep.mubr.f32.mxu0 0.0
    %917 = vmatmul.mubr.f32.gmra.mxu0 %v774
    %v918 = vpop.f32.mrf.mxu0
    %v919 = vadd.f32 0.0, %v918
    %v920 = vpop.f32.mrf.mxu0
    %v921 = vadd.f32 0.0, %v920
    %922 = vmatprep.mubr.f32.mxu0 0.0
    %923 = vmatmul.mubr.f32.gmra.mxu0 %v775
    %v924 = vpop.f32.mrf.mxu0
    %v925 = vadd.f32 0.0, %v924
    %v926 = vpop.f32.mrf.mxu0
    %v927 = vadd.f32 0.0, %v926
    %928 = vmatprep.mubr.f32.mxu0 0.0
    %929 = vmatmul.mubr.f32.gmra.mxu0 %v776
    %v930 = vpop.f32.mrf.mxu0
    %v931 = vadd.f32 0.0, %v930
    %v932 = vpop.f32.mrf.mxu0
    %v933 = vadd.f32 0.0, %v932
    %934 = vmatprep.mubr.f32.mxu0 0.0
    %935 = vmatmul.mubr.f32.gmra.mxu0 %v777
    %v936 = vpop.f32.mrf.mxu0
    %v937 = vadd.f32 0.0, %v936
    %v938 = vpop.f32.mrf.mxu0
    %v939 = vadd.f32 0.0, %v938
    %940 = vmatprep.mubr.f32.mxu0 0.0
    %941 = vmatmul.mubr.f32.gmra.mxu0 %v778
    %v942 = vpop.f32.mrf.mxu0
    %v943 = vadd.f32 0.0, %v942
    %v944 = vpop.f32.mrf.mxu0
    %v945 = vadd.f32 0.0, %v944
    %946 = vmatprep.mubr.f32.mxu0 0.0
    %947 = vmatmul.mubr.f32.gmra.mxu0 %v779
    %v948 = vpop.f32.mrf.mxu0
    %v949 = vadd.f32 0.0, %v948
    %v950 = vpop.f32.mrf.mxu0
    %v951 = vadd.f32 0.0, %v950
    %952 = vmatprep.mubr.f32.mxu0 0.0
    %953 = vmatmul.mubr.f32.gmra.mxu0 %v780
    %v954 = vpop.f32.mrf.mxu0
    %v955 = vadd.f32 0.0, %v954
    %v956 = vpop.f32.mrf.mxu0
    %v957 = vadd.f32 0.0, %v956
    %958 = vdwg.mxu0
    %959 = vmatprep.subr.mxu0 %v845
    %960 = vmatpush1.msra.mxu0 %v844
    %961 = vmatprep.subr.mxu0 %v841
    %962 = vmatpush1.msra.mxu0 %v840
    %963 = vmatprep.subr.mxu0 %v837
    %964 = vmatpush1.msra.mxu0 %v836
    %965 = vmatprep.subr.mxu0 %v833
    %966 = vmatpush1.msra.mxu0 %v832
    %967 = vmatprep.subr.mxu0 %v829
    %968 = vmatpush1.msra.mxu0 %v828
    %969 = vmatprep.subr.mxu0 %v825
    %970 = vmatpush1.msra.mxu0 %v824
    %971 = vmatprep.subr.mxu0 %v821
    %972 = vmatpush1.msra.mxu0 %v820
    %973 = vmatprep.subr.mxu0 %v817
    %974 = vmatpush1.msra.mxu0 %v816
    %975 = vmatprep.subr.mxu0 %v813
    %976 = vmatpush1.msra.mxu0 %v812
    %977 = vmatprep.subr.mxu0 %v809
    %978 = vmatpush1.msra.mxu0 %v808
    %979 = vmatprep.subr.mxu0 %v805
    %980 = vmatpush1.msra.mxu0 %v804
    %981 = vmatprep.subr.mxu0 %v801
    %982 = vmatpush1.msra.mxu0 %v800
    %983 = vmatprep.subr.mxu0 %v797
    %984 = vmatpush1.msra.mxu0 %v796
    %985 = vmatprep.subr.mxu0 %v793
    %986 = vmatpush1.msra.mxu0 %v792
    %987 = vmatprep.subr.mxu0 %v789
    %988 = vmatpush1.msra.mxu0 %v788
    %989 = vmatprep.subr.mxu0 %v785
    %990 = vmatpush1.msra.mxu0 %v784
    %991 = vmatprep.subr.mxu0 0.0
    %992 = vmatpush2.msra.mxu0 0.0
    %993 = vmatprep.subr.mxu0 0.0
    %994 = vmatpush2.msra.mxu0 0.0
    %995 = vmatprep.subr.mxu0 0.0
    %996 = vmatpush2.msra.mxu0 0.0
    %997 = vmatprep.subr.mxu0 0.0
    %998 = vmatpush2.msra.mxu0 0.0
    %999 = vmatprep.subr.mxu0 0.0
    %1000 = vmatpush2.msra.mxu0 0.0
    %1001 = vmatprep.subr.mxu0 0.0
    %1002 = vmatpush2.msra.mxu0 0.0
    %1003 = vmatprep.subr.mxu0 0.0
    %1004 = vmatpush2.msra.mxu0 0.0
    %1005 = vmatprep.subr.mxu0 0.0
    %1006 = vmatpush2.msra.mxu0 0.0
    %1007 = vmatprep.subr.mxu0 0.0
    %1008 = vmatpush2.msra.mxu0 0.0
    %1009 = vmatprep.subr.mxu0 0.0
    %1010 = vmatpush2.msra.mxu0 0.0
    %1011 = vmatprep.subr.mxu0 0.0
    %1012 = vmatpush2.msra.mxu0 0.0
    %1013 = vmatprep.subr.mxu0 0.0
    %1014 = vmatpush2.msra.mxu0 0.0
    %1015 = vmatprep.subr.mxu0 0.0
    %1016 = vmatpush2.msra.mxu0 0.0
    %1017 = vmatprep.subr.mxu0 0.0
    %1018 = vmatpush2.msra.mxu0 0.0
    %1019 = vmatprep.subr.mxu0 0.0
    %1020 = vmatpush2.msra.mxu0 0.0
    %1021 = vmatprep.subr.mxu0 0.0
    %1022 = vmatpush2.msra.mxu0 0.0
    %1023 = vmatprep.mubr.f32.mxu0 0.0
    %1024 = vmatmul.mubr.f32.gmra.mxu0 %v773
    %v1025 = vpop.f32.mrf.mxu0
    %v1026 = vadd.f32 0.0, %v1025
    %v1027 = vpop.f32.mrf.mxu0
    %v1028 = vadd.f32 0.0, %v1027
    %1029 = vmatprep.mubr.f32.mxu0 0.0
    %1030 = vmatmul.mubr.f32.gmra.mxu0 %v774
    %v1031 = vpop.f32.mrf.mxu0
    %v1032 = vadd.f32 0.0, %v1031
    %v1033 = vpop.f32.mrf.mxu0
    %v1034 = vadd.f32 0.0, %v1033
    %1035 = vmatprep.mubr.f32.mxu0 0.0
    %1036 = vmatmul.mubr.f32.gmra.mxu0 %v775
    %v1037 = vpop.f32.mrf.mxu0
    %v1038 = vadd.f32 0.0, %v1037
    %v1039 = vpop.f32.mrf.mxu0
    %v1040 = vadd.f32 0.0, %v1039
    %1041 = vmatprep.mubr.f32.mxu0 0.0
    %1042 = vmatmul.mubr.f32.gmra.mxu0 %v776
    %v1043 = vpop.f32.mrf.mxu0
    %v1044 = vadd.f32 0.0, %v1043
    %v1045 = vpop.f32.mrf.mxu0
    %v1046 = vadd.f32 0.0, %v1045
    %1047 = vmatprep.mubr.f32.mxu0 0.0
    %1048 = vmatmul.mubr.f32.gmra.mxu0 %v777
    %v1049 = vpop.f32.mrf.mxu0
    %v1050 = vadd.f32 0.0, %v1049
    %v1051 = vpop.f32.mrf.mxu0
    %v1052 = vadd.f32 0.0, %v1051
    %1053 = vmatprep.mubr.f32.mxu0 0.0
    %1054 = vmatmul.mubr.f32.gmra.mxu0 %v778
    %v1055 = vpop.f32.mrf.mxu0
    %v1056 = vadd.f32 0.0, %v1055
    %v1057 = vpop.f32.mrf.mxu0
    %v1058 = vadd.f32 0.0, %v1057
    %1059 = vmatprep.mubr.f32.mxu0 0.0
    %1060 = vmatmul.mubr.f32.gmra.mxu0 %v779
    %v1061 = vpop.f32.mrf.mxu0
    %v1062 = vadd.f32 0.0, %v1061
    %v1063 = vpop.f32.mrf.mxu0
    %v1064 = vadd.f32 0.0, %v1063
    %1065 = vmatprep.mubr.f32.mxu0 0.0
    %1066 = vmatmul.mubr.f32.gmra.mxu0 %v780
    %v1067 = vpop.f32.mrf.mxu0
    %v1068 = vadd.f32 0.0, %v1067
    %v1069 = vpop.f32.mrf.mxu0
    %v1070 = vadd.f32 0.0, %v1069
    %1071 = vdwg.mxu0
    %1072 = vmatprep.subr.mxu0 %v246
    %1073 = vmatpush1.msra.mxu0 %v245
    %1074 = vmatprep.subr.mxu0 %v242
    %1075 = vmatpush1.msra.mxu0 %v241
    %1076 = vmatprep.subr.mxu0 %v238
    %1077 = vmatpush1.msra.mxu0 %v237
    %1078 = vmatprep.subr.mxu0 %v234
    %1079 = vmatpush1.msra.mxu0 %v233
    %1080 = vmatprep.subr.mxu0 %v230
    %1081 = vmatpush1.msra.mxu0 %v229
    %1082 = vmatprep.subr.mxu0 %v226
    %1083 = vmatpush1.msra.mxu0 %v225
    %1084 = vmatprep.subr.mxu0 %v222
    %1085 = vmatpush1.msra.mxu0 %v221
    %1086 = vmatprep.subr.mxu0 %v218
    %1087 = vmatpush1.msra.mxu0 %v217
    %1088 = vmatprep.subr.mxu0 %v214
    %1089 = vmatpush1.msra.mxu0 %v213
    %1090 = vmatprep.subr.mxu0 %v210
    %1091 = vmatpush1.msra.mxu0 %v209
    %1092 = vmatprep.subr.mxu0 %v206
    %1093 = vmatpush1.msra.mxu0 %v205
    %1094 = vmatprep.subr.mxu0 %v202
    %1095 = vmatpush1.msra.mxu0 %v201
    %1096 = vmatprep.subr.mxu0 %v198
    %1097 = vmatpush1.msra.mxu0 %v197
    %1098 = vmatprep.subr.mxu0 %v194
    %1099 = vmatpush1.msra.mxu0 %v193
    %1100 = vmatprep.subr.mxu0 %v190
    %1101 = vmatpush1.msra.mxu0 %v189
    %1102 = vmatprep.subr.mxu0 %v186
    %1103 = vmatpush1.msra.mxu0 %v185
    %1104 = vmatprep.subr.mxu0 0.0
    %1105 = vmatpush2.msra.mxu0 0.0
    %1106 = vmatprep.subr.mxu0 0.0
    %1107 = vmatpush2.msra.mxu0 0.0
    %1108 = vmatprep.subr.mxu0 0.0
    %1109 = vmatpush2.msra.mxu0 0.0
    %1110 = vmatprep.subr.mxu0 0.0
    %1111 = vmatpush2.msra.mxu0 0.0
    %1112 = vmatprep.subr.mxu0 0.0
    %1113 = vmatpush2.msra.mxu0 0.0
    %1114 = vmatprep.subr.mxu0 0.0
    %1115 = vmatpush2.msra.mxu0 0.0
    %1116 = vmatprep.subr.mxu0 0.0
    %1117 = vmatpush2.msra.mxu0 0.0
    %1118 = vmatprep.subr.mxu0 0.0
    %1119 = vmatpush2.msra.mxu0 0.0
    %1120 = vmatprep.subr.mxu0 0.0
    %1121 = vmatpush2.msra.mxu0 0.0
    %1122 = vmatprep.subr.mxu0 0.0
    %1123 = vmatpush2.msra.mxu0 0.0
    %1124 = vmatprep.subr.mxu0 0.0
    %1125 = vmatpush2.msra.mxu0 0.0
    %1126 = vmatprep.subr.mxu0 0.0
    %1127 = vmatpush2.msra.mxu0 0.0
    %1128 = vmatprep.subr.mxu0 0.0
    %1129 = vmatpush2.msra.mxu0 0.0
    %1130 = vmatprep.subr.mxu0 0.0
    %1131 = vmatpush2.msra.mxu0 0.0
    %1132 = vmatprep.subr.mxu0 0.0
    %1133 = vmatpush2.msra.mxu0 0.0
    %1134 = vmatprep.subr.mxu0 0.0
    %1135 = vmatpush2.msra.mxu0 0.0
    %1136 = vmatprep.mubr.f32.mxu0 0.0
    %1137 = vmatmul.mubr.f32.gmra.mxu0 %v176
    %v1138 = vpop.f32.mrf.mxu0
    %v1139 = vadd.f32 %v913, %v1138
    %v1140 = vpop.f32.mrf.mxu0
    %v1141 = vadd.f32 %v915, %v1140
    %1142 = vmatprep.mubr.f32.mxu0 0.0
    %1143 = vmatmul.mubr.f32.gmra.mxu0 %v177
    %v1144 = vpop.f32.mrf.mxu0
    %v1145 = vadd.f32 %v919, %v1144
    %v1146 = vpop.f32.mrf.mxu0
    %v1147 = vadd.f32 %v921, %v1146
    %1148 = vmatprep.mubr.f32.mxu0 0.0
    %1149 = vmatmul.mubr.f32.gmra.mxu0 %v178
    %v1150 = vpop.f32.mrf.mxu0
    %v1151 = vadd.f32 %v925, %v1150
    %v1152 = vpop.f32.mrf.mxu0
    %v1153 = vadd.f32 %v927, %v1152
    %1154 = vmatprep.mubr.f32.mxu0 0.0
    %1155 = vmatmul.mubr.f32.gmra.mxu0 %v179
    %v1156 = vpop.f32.mrf.mxu0
    %v1157 = vadd.f32 %v931, %v1156
    %v1158 = vpop.f32.mrf.mxu0
    %v1159 = vadd.f32 %v933, %v1158
    %1160 = vmatprep.mubr.f32.mxu0 0.0
    %1161 = vmatmul.mubr.f32.gmra.mxu0 %v180
    %v1162 = vpop.f32.mrf.mxu0
    %v1163 = vadd.f32 %v937, %v1162
    %v1164 = vpop.f32.mrf.mxu0
    %v1165 = vadd.f32 %v939, %v1164
    %1166 = vmatprep.mubr.f32.mxu0 0.0
    %1167 = vmatmul.mubr.f32.gmra.mxu0 %v181
    %v1168 = vpop.f32.mrf.mxu0
    %v1169 = vadd.f32 %v943, %v1168
    %v1170 = vpop.f32.mrf.mxu0
    %v1171 = vadd.f32 %v945, %v1170
    %1172 = vmatprep.mubr.f32.mxu0 0.0
    %1173 = vmatmul.mubr.f32.gmra.mxu0 %v182
    %v1174 = vpop.f32.mrf.mxu0
    %v1175 = vadd.f32 %v949, %v1174
    %v1176 = vpop.f32.mrf.mxu0
    %v1177 = vadd.f32 %v951, %v1176
    %1178 = vmatprep.mubr.f32.mxu0 0.0
    %1179 = vmatmul.mubr.f32.gmra.mxu0 %v183
    %v1180 = vpop.f32.mrf.mxu0
    %v1181 = vadd.f32 %v955, %v1180
    %v1182 = vpop.f32.mrf.mxu0
    %v1183 = vadd.f32 %v957, %v1182
    %1184 = vdwg.mxu0
    %1185 = vmatprep.subr.mxu0 %v248
    %1186 = vmatpush1.msra.mxu0 %v247
    %1187 = vmatprep.subr.mxu0 %v244
    %1188 = vmatpush1.msra.mxu0 %v243
    %1189 = vmatprep.subr.mxu0 %v240
    %1190 = vmatpush1.msra.mxu0 %v239
    %1191 = vmatprep.subr.mxu0 %v236
    %1192 = vmatpush1.msra.mxu0 %v235
    %1193 = vmatprep.subr.mxu0 %v232
    %1194 = vmatpush1.msra.mxu0 %v231
    %1195 = vmatprep.subr.mxu0 %v228
    %1196 = vmatpush1.msra.mxu0 %v227
    %1197 = vmatprep.subr.mxu0 %v224
    %1198 = vmatpush1.msra.mxu0 %v223
    %1199 = vmatprep.subr.mxu0 %v220
    %1200 = vmatpush1.msra.mxu0 %v219
    %1201 = vmatprep.subr.mxu0 %v216
    %1202 = vmatpush1.msra.mxu0 %v215
    %1203 = vmatprep.subr.mxu0 %v212
    %1204 = vmatpush1.msra.mxu0 %v211
    %1205 = vmatprep.subr.mxu0 %v208
    %1206 = vmatpush1.msra.mxu0 %v207
    %1207 = vmatprep.subr.mxu0 %v204
    %1208 = vmatpush1.msra.mxu0 %v203
    %1209 = vmatprep.subr.mxu0 %v200
    %1210 = vmatpush1.msra.mxu0 %v199
    %1211 = vmatprep.subr.mxu0 %v196
    %1212 = vmatpush1.msra.mxu0 %v195
    %1213 = vmatprep.subr.mxu0 %v192
    %1214 = vmatpush1.msra.mxu0 %v191
    %1215 = vmatprep.subr.mxu0 %v188
    %1216 = vmatpush1.msra.mxu0 %v187
    %1217 = vmatprep.subr.mxu0 0.0
    %1218 = vmatpush2.msra.mxu0 0.0
    %1219 = vmatprep.subr.mxu0 0.0
    %1220 = vmatpush2.msra.mxu0 0.0
    %1221 = vmatprep.subr.mxu0 0.0
    %1222 = vmatpush2.msra.mxu0 0.0
    %1223 = vmatprep.subr.mxu0 0.0
    %1224 = vmatpush2.msra.mxu0 0.0
    %1225 = vmatprep.subr.mxu0 0.0
    %1226 = vmatpush2.msra.mxu0 0.0
    %1227 = vmatprep.subr.mxu0 0.0
    %1228 = vmatpush2.msra.mxu0 0.0
    %1229 = vmatprep.subr.mxu0 0.0
    %1230 = vmatpush2.msra.mxu0 0.0
    %1231 = vmatprep.subr.mxu0 0.0
    %1232 = vmatpush2.msra.mxu0 0.0
    %1233 = vmatprep.subr.mxu0 0.0
    %1234 = vmatpush2.msra.mxu0 0.0
    %1235 = vmatprep.subr.mxu0 0.0
    %1236 = vmatpush2.msra.mxu0 0.0
    %1237 = vmatprep.subr.mxu0 0.0
    %1238 = vmatpush2.msra.mxu0 0.0
    %1239 = vmatprep.subr.mxu0 0.0
    %1240 = vmatpush2.msra.mxu0 0.0
    %1241 = vmatprep.subr.mxu0 0.0
    %1242 = vmatpush2.msra.mxu0 0.0
    %1243 = vmatprep.subr.mxu0 0.0
    %1244 = vmatpush2.msra.mxu0 0.0
    %1245 = vmatprep.subr.mxu0 0.0
    %1246 = vmatpush2.msra.mxu0 0.0
    %1247 = vmatprep.subr.mxu0 0.0
    %1248 = vmatpush2.msra.mxu0 0.0
    %1249 = vmatprep.mubr.f32.mxu0 0.0
    %1250 = vmatmul.mubr.f32.gmra.mxu0 %v176
    %v1251 = vpop.f32.mrf.mxu0
    %v1252 = vadd.f32 %v1026, %v1251
    %v1253 = vpop.f32.mrf.mxu0
    %v1254 = vadd.f32 %v1028, %v1253
    %1255 = vmatprep.mubr.f32.mxu0 0.0
    %1256 = vmatmul.mubr.f32.gmra.mxu0 %v177
    %v1257 = vpop.f32.mrf.mxu0
    %v1258 = vadd.f32 %v1032, %v1257
    %v1259 = vpop.f32.mrf.mxu0
    %v1260 = vadd.f32 %v1034, %v1259
    %1261 = vmatprep.mubr.f32.mxu0 0.0
    %1262 = vmatmul.mubr.f32.gmra.mxu0 %v178
    %v1263 = vpop.f32.mrf.mxu0
    %v1264 = vadd.f32 %v1038, %v1263
    %v1265 = vpop.f32.mrf.mxu0
    %v1266 = vadd.f32 %v1040, %v1265
    %1267 = vmatprep.mubr.f32.mxu0 0.0
    %1268 = vmatmul.mubr.f32.gmra.mxu0 %v179
    %v1269 = vpop.f32.mrf.mxu0
    %v1270 = vadd.f32 %v1044, %v1269
    %v1271 = vpop.f32.mrf.mxu0
    %v1272 = vadd.f32 %v1046, %v1271
    %1273 = vmatprep.mubr.f32.mxu0 0.0
    %1274 = vmatmul.mubr.f32.gmra.mxu0 %v180
    %v1275 = vpop.f32.mrf.mxu0
    %v1276 = vadd.f32 %v1050, %v1275
    %v1277 = vpop.f32.mrf.mxu0
    %v1278 = vadd.f32 %v1052, %v1277
    %1279 = vmatprep.mubr.f32.mxu0 0.0
    %1280 = vmatmul.mubr.f32.gmra.mxu0 %v181
    %v1281 = vpop.f32.mrf.mxu0
    %v1282 = vadd.f32 %v1056, %v1281
    %v1283 = vpop.f32.mrf.mxu0
    %v1284 = vadd.f32 %v1058, %v1283
    %1285 = vmatprep.mubr.f32.mxu0 0.0
    %1286 = vmatmul.mubr.f32.gmra.mxu0 %v182
    %v1287 = vpop.f32.mrf.mxu0
    %v1288 = vadd.f32 %v1062, %v1287
    %v1289 = vpop.f32.mrf.mxu0
    %v1290 = vadd.f32 %v1064, %v1289
    %1291 = vmatprep.mubr.f32.mxu0 0.0
    %1292 = vmatmul.mubr.f32.gmra.mxu0 %v183
    %v1293 = vpop.f32.mrf.mxu0
    %v1294 = vadd.f32 %v1068, %v1293
    %v1295 = vpop.f32.mrf.mxu0
    %v1296 = vadd.f32 %v1070, %v1295
    %1297 = vdwg.mxu0
    %v1298 = vld [vmem:[%s8] sm:$0xf]
    %v1300 = vlaneseq
    %v1301 = vshrl.u32 %v1300, 7
    %v1302 = vsub.s32 0, %v1301
    %v1303 = vrot.slane %v1298, %v1302
    %v1304 = vlaneseq
    %v1305 = vshrl.u32 %v1304, 7
    %v1306 = vsub.s32 1, %v1305
    %v1307 = vrot.slane %v1298, %v1306
    %v1308 = vlaneseq
    %v1309 = vshrl.u32 %v1308, 7
    %v1310 = vsub.s32 2, %v1309
    %v1311 = vrot.slane %v1298, %v1310
    %v1312 = vlaneseq
    %v1313 = vshrl.u32 %v1312, 7
    %v1314 = vsub.s32 3, %v1313
    %v1315 = vrot.slane %v1298, %v1314
    %v1320 = vadd.f32 %v614, %v1303
    %v1321 = vadd.f32 %v616, %v1307
    %v1322 = vadd.f32 %v727, %v1311
    %v1323 = vadd.f32 %v729, %v1315
    %v1324 = vadd.f32 %v620, %v1303
    %v1325 = vadd.f32 %v622, %v1307
    %v1326 = vadd.f32 %v733, %v1311
    %v1327 = vadd.f32 %v735, %v1315
    %v1328 = vadd.f32 %v626, %v1303
    %v1329 = vadd.f32 %v628, %v1307
    %v1330 = vadd.f32 %v739, %v1311
    %v1331 = vadd.f32 %v741, %v1315
    %v1332 = vadd.f32 %v632, %v1303
    %v1333 = vadd.f32 %v634, %v1307
    %v1334 = vadd.f32 %v745, %v1311
    %v1335 = vadd.f32 %v747, %v1315
    %v1336 = vadd.f32 %v638, %v1303
    %v1337 = vadd.f32 %v640, %v1307
    %v1338 = vadd.f32 %v751, %v1311
    %v1339 = vadd.f32 %v753, %v1315
    %v1340 = vadd.f32 %v644, %v1303
    %v1341 = vadd.f32 %v646, %v1307
    %v1342 = vadd.f32 %v757, %v1311
    %v1343 = vadd.f32 %v759, %v1315
    %v1344 = vadd.f32 %v650, %v1303
    %v1345 = vadd.f32 %v652, %v1307
    %v1346 = vadd.f32 %v763, %v1311
    %v1347 = vadd.f32 %v765, %v1315
    %v1348 = vadd.f32 %v656, %v1303
    %v1349 = vadd.f32 %v658, %v1307
    %v1350 = vadd.f32 %v769, %v1311
    %v1351 = vadd.f32 %v771, %v1315
    %1352 = vst [vmem:[#allocation2] sm:$0xff] %v1320
    %1353 = vst [vmem:[#allocation2 + $0x8] sm:$0xff] %v1321
    %1354 = vst [vmem:[#allocation2 + $0x10] sm:$0xff] %v1322
    %1355 = vst [vmem:[#allocation2 + $0x18] sm:$0xff] %v1323
    %1356 = vst [vmem:[#allocation2 + $0x20] sm:$0xff] %v1324
    %1357 = vst [vmem:[#allocation2 + $0x28] sm:$0xff] %v1325
    %1358 = vst [vmem:[#allocation2 + $0x30] sm:$0xff] %v1326
    %1359 = vst [vmem:[#allocation2 + $0x38] sm:$0xff] %v1327
    %1360 = vst [vmem:[#allocation2 + $0x40] sm:$0xff] %v1328
    %1361 = vst [vmem:[#allocation2 + $0x48] sm:$0xff] %v1329
    %1362 = vst [vmem:[#allocation2 + $0x50] sm:$0xff] %v1330
    %1363 = vst [vmem:[#allocation2 + $0x58] sm:$0xff] %v1331
    %1364 = vst [vmem:[#allocation2 + $0x60] sm:$0xff] %v1332
    %1365 = vst [vmem:[#allocation2 + $0x68] sm:$0xff] %v1333
    %1366 = vst [vmem:[#allocation2 + $0x70] sm:$0xff] %v1334
    %1367 = vst [vmem:[#allocation2 + $0x78] sm:$0xff] %v1335
    %1368 = vst [vmem:[#allocation2 + $0x80] sm:$0xff] %v1336
    %1369 = vst [vmem:[#allocation2 + $0x88] sm:$0xff] %v1337
    %1370 = vst [vmem:[#allocation2 + $0x90] sm:$0xff] %v1338
    %1371 = vst [vmem:[#allocation2 + $0x98] sm:$0xff] %v1339
    %1372 = vst [vmem:[#allocation2 + $0xa0] sm:$0xff] %v1340
    %1373 = vst [vmem:[#allocation2 + $0xa8] sm:$0xff] %v1341
    %1374 = vst [vmem:[#allocation2 + $0xb0] sm:$0xff] %v1342
    %1375 = vst [vmem:[#allocation2 + $0xb8] sm:$0xff] %v1343
    %1376 = vst [vmem:[#allocation2 + $0xc0] sm:$0xff] %v1344
    %1377 = vst [vmem:[#allocation2 + $0xc8] sm:$0xff] %v1345
    %1378 = vst [vmem:[#allocation2 + $0xd0] sm:$0xff] %v1346
    %1379 = vst [vmem:[#allocation2 + $0xd8] sm:$0xff] %v1347
    %1380 = vst [vmem:[#allocation2 + $0xe0] sm:$0xff] %v1348
    %1381 = vst [vmem:[#allocation2 + $0xe8] sm:$0xff] %v1349
    %1382 = vst [vmem:[#allocation2 + $0xf0] sm:$0xff] %v1350
    %1383 = vst [vmem:[#allocation2 + $0xf8] sm:$0xff] %v1351
    %s1384 = scalar_lea.vmem %s8, 4
    %v1385 = vld [vmem:[%s1384] sm:$0xf]
    %v1387 = vlaneseq
    %v1388 = vshrl.u32 %v1387, 7
    %v1389 = vsub.s32 0, %v1388
    %v1390 = vrot.slane %v1385, %v1389
    %v1391 = vlaneseq
    %v1392 = vshrl.u32 %v1391, 7
    %v1393 = vsub.s32 1, %v1392
    %v1394 = vrot.slane %v1385, %v1393
    %v1395 = vlaneseq
    %v1396 = vshrl.u32 %v1395, 7
    %v1397 = vsub.s32 2, %v1396
    %v1398 = vrot.slane %v1385, %v1397
    %v1399 = vlaneseq
    %v1400 = vshrl.u32 %v1399, 7
    %v1401 = vsub.s32 3, %v1400
    %v1402 = vrot.slane %v1385, %v1401
    %v1407 = vadd.f32 %v1139, %v1390
    %v1408 = vadd.f32 %v1141, %v1394
    %v1409 = vadd.f32 %v1252, %v1398
    %v1410 = vadd.f32 %v1254, %v1402
    %v1411 = vadd.f32 %v1145, %v1390
    %v1412 = vadd.f32 %v1147, %v1394
    %v1413 = vadd.f32 %v1258, %v1398
    %v1414 = vadd.f32 %v1260, %v1402
    %v1415 = vadd.f32 %v1151, %v1390
    %v1416 = vadd.f32 %v1153, %v1394
    %v1417 = vadd.f32 %v1264, %v1398
    %v1418 = vadd.f32 %v1266, %v1402
    %v1419 = vadd.f32 %v1157, %v1390
    %v1420 = vadd.f32 %v1159, %v1394
    %v1421 = vadd.f32 %v1270, %v1398
    %v1422 = vadd.f32 %v1272, %v1402
    %v1423 = vadd.f32 %v1163, %v1390
    %v1424 = vadd.f32 %v1165, %v1394
    %v1425 = vadd.f32 %v1276, %v1398
    %v1426 = vadd.f32 %v1278, %v1402
    %v1427 = vadd.f32 %v1169, %v1390
    %v1428 = vadd.f32 %v1171, %v1394
    %v1429 = vadd.f32 %v1282, %v1398
    %v1430 = vadd.f32 %v1284, %v1402
    %v1431 = vadd.f32 %v1175, %v1390
    %v1432 = vadd.f32 %v1177, %v1394
    %v1433 = vadd.f32 %v1288, %v1398
    %v1434 = vadd.f32 %v1290, %v1402
    %v1435 = vadd.f32 %v1181, %v1390
    %v1436 = vadd.f32 %v1183, %v1394
    %v1437 = vadd.f32 %v1294, %v1398
    %v1438 = vadd.f32 %v1296, %v1402
    %1439 = vst [vmem:[#allocation3] sm:$0xff] %v1407
    %1440 = vst [vmem:[#allocation3 + $0x8] sm:$0xff] %v1408
    %1441 = vst [vmem:[#allocation3 + $0x10] sm:$0xff] %v1409
    %1442 = vst [vmem:[#allocation3 + $0x18] sm:$0xff] %v1410
    %1443 = vst [vmem:[#allocation3 + $0x20] sm:$0xff] %v1411
    %1444 = vst [vmem:[#allocation3 + $0x28] sm:$0xff] %v1412
    %1445 = vst [vmem:[#allocation3 + $0x30] sm:$0xff] %v1413
    %1446 = vst [vmem:[#allocation3 + $0x38] sm:$0xff] %v1414
    %1447 = vst [vmem:[#allocation3 + $0x40] sm:$0xff] %v1415
    %1448 = vst [vmem:[#allocation3 + $0x48] sm:$0xff] %v1416
    %1449 = vst [vmem:[#allocation3 + $0x50] sm:$0xff] %v1417
    %1450 = vst [vmem:[#allocation3 + $0x58] sm:$0xff] %v1418
    %1451 = vst [vmem:[#allocation3 + $0x60] sm:$0xff] %v1419
    %1452 = vst [vmem:[#allocation3 + $0x68] sm:$0xff] %v1420
    %1453 = vst [vmem:[#allocation3 + $0x70] sm:$0xff] %v1421
    %1454 = vst [vmem:[#allocation3 + $0x78] sm:$0xff] %v1422
    %1455 = vst [vmem:[#allocation3 + $0x80] sm:$0xff] %v1423
    %1456 = vst [vmem:[#allocation3 + $0x88] sm:$0xff] %v1424
    %1457 = vst [vmem:[#allocation3 + $0x90] sm:$0xff] %v1425
    %1458 = vst [vmem:[#allocation3 + $0x98] sm:$0xff] %v1426
    %1459 = vst [vmem:[#allocation3 + $0xa0] sm:$0xff] %v1427
    %1460 = vst [vmem:[#allocation3 + $0xa8] sm:$0xff] %v1428
    %1461 = vst [vmem:[#allocation3 + $0xb0] sm:$0xff] %v1429
    %1462 = vst [vmem:[#allocation3 + $0xb8] sm:$0xff] %v1430
    %1463 = vst [vmem:[#allocation3 + $0xc0] sm:$0xff] %v1431
    %1464 = vst [vmem:[#allocation3 + $0xc8] sm:$0xff] %v1432
    %1465 = vst [vmem:[#allocation3 + $0xd0] sm:$0xff] %v1433
    %1466 = vst [vmem:[#allocation3 + $0xd8] sm:$0xff] %v1434
    %1467 = vst [vmem:[#allocation3 + $0xe0] sm:$0xff] %v1435
    %1468 = vst [vmem:[#allocation3 + $0xe8] sm:$0xff] %v1436
    %1469 = vst [vmem:[#allocation3 + $0xf0] sm:$0xff] %v1437
    %1470 = vst [vmem:[#allocation3 + $0xf8] sm:$0xff] %v1438
    %v1471 = vld [vmem:[%s0] sm:$0xff]
    %s1472 = smul.u32 0, 8
    loop: start=0, step=1, limit=8
    $region54: #{_lambda_.3} parent=1 // loop_pre_header
      _
    $region55: #{_lambda_.3} parent=1 // loop_header
      %s1474 = sphi 0, %s1478
      %p1475 = scmp.ge.s32.totalorder %s1474, 8
    $region56: #{_lambda_.3} parent=1 // loop_header_branch
      %1477 = sbr.rel (%p1475) target = $region60
    $region57: #{_lambda_.3} parent=1 // loop_body
      %s1479 = sadd.s32 %s1472, %s1474
      %s1480 = smul.u32 %s1474, 8
      %v1481 = vld [vmem:[#allocation4] sm:$0xff]
      %s1482 = sshra.s32 %s1480, 3
      %s1483 = sand.u32 %s1480, 7
      %s1484 = smul.u32 %s1482, 4
      %s1485 = smul.addr %s1484, 8
      %s1486 = scalar_lea.vmem [#allocation2], %s1485
      %v1487 = vld [vmem:[%s1486] sm:$0xff]
      %v1488 = vld [vmem:[%s1486 + $0x8] sm:$0xff]
      %v1489 = vld [vmem:[%s1486 + $0x10] sm:$0xff]
      %v1490 = vld [vmem:[%s1486 + $0x18] sm:$0xff]
      %v1491 = vld [vmem:[%s7] sm:$0xff]
      %v1492 = vld [vmem:[%s7 + $0x8] sm:$0xff]
      %v1493 = vld [vmem:[%s7 + $0x10] sm:$0xff]
      %v1494 = vld [vmem:[%s7 + $0x18] sm:$0xff]
      %v1495 = vld [vmem:[%s7 + $0x20] sm:$0xff]
      %v1496 = vld [vmem:[%s7 + $0x28] sm:$0xff]
      %v1497 = vld [vmem:[%s7 + $0x30] sm:$0xff]
      %v1498 = vld [vmem:[%s7 + $0x38] sm:$0xff]
      %v1499 = vld [vmem:[%s7 + $0x40] sm:$0xff]
      %v1500 = vld [vmem:[%s7 + $0x48] sm:$0xff]
      %v1501 = vld [vmem:[%s7 + $0x50] sm:$0xff]
      %v1502 = vld [vmem:[%s7 + $0x58] sm:$0xff]
      %v1503 = vld [vmem:[%s7 + $0x60] sm:$0xff]
      %v1504 = vld [vmem:[%s7 + $0x68] sm:$0xff]
      %v1505 = vld [vmem:[%s7 + $0x70] sm:$0xff]
      %v1506 = vld [vmem:[%s7 + $0x78] sm:$0xff]
      %v1507 = vld [vmem:[%s7 + $0x80] sm:$0xff]
      %v1508 = vld [vmem:[%s7 + $0x88] sm:$0xff]
      %v1509 = vld [vmem:[%s7 + $0x90] sm:$0xff]
      %v1510 = vld [vmem:[%s7 + $0x98] sm:$0xff]
      %v1511 = vld [vmem:[%s7 + $0xa0] sm:$0xff]
      %v1512 = vld [vmem:[%s7 + $0xa8] sm:$0xff]
      %v1513 = vld [vmem:[%s7 + $0xb0] sm:$0xff]
      %v1514 = vld [vmem:[%s7 + $0xb8] sm:$0xff]
      %v1515 = vld [vmem:[%s7 + $0xc0] sm:$0xff]
      %v1516 = vld [vmem:[%s7 + $0xc8] sm:$0xff]
      %v1517 = vld [vmem:[%s7 + $0xd0] sm:$0xff]
      %v1518 = vld [vmem:[%s7 + $0xd8] sm:$0xff]
      %v1519 = vld [vmem:[%s7 + $0xe0] sm:$0xff]
      %v1520 = vld [vmem:[%s7 + $0xe8] sm:$0xff]
      %v1521 = vld [vmem:[%s7 + $0xf0] sm:$0xff]
      %v1522 = vld [vmem:[%s7 + $0xf8] sm:$0xff]
      %v1523 = vld [vmem:[%s7 + $0x100] sm:$0xff]
      %v1524 = vld [vmem:[%s7 + $0x108] sm:$0xff]
      %v1525 = vld [vmem:[%s7 + $0x110] sm:$0xff]
      %v1526 = vld [vmem:[%s7 + $0x118] sm:$0xff]
      %v1527 = vld [vmem:[%s7 + $0x120] sm:$0xff]
      %v1528 = vld [vmem:[%s7 + $0x128] sm:$0xff]
      %v1529 = vld [vmem:[%s7 + $0x130] sm:$0xff]
      %v1530 = vld [vmem:[%s7 + $0x138] sm:$0xff]
      %v1531 = vld [vmem:[%s7 + $0x140] sm:$0xff]
      %v1532 = vld [vmem:[%s7 + $0x148] sm:$0xff]
      %v1533 = vld [vmem:[%s7 + $0x150] sm:$0xff]
      %v1534 = vld [vmem:[%s7 + $0x158] sm:$0xff]
      %v1535 = vld [vmem:[%s7 + $0x160] sm:$0xff]
      %v1536 = vld [vmem:[%s7 + $0x168] sm:$0xff]
      %v1537 = vld [vmem:[%s7 + $0x170] sm:$0xff]
      %v1538 = vld [vmem:[%s7 + $0x178] sm:$0xff]
      %v1539 = vld [vmem:[%s7 + $0x180] sm:$0xff]
      %v1540 = vld [vmem:[%s7 + $0x188] sm:$0xff]
      %v1541 = vld [vmem:[%s7 + $0x190] sm:$0xff]
      %v1542 = vld [vmem:[%s7 + $0x198] sm:$0xff]
      %v1543 = vld [vmem:[%s7 + $0x1a0] sm:$0xff]
      %v1544 = vld [vmem:[%s7 + $0x1a8] sm:$0xff]
      %v1545 = vld [vmem:[%s7 + $0x1b0] sm:$0xff]
      %v1546 = vld [vmem:[%s7 + $0x1b8] sm:$0xff]
      %v1547 = vld [vmem:[%s7 + $0x1c0] sm:$0xff]
      %v1548 = vld [vmem:[%s7 + $0x1c8] sm:$0xff]
      %v1549 = vld [vmem:[%s7 + $0x1d0] sm:$0xff]
      %v1550 = vld [vmem:[%s7 + $0x1d8] sm:$0xff]
      %v1551 = vld [vmem:[%s7 + $0x1e0] sm:$0xff]
      %v1552 = vld [vmem:[%s7 + $0x1e8] sm:$0xff]
      %v1553 = vld [vmem:[%s7 + $0x1f0] sm:$0xff]
      %v1554 = vld [vmem:[%s7 + $0x1f8] sm:$0xff]
      %1555 = vmatprep.subr.mxu0 %v1552
      %1556 = vmatpush1.msra.mxu0 %v1551
      %1557 = vmatprep.subr.mxu0 %v1548
      %1558 = vmatpush1.msra.mxu0 %v1547
      %1559 = vmatprep.subr.mxu0 %v1544
      %1560 = vmatpush1.msra.mxu0 %v1543
      %1561 = vmatprep.subr.mxu0 %v1540
      %1562 = vmatpush1.msra.mxu0 %v1539
      %1563 = vmatprep.subr.mxu0 %v1536
      %1564 = vmatpush1.msra.mxu0 %v1535
      %1565 = vmatprep.subr.mxu0 %v1532
      %1566 = vmatpush1.msra.mxu0 %v1531
      %1567 = vmatprep.subr.mxu0 %v1528
      %1568 = vmatpush1.msra.mxu0 %v1527
      %1569 = vmatprep.subr.mxu0 %v1524
      %1570 = vmatpush1.msra.mxu0 %v1523
      %1571 = vmatprep.subr.mxu0 %v1520
      %1572 = vmatpush1.msra.mxu0 %v1519
      %1573 = vmatprep.subr.mxu0 %v1516
      %1574 = vmatpush1.msra.mxu0 %v1515
      %1575 = vmatprep.subr.mxu0 %v1512
      %1576 = vmatpush1.msra.mxu0 %v1511
      %1577 = vmatprep.subr.mxu0 %v1508
      %1578 = vmatpush1.msra.mxu0 %v1507
      %1579 = vmatprep.subr.mxu0 %v1504
      %1580 = vmatpush1.msra.mxu0 %v1503
      %1581 = vmatprep.subr.mxu0 %v1500
      %1582 = vmatpush1.msra.mxu0 %v1499
      %1583 = vmatprep.subr.mxu0 %v1496
      %1584 = vmatpush1.msra.mxu0 %v1495
      %1585 = vmatprep.subr.mxu0 %v1492
      %1586 = vmatpush1.msra.mxu0 %v1491
      %1587 = vmatprep.subr.mxu0 0.0
      %1588 = vmatpush2.msra.mxu0 0.0
      %1589 = vmatprep.subr.mxu0 0.0
      %1590 = vmatpush2.msra.mxu0 0.0
      %1591 = vmatprep.subr.mxu0 0.0
      %1592 = vmatpush2.msra.mxu0 0.0
      %1593 = vmatprep.subr.mxu0 0.0
      %1594 = vmatpush2.msra.mxu0 0.0
      %1595 = vmatprep.subr.mxu0 0.0
      %1596 = vmatpush2.msra.mxu0 0.0
      %1597 = vmatprep.subr.mxu0 0.0
      %1598 = vmatpush2.msra.mxu0 0.0
      %1599 = vmatprep.subr.mxu0 0.0
      %1600 = vmatpush2.msra.mxu0 0.0
      %1601 = vmatprep.subr.mxu0 0.0
      %1602 = vmatpush2.msra.mxu0 0.0
      %1603 = vmatprep.subr.mxu0 0.0
      %1604 = vmatpush2.msra.mxu0 0.0
      %1605 = vmatprep.subr.mxu0 0.0
      %1606 = vmatpush2.msra.mxu0 0.0
      %1607 = vmatprep.subr.mxu0 0.0
      %1608 = vmatpush2.msra.mxu0 0.0
      %1609 = vmatprep.subr.mxu0 0.0
      %1610 = vmatpush2.msra.mxu0 0.0
      %1611 = vmatprep.subr.mxu0 0.0
      %1612 = vmatpush2.msra.mxu0 0.0
      %1613 = vmatprep.subr.mxu0 0.0
      %1614 = vmatpush2.msra.mxu0 0.0
      %1615 = vmatprep.subr.mxu0 0.0
      %1616 = vmatpush2.msra.mxu0 0.0
      %1617 = vmatprep.subr.mxu0 0.0
      %1618 = vmatpush2.msra.mxu0 0.0
      %1619 = vmatprep.mubr.f32.mxu0 0.0
      %1620 = vmatmul.mubr.f32.gmra.mxu0 %v1481
      %v1621 = vpop.f32.mrf.mxu0
      %v1622 = vadd.f32 0.0, %v1621
      %v1623 = vpop.f32.mrf.mxu0
      %v1624 = vadd.f32 0.0, %v1623
      %1625 = vdwg.mxu0
      %1626 = vmatprep.subr.mxu0 %v1554
      %1627 = vmatpush1.msra.mxu0 %v1553
      %1628 = vmatprep.subr.mxu0 %v1550
      %1629 = vmatpush1.msra.mxu0 %v1549
      %1630 = vmatprep.subr.mxu0 %v1546
      %1631 = vmatpush1.msra.mxu0 %v1545
      %1632 = vmatprep.subr.mxu0 %v1542
      %1633 = vmatpush1.msra.mxu0 %v1541
      %1634 = vmatprep.subr.mxu0 %v1538
      %1635 = vmatpush1.msra.mxu0 %v1537
      %1636 = vmatprep.subr.mxu0 %v1534
      %1637 = vmatpush1.msra.mxu0 %v1533
      %1638 = vmatprep.subr.mxu0 %v1530
      %1639 = vmatpush1.msra.mxu0 %v1529
      %1640 = vmatprep.subr.mxu0 %v1526
      %1641 = vmatpush1.msra.mxu0 %v1525
      %1642 = vmatprep.subr.mxu0 %v1522
      %1643 = vmatpush1.msra.mxu0 %v1521
      %1644 = vmatprep.subr.mxu0 %v1518
      %1645 = vmatpush1.msra.mxu0 %v1517
      %1646 = vmatprep.subr.mxu0 %v1514
      %1647 = vmatpush1.msra.mxu0 %v1513
      %1648 = vmatprep.subr.mxu0 %v1510
      %1649 = vmatpush1.msra.mxu0 %v1509
      %1650 = vmatprep.subr.mxu0 %v1506
      %1651 = vmatpush1.msra.mxu0 %v1505
      %1652 = vmatprep.subr.mxu0 %v1502
      %1653 = vmatpush1.msra.mxu0 %v1501
      %1654 = vmatprep.subr.mxu0 %v1498
      %1655 = vmatpush1.msra.mxu0 %v1497
      %1656 = vmatprep.subr.mxu0 %v1494
      %1657 = vmatpush1.msra.mxu0 %v1493
      %1658 = vmatprep.subr.mxu0 0.0
      %1659 = vmatpush2.msra.mxu0 0.0
      %1660 = vmatprep.subr.mxu0 0.0
      %1661 = vmatpush2.msra.mxu0 0.0
      %1662 = vmatprep.subr.mxu0 0.0
      %1663 = vmatpush2.msra.mxu0 0.0
      %1664 = vmatprep.subr.mxu0 0.0
      %1665 = vmatpush2.msra.mxu0 0.0
      %1666 = vmatprep.subr.mxu0 0.0
      %1667 = vmatpush2.msra.mxu0 0.0
      %1668 = vmatprep.subr.mxu0 0.0
      %1669 = vmatpush2.msra.mxu0 0.0
      %1670 = vmatprep.subr.mxu0 0.0
      %1671 = vmatpush2.msra.mxu0 0.0
      %1672 = vmatprep.subr.mxu0 0.0
      %1673 = vmatpush2.msra.mxu0 0.0
      %1674 = vmatprep.subr.mxu0 0.0
      %1675 = vmatpush2.msra.mxu0 0.0
      %1676 = vmatprep.subr.mxu0 0.0
      %1677 = vmatpush2.msra.mxu0 0.0
      %1678 = vmatprep.subr.mxu0 0.0
      %1679 = vmatpush2.msra.mxu0 0.0
      %1680 = vmatprep.subr.mxu0 0.0
      %1681 = vmatpush2.msra.mxu0 0.0
      %1682 = vmatprep.subr.mxu0 0.0
      %1683 = vmatpush2.msra.mxu0 0.0
      %1684 = vmatprep.subr.mxu0 0.0
      %1685 = vmatpush2.msra.mxu0 0.0
      %1686 = vmatprep.subr.mxu0 0.0
      %1687 = vmatpush2.msra.mxu0 0.0
      %1688 = vmatprep.subr.mxu0 0.0
      %1689 = vmatpush2.msra.mxu0 0.0
      %1690 = vmatprep.mubr.f32.mxu0 0.0
      %1691 = vmatmul.mubr.f32.gmra.mxu0 %v1481
      %v1692 = vpop.f32.mrf.mxu0
      %v1693 = vadd.f32 0.0, %v1692
      %v1694 = vpop.f32.mrf.mxu0
      %v1695 = vadd.f32 0.0, %v1694
      %1696 = vdwg.mxu0
      %v1697 = vadd.f32 %v1487, %v1622
      %v1698 = vadd.f32 %v1488, %v1624
      %v1699 = vadd.f32 %v1489, %v1693
      %v1700 = vadd.f32 %v1490, %v1695
      %v1701 = vxor.u32 %v1697, 2147483648
      %v1702 = vmul.f32 %v1701, 1.442695
      %v1703 = vpow.pop %v1702
      %v1704 = vadd.f32 %v1703, 1.0
      %v1705 = vrcp.pop %v1704
      %v1706 = vmul.f32 1.0, %v1705
      %v1707 = vxor.u32 %v1698, 2147483648
      %v1708 = vmul.f32 %v1707, 1.442695
      %v1709 = vpow.pop %v1708
      %v1710 = vadd.f32 %v1709, 1.0
      %v1711 = vrcp.pop %v1710
      %v1712 = vmul.f32 1.0, %v1711
      %v1713 = vtanh.pop %v1699
      %v1714 = vxor.u32 %v1700, 2147483648
      %v1715 = vmul.f32 %v1714, 1.442695
      %v1716 = vpow.pop %v1715
      %v1717 = vadd.f32 %v1716, 1.0
      %v1718 = vrcp.pop %v1717
      %v1719 = vmul.f32 1.0, %v1718
      %v1720 = vld [vmem:[#allocation5] sm:$0xff]
      %v1721 = vmul.f32 %v1712, %v1720
      %v1722 = vmul.f32 %v1706, %v1713
      %v1723 = vadd.f32 %v1721, %v1722
      %v1724 = vtanh.pop %v1723
      %v1725 = vmul.f32 %v1719, %v1724
      %v1726 = vstv %s1479
      %vm1727 = vcmp.lt.s32.totalorder %v1726, %v1471
      %v1728 = vsel %vm1727, 1, 0
      %1729 = vset.pattern.permute.xlu0 0
      %1730 = vperm.xlu0 %1729, %v1728
      %v1731 = vpop.permute.xlu0 %1730
      %vm1732 = vcmp.eq.s32.totalorder %v1731, 1
      %v1733 = vsel %vm1732, %v1725, %v1481
      %1734 = vst [vmem:[#allocation4] sm:$0xff] %v1733
      %v1735 = vld [vmem:[#allocation5] sm:$0xff]
      %v1736 = vsel %vm1732, %v1723, %v1735
      %1737 = vst [vmem:[#allocation5] sm:$0xff] %v1736
      %s1738 = ssub.s32 7, %s1479
      %s1739 = ssub.s32 7, %s1474
      %s1740 = smul.u32 %s1739, 8
      %v1741 = vld [vmem:[#allocation6] sm:$0xff]
      %s1742 = sshra.s32 %s1740, 3
      %s1743 = sand.u32 %s1740, 7
      %s1744 = smul.u32 %s1742, 4
      %s1745 = smul.addr %s1744, 8
      %s1746 = scalar_lea.vmem [#allocation3], %s1745
      %v1747 = vld [vmem:[%s1746] sm:$0xff]
      %v1748 = vld [vmem:[%s1746 + $0x8] sm:$0xff]
      %v1749 = vld [vmem:[%s1746 + $0x10] sm:$0xff]
      %v1750 = vld [vmem:[%s1746 + $0x18] sm:$0xff]
      %s1751 = scalar_lea.vmem %s7, 512
      %v1752 = vld [vmem:[%s1751] sm:$0xff]
      %v1753 = vld [vmem:[%s1751 + $0x8] sm:$0xff]
      %v1754 = vld [vmem:[%s1751 + $0x10] sm:$0xff]
      %v1755 = vld [vmem:[%s1751 + $0x18] sm:$0xff]
      %v1756 = vld [vmem:[%s1751 + $0x20] sm:$0xff]
      %v1757 = vld [vmem:[%s1751 + $0x28] sm:$0xff]
      %v1758 = vld [vmem:[%s1751 + $0x30] sm:$0xff]
      %v1759 = vld [vmem:[%s1751 + $0x38] sm:$0xff]
      %v1760 = vld [vmem:[%s1751 + $0x40] sm:$0xff]
      %v1761 = vld [vmem:[%s1751 + $0x48] sm:$0xff]
      %v1762 = vld [vmem:[%s1751 + $0x50] sm:$0xff]
      %v1763 = vld [vmem:[%s1751 + $0x58] sm:$0xff]
      %v1764 = vld [vmem:[%s1751 + $0x60] sm:$0xff]
      %v1765 = vld [vmem:[%s1751 + $0x68] sm:$0xff]
      %v1766 = vld [vmem:[%s1751 + $0x70] sm:$0xff]
      %v1767 = vld [vmem:[%s1751 + $0x78] sm:$0xff]
      %v1768 = vld [vmem:[%s1751 + $0x80] sm:$0xff]
      %v1769 = vld [vmem:[%s1751 + $0x88] sm:$0xff]
      %v1770 = vld [vmem:[%s1751 + $0x90] sm:$0xff]
      %v1771 = vld [vmem:[%s1751 + $0x98] sm:$0xff]
      %v1772 = vld [vmem:[%s1751 + $0xa0] sm:$0xff]
      %v1773 = vld [vmem:[%s1751 + $0xa8] sm:$0xff]
      %v1774 = vld [vmem:[%s1751 + $0xb0] sm:$0xff]
      %v1775 = vld [vmem:[%s1751 + $0xb8] sm:$0xff]
      %v1776 = vld [vmem:[%s1751 + $0xc0] sm:$0xff]
      %v1777 = vld [vmem:[%s1751 + $0xc8] sm:$0xff]
      %v1778 = vld [vmem:[%s1751 + $0xd0] sm:$0xff]
      %v1779 = vld [vmem:[%s1751 + $0xd8] sm:$0xff]
      %v1780 = vld [vmem:[%s1751 + $0xe0] sm:$0xff]
      %v1781 = vld [vmem:[%s1751 + $0xe8] sm:$0xff]
      %v1782 = vld [vmem:[%s1751 + $0xf0] sm:$0xff]
      %v1783 = vld [vmem:[%s1751 + $0xf8] sm:$0xff]
      %v1784 = vld [vmem:[%s1751 + $0x100] sm:$0xff]
      %v1785 = vld [vmem:[%s1751 + $0x108] sm:$0xff]
      %v1786 = vld [vmem:[%s1751 + $0x110] sm:$0xff]
      %v1787 = vld [vmem:[%s1751 + $0x118] sm:$0xff]
      %v1788 = vld [vmem:[%s1751 + $0x120] sm:$0xff]
      %v1789 = vld [vmem:[%s1751 + $0x128] sm:$0xff]
      %v1790 = vld [vmem:[%s1751 + $0x130] sm:$0xff]
      %v1791 = vld [vmem:[%s1751 + $0x138] sm:$0xff]
      %v1792 = vld [vmem:[%s1751 + $0x140] sm:$0xff]
      %v1793 = vld [vmem:[%s1751 + $0x148] sm:$0xff]
      %v1794 = vld [vmem:[%s1751 + $0x150] sm:$0xff]
      %v1795 = vld [vmem:[%s1751 + $0x158] sm:$0xff]
      %v1796 = vld [vmem:[%s1751 + $0x160] sm:$0xff]
      %v1797 = vld [vmem:[%s1751 + $0x168] sm:$0xff]
      %v1798 = vld [vmem:[%s1751 + $0x170] sm:$0xff]
      %v1799 = vld [vmem:[%s1751 + $0x178] sm:$0xff]
      %v1800 = vld [vmem:[%s1751 + $0x180] sm:$0xff]
      %v1801 = vld [vmem:[%s1751 + $0x188] sm:$0xff]
      %v1802 = vld [vmem:[%s1751 + $0x190] sm:$0xff]
      %v1803 = vld [vmem:[%s1751 + $0x198] sm:$0xff]
      %v1804 = vld [vmem:[%s1751 + $0x1a0] sm:$0xff]
      %v1805 = vld [vmem:[%s1751 + $0x1a8] sm:$0xff]
      %v1806 = vld [vmem:[%s1751 + $0x1b0] sm:$0xff]
      %v1807 = vld [vmem:[%s1751 + $0x1b8] sm:$0xff]
      %v1808 = vld [vmem:[%s1751 + $0x1c0] sm:$0xff]
      %v1809 = vld [vmem:[%s1751 + $0x1c8] sm:$0xff]
      %v1810 = vld [vmem:[%s1751 + $0x1d0] sm:$0xff]
      %v1811 = vld [vmem:[%s1751 + $0x1d8] sm:$0xff]
      %v1812 = vld [vmem:[%s1751 + $0x1e0] sm:$0xff]
      %v1813 = vld [vmem:[%s1751 + $0x1e8] sm:$0xff]
      %v1814 = vld [vmem:[%s1751 + $0x1f0] sm:$0xff]
      %v1815 = vld [vmem:[%s1751 + $0x1f8] sm:$0xff]
      %1816 = vmatprep.subr.mxu0 %v1813
      %1817 = vmatpush1.msra.mxu0 %v1812
      %1818 = vmatprep.subr.mxu0 %v1809
      %1819 = vmatpush1.msra.mxu0 %v1808
      %1820 = vmatprep.subr.mxu0 %v1805
      %1821 = vmatpush1.msra.mxu0 %v1804
      %1822 = vmatprep.subr.mxu0 %v1801
      %1823 = vmatpush1.msra.mxu0 %v1800
      %1824 = vmatprep.subr.mxu0 %v1797
      %1825 = vmatpush1.msra.mxu0 %v1796
      %1826 = vmatprep.subr.mxu0 %v1793
      %1827 = vmatpush1.msra.mxu0 %v1792
      %1828 = vmatprep.subr.mxu0 %v1789
      %1829 = vmatpush1.msra.mxu0 %v1788
      %1830 = vmatprep.subr.mxu0 %v1785
      %1831 = vmatpush1.msra.mxu0 %v1784
      %1832 = vmatprep.subr.mxu0 %v1781
      %1833 = vmatpush1.msra.mxu0 %v1780
      %1834 = vmatprep.subr.mxu0 %v1777
      %1835 = vmatpush1.msra.mxu0 %v1776
      %1836 = vmatprep.subr.mxu0 %v1773
      %1837 = vmatpush1.msra.mxu0 %v1772
      %1838 = vmatprep.subr.mxu0 %v1769
      %1839 = vmatpush1.msra.mxu0 %v1768
      %1840 = vmatprep.subr.mxu0 %v1765
      %1841 = vmatpush1.msra.mxu0 %v1764
      %1842 = vmatprep.subr.mxu0 %v1761
      %1843 = vmatpush1.msra.mxu0 %v1760
      %1844 = vmatprep.subr.mxu0 %v1757
      %1845 = vmatpush1.msra.mxu0 %v1756
      %1846 = vmatprep.subr.mxu0 %v1753
      %1847 = vmatpush1.msra.mxu0 %v1752
      %1848 = vmatprep.subr.mxu0 0.0
      %1849 = vmatpush2.msra.mxu0 0.0
      %1850 = vmatprep.subr.mxu0 0.0
      %1851 = vmatpush2.msra.mxu0 0.0
      %1852 = vmatprep.subr.mxu0 0.0
      %1853 = vmatpush2.msra.mxu0 0.0
      %1854 = vmatprep.subr.mxu0 0.0
      %1855 = vmatpush2.msra.mxu0 0.0
      %1856 = vmatprep.subr.mxu0 0.0
      %1857 = vmatpush2.msra.mxu0 0.0
      %1858 = vmatprep.subr.mxu0 0.0
      %1859 = vmatpush2.msra.mxu0 0.0
      %1860 = vmatprep.subr.mxu0 0.0
      %1861 = vmatpush2.msra.mxu0 0.0
      %1862 = vmatprep.subr.mxu0 0.0
      %1863 = vmatpush2.msra.mxu0 0.0
      %1864 = vmatprep.subr.mxu0 0.0
      %1865 = vmatpush2.msra.mxu0 0.0
      %1866 = vmatprep.subr.mxu0 0.0
      %1867 = vmatpush2.msra.mxu0 0.0
      %1868 = vmatprep.subr.mxu0 0.0
      %1869 = vmatpush2.msra.mxu0 0.0
      %1870 = vmatprep.subr.mxu0 0.0
      %1871 = vmatpush2.msra.mxu0 0.0
      %1872 = vmatprep.subr.mxu0 0.0
      %1873 = vmatpush2.msra.mxu0 0.0
      %1874 = vmatprep.subr.mxu0 0.0
      %1875 = vmatpush2.msra.mxu0 0.0
      %1876 = vmatprep.subr.mxu0 0.0
      %1877 = vmatpush2.msra.mxu0 0.0
      %1878 = vmatprep.subr.mxu0 0.0
      %1879 = vmatpush2.msra.mxu0 0.0
      %1880 = vmatprep.mubr.f32.mxu0 0.0
      %1881 = vmatmul.mubr.f32.gmra.mxu0 %v1741
      %v1882 = vpop.f32.mrf.mxu0
      %v1883 = vadd.f32 0.0, %v1882
      %v1884 = vpop.f32.mrf.mxu0
      %v1885 = vadd.f32 0.0, %v1884
      %1886 = vdwg.mxu0
      %1887 = vmatprep.subr.mxu0 %v1815
      %1888 = vmatpush1.msra.mxu0 %v1814
      %1889 = vmatprep.subr.mxu0 %v1811
      %1890 = vmatpush1.msra.mxu0 %v1810
      %1891 = vmatprep.subr.mxu0 %v1807
      %1892 = vmatpush1.msra.mxu0 %v1806
      %1893 = vmatprep.subr.mxu0 %v1803
      %1894 = vmatpush1.msra.mxu0 %v1802
      %1895 = vmatprep.subr.mxu0 %v1799
      %1896 = vmatpush1.msra.mxu0 %v1798
      %1897 = vmatprep.subr.mxu0 %v1795
      %1898 = vmatpush1.msra.mxu0 %v1794
      %1899 = vmatprep.subr.mxu0 %v1791
      %1900 = vmatpush1.msra.mxu0 %v1790
      %1901 = vmatprep.subr.mxu0 %v1787
      %1902 = vmatpush1.msra.mxu0 %v1786
      %1903 = vmatprep.subr.mxu0 %v1783
      %1904 = vmatpush1.msra.mxu0 %v1782
      %1905 = vmatprep.subr.mxu0 %v1779
      %1906 = vmatpush1.msra.mxu0 %v1778
      %1907 = vmatprep.subr.mxu0 %v1775
      %1908 = vmatpush1.msra.mxu0 %v1774
      %1909 = vmatprep.subr.mxu0 %v1771
      %1910 = vmatpush1.msra.mxu0 %v1770
      %1911 = vmatprep.subr.mxu0 %v1767
      %1912 = vmatpush1.msra.mxu0 %v1766
      %1913 = vmatprep.subr.mxu0 %v1763
      %1914 = vmatpush1.msra.mxu0 %v1762
      %1915 = vmatprep.subr.mxu0 %v1759
      %1916 = vmatpush1.msra.mxu0 %v1758
      %1917 = vmatprep.subr.mxu0 %v1755
      %1918 = vmatpush1.msra.mxu0 %v1754
      %1919 = vmatprep.subr.mxu0 0.0
      %1920 = vmatpush2.msra.mxu0 0.0
      %1921 = vmatprep.subr.mxu0 0.0
      %1922 = vmatpush2.msra.mxu0 0.0
      %1923 = vmatprep.subr.mxu0 0.0
      %1924 = vmatpush2.msra.mxu0 0.0
      %1925 = vmatprep.subr.mxu0 0.0
      %1926 = vmatpush2.msra.mxu0 0.0
      %1927 = vmatprep.subr.mxu0 0.0
      %1928 = vmatpush2.msra.mxu0 0.0
      %1929 = vmatprep.subr.mxu0 0.0
      %1930 = vmatpush2.msra.mxu0 0.0
      %1931 = vmatprep.subr.mxu0 0.0
      %1932 = vmatpush2.msra.mxu0 0.0
      %1933 = vmatprep.subr.mxu0 0.0
      %1934 = vmatpush2.msra.mxu0 0.0
      %1935 = vmatprep.subr.mxu0 0.0
      %1936 = vmatpush2.msra.mxu0 0.0
      %1937 = vmatprep.subr.mxu0 0.0
      %1938 = vmatpush2.msra.mxu0 0.0
      %1939 = vmatprep.subr.mxu0 0.0
      %1940 = vmatpush2.msra.mxu0 0.0
      %1941 = vmatprep.subr.mxu0 0.0
      %1942 = vmatpush2.msra.mxu0 0.0
      %1943 = vmatprep.subr.mxu0 0.0
      %1944 = vmatpush2.msra.mxu0 0.0
      %1945 = vmatprep.subr.mxu0 0.0
      %1946 = vmatpush2.msra.mxu0 0.0
      %1947 = vmatprep.subr.mxu0 0.0
      %1948 = vmatpush2.msra.mxu0 0.0
      %1949 = vmatprep.subr.mxu0 0.0
      %1950 = vmatpush2.msra.mxu0 0.0
      %1951 = vmatprep.mubr.f32.mxu0 0.0
      %1952 = vmatmul.mubr.f32.gmra.mxu0 %v1741
      %v1953 = vpop.f32.mrf.mxu0
      %v1954 = vadd.f32 0.0, %v1953
      %v1955 = vpop.f32.mrf.mxu0
      %v1956 = vadd.f32 0.0, %v1955
      %1957 = vdwg.mxu0
      %v1958 = vadd.f32 %v1747, %v1883
      %v1959 = vadd.f32 %v1748, %v1885
      %v1960 = vadd.f32 %v1749, %v1954
      %v1961 = vadd.f32 %v1750, %v1956
      %v1962 = vxor.u32 %v1958, 2147483648
      %v1963 = vmul.f32 %v1962, 1.442695
      %v1964 = vpow.pop %v1963
      %v1965 = vadd.f32 %v1964, 1.0
      %v1966 = vrcp.pop %v1965
      %v1967 = vmul.f32 1.0, %v1966
      %v1968 = vxor.u32 %v1959, 2147483648
      %v1969 = vmul.f32 %v1968, 1.442695
      %v1970 = vpow.pop %v1969
      %v1971 = vadd.f32 %v1970, 1.0
      %v1972 = vrcp.pop %v1971
      %v1973 = vmul.f32 1.0, %v1972
      %v1974 = vtanh.pop %v1960
      %v1975 = vxor.u32 %v1961, 2147483648
      %v1976 = vmul.f32 %v1975, 1.442695
      %v1977 = vpow.pop %v1976
      %v1978 = vadd.f32 %v1977, 1.0
      %v1979 = vrcp.pop %v1978
      %v1980 = vmul.f32 1.0, %v1979
      %v1981 = vld [vmem:[#allocation7] sm:$0xff]
      %v1982 = vmul.f32 %v1973, %v1981
      %v1983 = vmul.f32 %v1967, %v1974
      %v1984 = vadd.f32 %v1982, %v1983
      %v1985 = vtanh.pop %v1984
      %v1986 = vmul.f32 %v1980, %v1985
      %v1987 = vstv %s1738
      %vm1988 = vcmp.lt.s32.totalorder %v1987, %v1471
      %v1989 = vsel %vm1988, 1, 0
      %1990 = vset.pattern.permute.xlu0 0
      %1991 = vperm.xlu0 %1990, %v1989
      %v1992 = vpop.permute.xlu0 %1991
      %vm1993 = vcmp.eq.s32.totalorder %v1992, 1
      %v1994 = vsel %vm1993, %v1986, %v1741
      %1995 = vst [vmem:[#allocation6] sm:$0xff] %v1994
      %v1996 = vld [vmem:[#allocation7] sm:$0xff]
      %v1997 = vsel %vm1993, %v1984, %v1996
      %1998 = vst [vmem:[#allocation7] sm:$0xff] %v1997
    $region58: #{_lambda_.3} parent=1 // loop_footer
      %s1478 = sadd.s32 1, %s1474
    $region59: #{_lambda_.3} parent=1 // loop_footer_branch
      %1473 = sbr.rel target = $region55
    $region60: #{_lambda_.3} parent=1 // loop_exit
      _
    // Predicated region
    $region61: #{_lambda_.3} parent=1 // pred_check
      %p1999 = pneg %p96
    $region62: #{_lambda_.3} parent=1 // pred_check_branch
      %2001 = sbr.rel (%p1999) target = $region64
    $region63: #{_lambda_.3} parent=1 // pred_region
      %v2002 = vld [vmem:[#allocation4] sm:$0xff]
      %v2003 = vld [vmem:[%s9] sm:$0xff]
      %v2004 = vld [vmem:[%s9 + $0x8] sm:$0xff]
      %v2005 = vld [vmem:[%s9 + $0x10] sm:$0xff]
      %v2006 = vld [vmem:[%s9 + $0x18] sm:$0xff]
      %v2007 = vld [vmem:[%s9 + $0x20] sm:$0xff]
      %v2008 = vld [vmem:[%s9 + $0x28] sm:$0xff]
      %v2009 = vld [vmem:[%s9 + $0x30] sm:$0xff]
      %v2010 = vld [vmem:[%s9 + $0x38] sm:$0xff]
      %v2011 = vld [vmem:[%s9 + $0x40] sm:$0xff]
      %v2012 = vld [vmem:[%s9 + $0x48] sm:$0xff]
      %v2013 = vld [vmem:[%s9 + $0x50] sm:$0xff]
      %v2014 = vld [vmem:[%s9 + $0x58] sm:$0xff]
      %v2015 = vld [vmem:[%s9 + $0x60] sm:$0xff]
      %v2016 = vld [vmem:[%s9 + $0x68] sm:$0xff]
      %v2017 = vld [vmem:[%s9 + $0x70] sm:$0xff]
      %v2018 = vld [vmem:[%s9 + $0x78] sm:$0xff]
      %v2019 = vld [vmem:[#allocation6] sm:$0xff]
      %s2020 = scalar_lea.vmem %s9, 128
      %v2021 = vld [vmem:[%s2020] sm:$0xff]
      %v2022 = vld [vmem:[%s2020 + $0x8] sm:$0xff]
      %v2023 = vld [vmem:[%s2020 + $0x10] sm:$0xff]
      %v2024 = vld [vmem:[%s2020 + $0x18] sm:$0xff]
      %v2025 = vld [vmem:[%s2020 + $0x20] sm:$0xff]
      %v2026 = vld [vmem:[%s2020 + $0x28] sm:$0xff]
      %v2027 = vld [vmem:[%s2020 + $0x30] sm:$0xff]
      %v2028 = vld [vmem:[%s2020 + $0x38] sm:$0xff]
      %v2029 = vld [vmem:[%s2020 + $0x40] sm:$0xff]
      %v2030 = vld [vmem:[%s2020 + $0x48] sm:$0xff]
      %v2031 = vld [vmem:[%s2020 + $0x50] sm:$0xff]
      %v2032 = vld [vmem:[%s2020 + $0x58] sm:$0xff]
      %v2033 = vld [vmem:[%s2020 + $0x60] sm:$0xff]
      %v2034 = vld [vmem:[%s2020 + $0x68] sm:$0xff]
      %v2035 = vld [vmem:[%s2020 + $0x70] sm:$0xff]
      %v2036 = vld [vmem:[%s2020 + $0x78] sm:$0xff]
      %2037 = vmatprep.subr.mxu0 0.0
      %2038 = vmatpush1.msra.mxu0 %v2036
      %2039 = vmatprep.subr.mxu0 0.0
      %2040 = vmatpush1.msra.mxu0 %v2035
      %2041 = vmatprep.subr.mxu0 0.0
      %2042 = vmatpush1.msra.mxu0 %v2034
      %2043 = vmatprep.subr.mxu0 0.0
      %2044 = vmatpush1.msra.mxu0 %v2033
      %2045 = vmatprep.subr.mxu0 0.0
      %2046 = vmatpush1.msra.mxu0 %v2032
      %2047 = vmatprep.subr.mxu0 0.0
      %2048 = vmatpush1.msra.mxu0 %v2031
      %2049 = vmatprep.subr.mxu0 0.0
      %2050 = vmatpush1.msra.mxu0 %v2030
      %2051 = vmatprep.subr.mxu0 0.0
      %2052 = vmatpush1.msra.mxu0 %v2029
      %2053 = vmatprep.subr.mxu0 0.0
      %2054 = vmatpush1.msra.mxu0 %v2028
      %2055 = vmatprep.subr.mxu0 0.0
      %2056 = vmatpush1.msra.mxu0 %v2027
      %2057 = vmatprep.subr.mxu0 0.0
      %2058 = vmatpush1.msra.mxu0 %v2026
      %2059 = vmatprep.subr.mxu0 0.0
      %2060 = vmatpush1.msra.mxu0 %v2025
      %2061 = vmatprep.subr.mxu0 0.0
      %2062 = vmatpush1.msra.mxu0 %v2024
      %2063 = vmatprep.subr.mxu0 0.0
      %2064 = vmatpush1.msra.mxu0 %v2023
      %2065 = vmatprep.subr.mxu0 0.0
      %2066 = vmatpush1.msra.mxu0 %v2022
      %2067 = vmatprep.subr.mxu0 0.0
      %2068 = vmatpush1.msra.mxu0 %v2021
      %2069 = vmatprep.subr.mxu0 0.0
      %2070 = vmatpush2.msra.mxu0 0.0
      %2071 = vmatprep.subr.mxu0 0.0
      %2072 = vmatpush2.msra.mxu0 0.0
      %2073 = vmatprep.subr.mxu0 0.0
      %2074 = vmatpush2.msra.mxu0 0.0
      %2075 = vmatprep.subr.mxu0 0.0
      %2076 = vmatpush2.msra.mxu0 0.0
      %2077 = vmatprep.subr.mxu0 0.0
      %2078 = vmatpush2.msra.mxu0 0.0
      %2079 = vmatprep.subr.mxu0 0.0
      %2080 = vmatpush2.msra.mxu0 0.0
      %2081 = vmatprep.subr.mxu0 0.0
      %2082 = vmatpush2.msra.mxu0 0.0
      %2083 = vmatprep.subr.mxu0 0.0
      %2084 = vmatpush2.msra.mxu0 0.0
      %2085 = vmatprep.subr.mxu0 0.0
      %2086 = vmatpush2.msra.mxu0 0.0
      %2087 = vmatprep.subr.mxu0 0.0
      %2088 = vmatpush2.msra.mxu0 0.0
      %2089 = vmatprep.subr.mxu0 0.0
      %2090 = vmatpush2.msra.mxu0 0.0
      %2091 = vmatprep.subr.mxu0 0.0
      %2092 = vmatpush2.msra.mxu0 0.0
      %2093 = vmatprep.subr.mxu0 0.0
      %2094 = vmatpush2.msra.mxu0 0.0
      %2095 = vmatprep.subr.mxu0 0.0
      %2096 = vmatpush2.msra.mxu0 0.0
      %2097 = vmatprep.subr.mxu0 0.0
      %2098 = vmatpush2.msra.mxu0 0.0
      %2099 = vmatprep.subr.mxu0 0.0
      %2100 = vmatpush2.msra.mxu0 0.0
      %2101 = vmatprep.mubr.f32.mxu0 0.0
      %2102 = vmatmul.mubr.f32.gmra.mxu0 %v2019
      %v2103 = vpop.f32.mrf.mxu0
      %v2104 = vadd.f32 0.0, %v2103
      %v2105 = vpop.f32.mrf.mxu0
      %2106 = vdwg.mxu0
      %2107 = vmatprep.subr.mxu0 0.0
      %2108 = vmatpush1.msra.mxu0 %v2018
      %2109 = vmatprep.subr.mxu0 0.0
      %2110 = vmatpush1.msra.mxu0 %v2017
      %2111 = vmatprep.subr.mxu0 0.0
      %2112 = vmatpush1.msra.mxu0 %v2016
      %2113 = vmatprep.subr.mxu0 0.0
      %2114 = vmatpush1.msra.mxu0 %v2015
      %2115 = vmatprep.subr.mxu0 0.0
      %2116 = vmatpush1.msra.mxu0 %v2014
      %2117 = vmatprep.subr.mxu0 0.0
      %2118 = vmatpush1.msra.mxu0 %v2013
      %2119 = vmatprep.subr.mxu0 0.0
      %2120 = vmatpush1.msra.mxu0 %v2012
      %2121 = vmatprep.subr.mxu0 0.0
      %2122 = vmatpush1.msra.mxu0 %v2011
      %2123 = vmatprep.subr.mxu0 0.0
      %2124 = vmatpush1.msra.mxu0 %v2010
      %2125 = vmatprep.subr.mxu0 0.0
      %2126 = vmatpush1.msra.mxu0 %v2009
      %2127 = vmatprep.subr.mxu0 0.0
      %2128 = vmatpush1.msra.mxu0 %v2008
      %2129 = vmatprep.subr.mxu0 0.0
      %2130 = vmatpush1.msra.mxu0 %v2007
      %2131 = vmatprep.subr.mxu0 0.0
      %2132 = vmatpush1.msra.mxu0 %v2006
      %2133 = vmatprep.subr.mxu0 0.0
      %2134 = vmatpush1.msra.mxu0 %v2005
      %2135 = vmatprep.subr.mxu0 0.0
      %2136 = vmatpush1.msra.mxu0 %v2004
      %2137 = vmatprep.subr.mxu0 0.0
      %2138 = vmatpush1.msra.mxu0 %v2003
      %2139 = vmatprep.subr.mxu0 0.0
      %2140 = vmatpush2.msra.mxu0 0.0
      %2141 = vmatprep.subr.mxu0 0.0
      %2142 = vmatpush2.msra.mxu0 0.0
      %2143 = vmatprep.subr.mxu0 0.0
      %2144 = vmatpush2.msra.mxu0 0.0
      %2145 = vmatprep.subr.mxu0 0.0
      %2146 = vmatpush2.msra.mxu0 0.0
      %2147 = vmatprep.subr.mxu0 0.0
      %2148 = vmatpush2.msra.mxu0 0.0
      %2149 = vmatprep.subr.mxu0 0.0
      %2150 = vmatpush2.msra.mxu0 0.0
      %2151 = vmatprep.subr.mxu0 0.0
      %2152 = vmatpush2.msra.mxu0 0.0
      %2153 = vmatprep.subr.mxu0 0.0
      %2154 = vmatpush2.msra.mxu0 0.0
      %2155 = vmatprep.subr.mxu0 0.0
      %2156 = vmatpush2.msra.mxu0 0.0
      %2157 = vmatprep.subr.mxu0 0.0
      %2158 = vmatpush2.msra.mxu0 0.0
      %2159 = vmatprep.subr.mxu0 0.0
      %2160 = vmatpush2.msra.mxu0 0.0
      %2161 = vmatprep.subr.mxu0 0.0
      %2162 = vmatpush2.msra.mxu0 0.0
      %2163 = vmatprep.subr.mxu0 0.0
      %2164 = vmatpush2.msra.mxu0 0.0
      %2165 = vmatprep.subr.mxu0 0.0
      %2166 = vmatpush2.msra.mxu0 0.0
      %2167 = vmatprep.subr.mxu0 0.0
      %2168 = vmatpush2.msra.mxu0 0.0
      %2169 = vmatprep.subr.mxu0 0.0
      %2170 = vmatpush2.msra.mxu0 0.0
      %2171 = vmatprep.mubr.f32.mxu0 0.0
      %2172 = vmatmul.mubr.f32.gmra.mxu0 %v2002
      %v2173 = vpop.f32.mrf.mxu0
      %v2174 = vadd.f32 %v2104, %v2173
      %v2175 = vpop.f32.mrf.mxu0
      %2176 = vdwg.mxu0
      %v2177 = vld [vmem:[%s10] sm:$0x1]
      %v2179 = vlaneseq
      %v2180 = vshrl.u32 %v2179, 7
      %v2181 = vsub.s32 0, %v2180
      %v2182 = vrot.slane %v2177, %v2181
      %v2184 = vadd.f32 %v2174, %v2182
      %2185 = vst [vmem:[%s11] sm:$0xff] %v2184
    $region64: #{_lambda_.3} parent=1 // pred_fallthru
      _
    // Predicated region
    $region65: #{_lambda_.3} parent=1 // pred_check
      _
    $region66: #{_lambda_.3} parent=1 // pred_check_branch
      %2187 = sbr.rel (0) target = $region68
    $region67: #{_lambda_.3} parent=1 // pred_region
      _
    $region68: #{_lambda_.3} parent=1 // pred_fallthru
      _
    // Predicated region
    $region69: #{_lambda_.3} parent=1 // pred_check
      _
    $region70: #{_lambda_.3} parent=1 // pred_check_branch
      %2189 = sbr.rel (0) target = $region72
    $region71: #{_lambda_.3} parent=1 // pred_region
      _
    $region72: #{_lambda_.3} parent=1 // pred_fallthru
      _
    %2190 = vsyncpa [#allocation9], 1

</llo_original>
